<compile_context>
chip_gen: v5e
topology: v5e:2x2
jax: 0.10.0
libtpu: 0.0.40
codegen_flags: <defaults>
</compile_context>

<pallas_src>
import math
from functools import partial

import jax
import jax.numpy as jnp
from jax.experimental import pallas as pl
from jax.experimental.pallas import tpu as pltpu

INPUT_CHANNELS = 2
HIDDEN = 256
NUM_HIDDEN_LAYERS = 3
OUTPUT_CHANNELS = 1
MAX_BLOCK_B = 2048  # upper bound on batch rows per grid step (multiple of 256)


def _round_up(x, m):
    return ((x + m - 1) // m) * m


def mlp_kernel(x_ref, w1_ref, b1_ref, wh_ref, bh_ref, wo_ref, bo_ref, o_ref):
    """Fused MLP forward for one batch tile.

    x_ref : (block_b, INPUT_CHANNELS)   f32   (tiled over the grid)
    w1_ref: (INPUT_CHANNELS, HIDDEN)    f32   (VMEM-resident)
    b1_ref: (1, HIDDEN)                 f32
    wh_ref: (L, HIDDEN, HIDDEN)         bf16
    bh_ref: (L, 1, HIDDEN)              f32
    wo_ref: (1, HIDDEN)                 f32   (output weight as a row)
    bo_ref: (1, OUTPUT_CHANNELS)        f32
    o_ref : (block_b, OUTPUT_CHANNELS)  f32   (tiled over the grid)
    """
    x = x_ref[...]

    # ---- Input layer + ReLU: K=2 is MXU-hostile, run it on the VPU as
    #      broadcast-FMAs (one column of x times one row of w1 per channel).
    h = x[:, 0:1] * w1_ref[0:1, :]
    for c in range(1, INPUT_CHANNELS):
        h = h + x[:, c:c + 1] * w1_ref[c:c + 1, :]
    h = jnp.maximum(h + b1_ref[...], 0.0)            # f32 VPU math

    # ---- Hidden layers + ReLU (static unroll; bf16 MXU, f32 accumulate) ----
    for i in range(NUM_HIDDEN_LAYERS):
        z = jnp.dot(h.astype(jnp.bfloat16), wh_ref[i],
                    preferred_element_type=jnp.float32)
        h = jnp.maximum(z + bh_ref[i], 0.0)           # bias/ReLU stay f32

    # ---- Output layer + Sigmoid: N=1 would waste a full MXU pass, so do a
    #      VPU multiply + lane reduction instead (f32 throughout).
    z = jnp.sum(h * wo_ref[...], axis=-1, keepdims=True) + bo_ref[...]
    o_ref[...] = jax.nn.sigmoid(z)


@partial(jax.jit, static_argnames=("max_block_b",))
def neural_net_forward(x, params, max_block_b=MAX_BLOCK_B):
    w1, b1, wh, bh, wo, bo = params
    B = x.shape[0]

    # Adaptive batch tile: big enough to amortize per-step overhead, at least
    # 2 grid steps when B > 256 (both v7x TensorCores busy), no over-padding
    # of small batches.
    block_b = max(256, min(max_block_b, _round_up(pl.cdiv(B, 2), 256)))
    nb = pl.cdiv(B, block_b)
    b_pad = nb * block_b
    if b_pad != B:
        x = jnp.pad(x, ((0, b_pad - B), (0, 0)))      # tail tile handling

    # bf16 operands for the MXU-dominant layers; first/last layer + biases f32.
    wh_bf16 = wh.astype(jnp.bfloat16)
    wo_row = wo.reshape(1, HIDDEN)                    # (256,1) -> (1,256) row

    flops = 2 * b_pad * (INPUT_CHANNELS * HIDDEN
                         + NUM_HIDDEN_LAYERS * HIDDEN * HIDDEN
                         + HIDDEN * OUTPUT_CHANNELS)
    bytes_accessed = (x.size * 4 + w1.size * 4 + b1.size * 4
                      + wh_bf16.size * 2 + bh.size * 4
                      + wo_row.size * 4 + bo.size * 4
                      + b_pad * OUTPUT_CHANNELS * 4)

    def resident(shape):
        # Whole array as one block; constant index map -> stays in VMEM,
        # never re-DMA'd across grid steps.
        return pl.BlockSpec(shape, lambda i, _n=len(shape): (0,) * _n)

    out = pl.pallas_call(
        mlp_kernel,
        out_shape=jax.ShapeDtypeStruct((b_pad, OUTPUT_CHANNELS), jnp.float32),
        grid=(nb,),
        in_specs=[
            pl.BlockSpec((block_b, INPUT_CHANNELS), lambda i: (i, 0)),  # x
            resident((INPUT_CHANNELS, HIDDEN)),                          # w1
            resident((1, HIDDEN)),                                       # b1
            resident((NUM_HIDDEN_LAYERS, HIDDEN, HIDDEN)),               # wh
            resident((NUM_HIDDEN_LAYERS, 1, HIDDEN)),                    # bh
            resident((1, HIDDEN)),                                       # wo row
            resident((1, OUTPUT_CHANNELS)),                              # bo
        ],
        out_specs=pl.BlockSpec((block_b, OUTPUT_CHANNELS), lambda i: (i, 0)),
        compiler_params=pltpu.CompilerParams(
            dimension_semantics=("parallel",)),
        cost_estimate=pl.CostEstimate(
            flops=flops,
            transcendentals=b_pad * OUTPUT_CHANNELS,
            bytes_accessed=bytes_accessed),
    )(x, w1, b1, wh_bf16, bh, wo_row, bo)

    return out[:B]


def init_params(key):
    """Deterministic init mimicking PyTorch Linear default (U[-1/sqrt(fan_in), ...])."""
    keys = jax.random.split(key, 2 * (NUM_HIDDEN_LAYERS + 2))
    ki = iter(keys)

    def linear(k_w, k_b, fan_in, fan_out):
        bound = 1.0 / math.sqrt(fan_in)
        w = jax.random.uniform(k_w, (fan_in, fan_out), jnp.float32, -bound, bound)
        b = jax.random.uniform(k_b, (1, fan_out), jnp.float32, -bound, bound)
        return w, b

    w1, b1 = linear(next(ki), next(ki), INPUT_CHANNELS, HIDDEN)

    wh_list, bh_list = [], []
    for _ in range(NUM_HIDDEN_LAYERS):
        w, b = linear(next(ki), next(ki), HIDDEN, HIDDEN)
        wh_list.append(w)
        bh_list.append(b)
    wh = jnp.stack(wh_list, axis=0)                   # (L, HIDDEN, HIDDEN)
    bh = jnp.stack(bh_list, axis=0)                   # (L, 1, HIDDEN)

    wo, bo = linear(next(ki), next(ki), HIDDEN, OUTPUT_CHANNELS)
    return (w1, b1, wh, bh, wo, bo)


def reference_forward(x, params):
    """Plain-JAX f32 reference for sanity checking."""
    w1, b1, wh, bh, wo, bo = params
    h = jnp.maximum(x @ w1 + b1, 0.0)
    for i in range(NUM_HIDDEN_LAYERS):
        h = jnp.maximum(h @ wh[i] + bh[i], 0.0)
    return jax.nn.sigmoid(h @ wo + bo)


if __name__ == "__main__":
    key = jax.random.PRNGKey(0)
    k_param, k_x = jax.random.split(key)

    params = init_params(k_param)

    # batch=600: exercises the adaptive tile (block_b=512), a 2-step grid
    # (both v7x TensorCores get work), and tail padding (600 -> 1024 rows).
    batch = 600
    x = jax.random.normal(k_x, (batch, INPUT_CHANNELS), jnp.float32)

    out = neural_net_forward(x, params)
    out = jax.block_until_ready(out)

    ref = reference_forward(x, params)
    assert out.shape == (batch, OUTPUT_CHANNELS)
    # bf16 MXU operands (hidden layers) with f32 accumulation: loose tolerance
    # vs the f32 reference.
    assert jnp.allclose(out, ref, atol=2e-2, rtol=2e-2), \
        "mismatch vs JAX f32 reference beyond bf16 tolerance"

    print("KERNEL_OK")
</pallas_src>

<mosaic_0001>
module attributes {stable_mosaic.version = 11 : i64} {
  func.func @mlp_kernel(%arg0: i32, %arg1: memref<512x2xf32, #tpu.memory_space<vmem>>, %arg2: memref<2x256xf32, #tpu.memory_space<vmem>>, %arg3: memref<1x256xf32, #tpu.memory_space<vmem>>, %arg4: memref<3x256x256xbf16, #tpu.memory_space<vmem>>, %arg5: memref<3x1x256xf32, #tpu.memory_space<vmem>>, %arg6: memref<1x256xf32, #tpu.memory_space<vmem>>, %arg7: memref<1x1xf32, #tpu.memory_space<vmem>>, %arg8: memref<512x1xf32, #tpu.memory_space<vmem>>) attributes {dimension_semantics = [#tpu.dimension_semantics<parallel>], iteration_bounds = array<i64: 2>, scalar_prefetch = 0 : i64, scratch_operands = 0 : i64, tpu.core_type = #tpu.core_type<tc>, window_params = [{transform_indices = @transform_0, window_bounds = array<i64: 512, 2>}, {pipeline_mode = #tpu.pipeline_mode<synchronous>, transform_indices = @transform_1, window_bounds = array<i64: 2, 256>}, {pipeline_mode = #tpu.pipeline_mode<synchronous>, transform_indices = @transform_2, window_bounds = array<i64: 1, 256>}, {pipeline_mode = #tpu.pipeline_mode<synchronous>, transform_indices = @transform_3, window_bounds = array<i64: 3, 256, 256>}, {pipeline_mode = #tpu.pipeline_mode<synchronous>, transform_indices = @transform_4, window_bounds = array<i64: 3, 1, 256>}, {pipeline_mode = #tpu.pipeline_mode<synchronous>, transform_indices = @transform_5, window_bounds = array<i64: 1, 256>}, {pipeline_mode = #tpu.pipeline_mode<synchronous>, transform_indices = @transform_6, window_bounds = array<i64: 1, 1>}, {transform_indices = @transform_7, window_bounds = array<i64: 512, 1>}]} {
    %c0 = arith.constant 0 : index
    %c0_0 = arith.constant 0 : index
    %0 = vector.load %arg1[%c0, %c0_0] : memref<512x2xf32, #tpu.memory_space<vmem>>, vector<512x2xf32>
    %1 = vector.extract_strided_slice %0 {offsets = [0, 0], sizes = [512, 1], strides = [1, 1]} : vector<512x2xf32> to vector<512x1xf32>
    %c0_1 = arith.constant 0 : index
    %c0_2 = arith.constant 0 : index
    %2 = vector.load %arg2[%c0_1, %c0_2] : memref<2x256xf32, #tpu.memory_space<vmem>>, vector<1x256xf32>
    %3 = vector.broadcast %1 : vector<512x1xf32> to vector<512x256xf32>
    %4 = vector.broadcast %2 : vector<1x256xf32> to vector<512x256xf32>
    %5 = arith.mulf %3, %4 : vector<512x256xf32>
    %6 = vector.extract_strided_slice %0 {offsets = [0, 1], sizes = [512, 1], strides = [1, 1]} : vector<512x2xf32> to vector<512x1xf32>
    %c1 = arith.constant 1 : index
    %c0_3 = arith.constant 0 : index
    %7 = vector.load %arg2[%c1, %c0_3] : memref<2x256xf32, #tpu.memory_space<vmem>>, vector<1x256xf32>
    %8 = vector.broadcast %6 : vector<512x1xf32> to vector<512x256xf32>
    %9 = vector.broadcast %7 : vector<1x256xf32> to vector<512x256xf32>
    %10 = arith.mulf %8, %9 : vector<512x256xf32>
    %11 = arith.addf %5, %10 : vector<512x256xf32>
    %c0_4 = arith.constant 0 : index
    %c0_5 = arith.constant 0 : index
    %12 = vector.load %arg3[%c0_4, %c0_5] : memref<1x256xf32, #tpu.memory_space<vmem>>, vector<1x256xf32>
    %13 = vector.broadcast %12 : vector<1x256xf32> to vector<512x256xf32>
    %14 = arith.addf %11, %13 : vector<512x256xf32>
    %cst = arith.constant 0.000000e+00 : f32
    %15 = vector.broadcast %cst : f32 to vector<512x256xf32>
    %16 = arith.maximumf %14, %15 : vector<512x256xf32>
    %17 = arith.truncf %16 : vector<512x256xf32> to vector<512x256xbf16>
    %c0_6 = arith.constant 0 : index
    %c0_7 = arith.constant 0 : index
    %c0_8 = arith.constant 0 : index
    %18 = vector.load %arg4[%c0_6, %c0_7, %c0_8] : memref<3x256x256xbf16, #tpu.memory_space<vmem>>, vector<1x256x256xbf16>
    %19 = vector.shape_cast %18 : vector<1x256x256xbf16> to vector<256x256xbf16>
    %cst_9 = arith.constant dense<0.000000e+00> : vector<512x256xf32>
    %20 = tpu.matmul %17, %19, %cst_9 {dimension_numbers = #tpu.dot_dimension_numbers<[1], [0], [0], [1], [0, 0, 1, 1], [], []>} : vector<512x256xbf16>, vector<256x256xbf16>, vector<512x256xf32> -> vector<512x256xf32>
    %c0_10 = arith.constant 0 : index
    %c0_11 = arith.constant 0 : index
    %c0_12 = arith.constant 0 : index
    %21 = vector.load %arg5[%c0_10, %c0_11, %c0_12] : memref<3x1x256xf32, #tpu.memory_space<vmem>>, vector<1x1x256xf32>
    %22 = vector.shape_cast %21 : vector<1x1x256xf32> to vector<1x256xf32>
    %23 = vector.broadcast %22 : vector<1x256xf32> to vector<512x256xf32>
    %24 = arith.addf %20, %23 : vector<512x256xf32>
    %cst_13 = arith.constant 0.000000e+00 : f32
    %25 = vector.broadcast %cst_13 : f32 to vector<512x256xf32>
    %26 = arith.maximumf %24, %25 : vector<512x256xf32>
    %27 = arith.truncf %26 : vector<512x256xf32> to vector<512x256xbf16>
    %c1_14 = arith.constant 1 : index
    %c0_15 = arith.constant 0 : index
    %c0_16 = arith.constant 0 : index
    %28 = vector.load %arg4[%c1_14, %c0_15, %c0_16] : memref<3x256x256xbf16, #tpu.memory_space<vmem>>, vector<1x256x256xbf16>
    %29 = vector.shape_cast %28 : vector<1x256x256xbf16> to vector<256x256xbf16>
    %cst_17 = arith.constant dense<0.000000e+00> : vector<512x256xf32>
    %30 = tpu.matmul %27, %29, %cst_17 {dimension_numbers = #tpu.dot_dimension_numbers<[1], [0], [0], [1], [0, 0, 1, 1], [], []>} : vector<512x256xbf16>, vector<256x256xbf16>, vector<512x256xf32> -> vector<512x256xf32>
    %c1_18 = arith.constant 1 : index
    %c0_19 = arith.constant 0 : index
    %c0_20 = arith.constant 0 : index
    %31 = vector.load %arg5[%c1_18, %c0_19, %c0_20] : memref<3x1x256xf32, #tpu.memory_space<vmem>>, vector<1x1x256xf32>
    %32 = vector.shape_cast %31 : vector<1x1x256xf32> to vector<1x256xf32>
    %33 = vector.broadcast %32 : vector<1x256xf32> to vector<512x256xf32>
    %34 = arith.addf %30, %33 : vector<512x256xf32>
    %cst_21 = arith.constant 0.000000e+00 : f32
    %35 = vector.broadcast %cst_21 : f32 to vector<512x256xf32>
    %36 = arith.maximumf %34, %35 : vector<512x256xf32>
    %37 = arith.truncf %36 : vector<512x256xf32> to vector<512x256xbf16>
    %c2 = arith.constant 2 : index
    %c0_22 = arith.constant 0 : index
    %c0_23 = arith.constant 0 : index
    %38 = vector.load %arg4[%c2, %c0_22, %c0_23] : memref<3x256x256xbf16, #tpu.memory_space<vmem>>, vector<1x256x256xbf16>
    %39 = vector.shape_cast %38 : vector<1x256x256xbf16> to vector<256x256xbf16>
    %cst_24 = arith.constant dense<0.000000e+00> : vector<512x256xf32>
    %40 = tpu.matmul %37, %39, %cst_24 {dimension_numbers = #tpu.dot_dimension_numbers<[1], [0], [0], [1], [0, 0, 1, 1], [], []>} : vector<512x256xbf16>, vector<256x256xbf16>, vector<512x256xf32> -> vector<512x256xf32>
    %c2_25 = arith.constant 2 : index
    %c0_26 = arith.constant 0 : index
    %c0_27 = arith.constant 0 : index
    %41 = vector.load %arg5[%c2_25, %c0_26, %c0_27] : memref<3x1x256xf32, #tpu.memory_space<vmem>>, vector<1x1x256xf32>
    %42 = vector.shape_cast %41 : vector<1x1x256xf32> to vector<1x256xf32>
    %43 = vector.broadcast %42 : vector<1x256xf32> to vector<512x256xf32>
    %44 = arith.addf %40, %43 : vector<512x256xf32>
    %cst_28 = arith.constant 0.000000e+00 : f32
    %45 = vector.broadcast %cst_28 : f32 to vector<512x256xf32>
    %46 = arith.maximumf %44, %45 : vector<512x256xf32>
    %c0_29 = arith.constant 0 : index
    %c0_30 = arith.constant 0 : index
    %47 = vector.load %arg6[%c0_29, %c0_30] : memref<1x256xf32, #tpu.memory_space<vmem>>, vector<1x256xf32>
    %48 = vector.broadcast %47 : vector<1x256xf32> to vector<512x256xf32>
    %49 = arith.mulf %46, %48 : vector<512x256xf32>
    %cst_31 = arith.constant dense<0.000000e+00> : vector<512xf32>
    %50 = vector.multi_reduction <add>, %49, %cst_31 [1] : vector<512x256xf32> to vector<512xf32>
    %51 = vector.shape_cast %50 : vector<512xf32> to vector<512x1xf32>
    %c0_32 = arith.constant 0 : index
    %c0_33 = arith.constant 0 : index
    %52 = vector.load %arg7[%c0_32, %c0_33] : memref<1x1xf32, #tpu.memory_space<vmem>>, vector<1x1xf32>
    %53 = vector.broadcast %52 : vector<1x1xf32> to vector<512x1xf32>
    %54 = arith.addf %51, %53 : vector<512x1xf32>
    %55 = arith.negf %54 : vector<512x1xf32>
    %56 = math.exp %55 : vector<512x1xf32>
    %cst_34 = arith.constant 1.000000e+00 : f32
    %57 = vector.broadcast %cst_34 : f32 to vector<512x1xf32>
    %58 = arith.addf %57, %56 : vector<512x1xf32>
    %59 = arith.divf %57, %58 : vector<512x1xf32>
    %c0_35 = arith.constant 0 : index
    %c0_36 = arith.constant 0 : index
    %60 = vector.load %arg8[%c0_35, %c0_36] : memref<512x1xf32, #tpu.memory_space<vmem>>, vector<512x1xf32>
    tpu.vector_store %arg8[%c0_35, %c0_36], %59 {strides = array<i32>} : memref<512x1xf32, #tpu.memory_space<vmem>>, vector<512x1xf32>,
    return
  }
  func.func @transform_0(%arg0: i32) -> (i32, i32) {
    %c0_i32 = arith.constant 0 : i32
    %c0_i32_0 = arith.constant 0 : i32
    return %arg0, %c0_i32 : i32, i32
  }
  func.func @transform_1(%arg0: i32) -> (i32, i32) {
    %c0_i32 = arith.constant 0 : i32
    %c0_i32_0 = arith.constant 0 : i32
    %c0_i32_1 = arith.constant 0 : i32
    return %c0_i32, %c0_i32_0 : i32, i32
  }
  func.func @transform_2(%arg0: i32) -> (i32, i32) {
    %c0_i32 = arith.constant 0 : i32
    %c0_i32_0 = arith.constant 0 : i32
    %c0_i32_1 = arith.constant 0 : i32
    return %c0_i32, %c0_i32_0 : i32, i32
  }
  func.func @transform_3(%arg0: i32) -> (i32, i32, i32) {
    %c0_i32 = arith.constant 0 : i32
    %c0_i32_0 = arith.constant 0 : i32
    %c0_i32_1 = arith.constant 0 : i32
    %c0_i32_2 = arith.constant 0 : i32
    return %c0_i32, %c0_i32_0, %c0_i32_1 : i32, i32, i32
  }
  func.func @transform_4(%arg0: i32) -> (i32, i32, i32) {
    %c0_i32 = arith.constant 0 : i32
    %c0_i32_0 = arith.constant 0 : i32
    %c0_i32_1 = arith.constant 0 : i32
    %c0_i32_2 = arith.constant 0 : i32
    return %c0_i32, %c0_i32_0, %c0_i32_1 : i32, i32, i32
  }
  func.func @transform_5(%arg0: i32) -> (i32, i32) {
    %c0_i32 = arith.constant 0 : i32
    %c0_i32_0 = arith.constant 0 : i32
    %c0_i32_1 = arith.constant 0 : i32
    return %c0_i32, %c0_i32_0 : i32, i32
  }
  func.func @transform_6(%arg0: i32) -> (i32, i32) {
    %c0_i32 = arith.constant 0 : i32
    %c0_i32_0 = arith.constant 0 : i32
    %c0_i32_1 = arith.constant 0 : i32
    return %c0_i32, %c0_i32_0 : i32, i32
  }
  func.func @transform_7(%arg0: i32) -> (i32, i32) {
    %c0_i32 = arith.constant 0 : i32
    %c0_i32_0 = arith.constant 0 : i32
    return %arg0, %c0_i32 : i32, i32
  }
}

</mosaic_0001>

<llo_original>
// kernel: neural_net_forward.1
$region0: #{neural_net_forward.1}
  #allocation0 [shape = 'u32[]', space=smem, size = 0x4, offset = 0x4, fixed_abs, tag = 'smem constant byte address 0x4 - core index']
  #allocation1 [shape = 'u32[72,128]{1,0:T(1,128)}', space=vmem, size = 0x9000, scoped, tag = 'internal scratch']
  #allocation2 [shape = 'f32[1,1]{1,0:T(1,128)S(1)}', space=vmem, size = 0x200, scoped, tag = 'scoped memory for neural_net_forward.1']
  %s0 = inlined_call_operand.vmem [shape: f32[1024,2], index: 0, kind: input, shape index: {}]
  %s1 = inlined_call_operand.vmem [shape: f32[2,256], index: 1, kind: input, shape index: {}]
  %s2 = inlined_call_operand.vmem [shape: f32[1,256], index: 2, kind: input, shape index: {}]
  %s3 = inlined_call_operand.vmem [shape: bf16[3,256,256], index: 3, kind: input, shape index: {}]
  %s4 = inlined_call_operand.vmem [shape: f32[3,1,256], index: 4, kind: input, shape index: {}]
  %s5 = inlined_call_operand.vmem [shape: f32[1,256], index: 5, kind: input, shape index: {}]
  %s6 = inlined_call_operand.<no memory space> [shape: f32[1,1], index: 6, kind: input, shape index: {}]
  %s7 = inlined_call_operand.vmem [shape: f32[1024,1], index: 7, kind: output, shape index: {}]
  %s8 = sld [smem:[#allocation0]]
  $region61: #{neural_net_forward.1} parent=0
    _
  %s10 = ssub.s32 1, %s8
  %s11 = scalar_select 0, %s10, %s8
  %v12 = vstv %s6
  %13 = vst [vmem:[#allocation2] sm:$0x1] %v12
  loop: start=0, step=1, limit=4
  $region2: #{neural_net_forward.1} parent=0 // loop_pre_header
    _
  $region3: #{neural_net_forward.1} parent=0 // loop_header
    %s15 = sphi 0, %s19
    %p16 = scmp.ge.s32.totalorder %s15, 4
    %s25 = sphi 0, %s27
    %s28 = sphi 0, %s25
    %s29 = sphi 0, %s28
    %s45 = sphi 0, %s29
    %s49 = sphi 0, %s49
    %s51 = sphi 0, %s49
    %s52 = sphi 0, %s51
    %s66 = sphi 0, %s52
    %s70 = sphi 0, %s70
    %s72 = sphi 0, %s70
    %s73 = sphi 0, %s72
    %s87 = sphi 0, %s73
    %s91 = sphi 0, %s91
    %s93 = sphi 0, %s91
    %s94 = sphi 0, %s93
    %s108 = sphi 0, %s94
    %s112 = sphi 0, %s112
    %s114 = sphi 0, %s112
    %s115 = sphi 0, %s114
    %s129 = sphi 0, %s115
    %s133 = sphi 0, %s133
    %s135 = sphi 0, %s133
    %s136 = sphi 0, %s135
    %s150 = sphi 0, %s136
    %s154 = sphi 0, %s154
    %s156 = sphi 0, %s154
    %s157 = sphi 0, %s156
    %s171 = sphi 0, %s157
    %s177 = sphi 0, %s179
    %s180 = sphi 0, %s177
    %s181 = sphi 0, %s180
    %s197 = sphi 0, %s181
  $region4: #{neural_net_forward.1} parent=0 // loop_header_branch
    %18 = sbr.rel (%p16) target = $region8
  $region5: #{neural_net_forward.1} parent=0 // loop_body
    %s20 = ssub.s32 %s15, 1
    %s21 = ssub.s32 %s15, 2
    %s22 = sadd.s32 %s15, 1
    %s23 = ssub.s32 %s15, %s22
    %p24 = scmp.eq.s32.totalorder %s23, 0
    %s26 = sadd.s32 %s25, 1
    %s27 = scalar_select %p24, %s25, %s26
    %p30 = pneg %p24
    %p31 = scmp.eq.s32.totalorder %s15, 1
    %p32 = por %p30, %p31
    %p33 = scmp.ne.s32.totalorder %s25, %s28
    %p34 = scmp.eq.s32.totalorder %s15, 0
    %p35 = por %p33, %p34
    %p36 = scmp.ne.s32.totalorder %s25, %s28
    %p37 = scmp.eq.s32.totalorder %s20, 1
    %p38 = por %p36, %p37
    %p39 = scmp.ne.s32.totalorder %s28, %s29
    %p40 = scmp.eq.s32.totalorder %s20, 0
    %p41 = por %p39, %p40
    %p42 = scmp.ne.s32.totalorder %s28, %s29
    %p43 = scmp.eq.s32.totalorder %s21, 1
    %p44 = por %p42, %p43
    %p46 = scmp.ne.s32.totalorder %s29, %s45
    %p47 = scmp.eq.s32.totalorder %s21, 0
    %p48 = por %p46, %p47
    %s50 = sadd.s32 %s49, 1
    %p53 = scmp.eq.s32.totalorder %s15, 1
    %p54 = scmp.ne.s32.totalorder %s49, %s51
    %p55 = scmp.eq.s32.totalorder %s15, 0
    %p56 = por %p54, %p55
    %p57 = scmp.ne.s32.totalorder %s49, %s51
    %p58 = scmp.eq.s32.totalorder %s20, 1
    %p59 = por %p57, %p58
    %p60 = scmp.ne.s32.totalorder %s51, %s52
    %p61 = scmp.eq.s32.totalorder %s20, 0
    %p62 = por %p60, %p61
    %p63 = scmp.ne.s32.totalorder %s51, %s52
    %p64 = scmp.eq.s32.totalorder %s21, 1
    %p65 = por %p63, %p64
    %p67 = scmp.ne.s32.totalorder %s52, %s66
    %p68 = scmp.eq.s32.totalorder %s21, 0
    %p69 = por %p67, %p68
    %s71 = sadd.s32 %s70, 1
    %p74 = scmp.eq.s32.totalorder %s15, 1
    %p75 = scmp.ne.s32.totalorder %s70, %s72
    %p76 = scmp.eq.s32.totalorder %s15, 0
    %p77 = por %p75, %p76
    %p78 = scmp.ne.s32.totalorder %s70, %s72
    %p79 = scmp.eq.s32.totalorder %s20, 1
    %p80 = por %p78, %p79
    %p81 = scmp.ne.s32.totalorder %s72, %s73
    %p82 = scmp.eq.s32.totalorder %s20, 0
    %p83 = por %p81, %p82
    %p84 = scmp.ne.s32.totalorder %s72, %s73
    %p85 = scmp.eq.s32.totalorder %s21, 1
    %p86 = por %p84, %p85
    %p88 = scmp.ne.s32.totalorder %s73, %s87
    %p89 = scmp.eq.s32.totalorder %s21, 0
    %p90 = por %p88, %p89
    %s92 = sadd.s32 %s91, 1
    %p95 = scmp.eq.s32.totalorder %s15, 1
    %p96 = scmp.ne.s32.totalorder %s91, %s93
    %p97 = scmp.eq.s32.totalorder %s15, 0
    %p98 = por %p96, %p97
    %p99 = scmp.ne.s32.totalorder %s91, %s93
    %p100 = scmp.eq.s32.totalorder %s20, 1
    %p101 = por %p99, %p100
    %p102 = scmp.ne.s32.totalorder %s93, %s94
    %p103 = scmp.eq.s32.totalorder %s20, 0
    %p104 = por %p102, %p103
    %p105 = scmp.ne.s32.totalorder %s93, %s94
    %p106 = scmp.eq.s32.totalorder %s21, 1
    %p107 = por %p105, %p106
    %p109 = scmp.ne.s32.totalorder %s94, %s108
    %p110 = scmp.eq.s32.totalorder %s21, 0
    %p111 = por %p109, %p110
    %s113 = sadd.s32 %s112, 1
    %p116 = scmp.eq.s32.totalorder %s15, 1
    %p117 = scmp.ne.s32.totalorder %s112, %s114
    %p118 = scmp.eq.s32.totalorder %s15, 0
    %p119 = por %p117, %p118
    %p120 = scmp.ne.s32.totalorder %s112, %s114
    %p121 = scmp.eq.s32.totalorder %s20, 1
    %p122 = por %p120, %p121
    %p123 = scmp.ne.s32.totalorder %s114, %s115
    %p124 = scmp.eq.s32.totalorder %s20, 0
    %p125 = por %p123, %p124
    %p126 = scmp.ne.s32.totalorder %s114, %s115
    %p127 = scmp.eq.s32.totalorder %s21, 1
    %p128 = por %p126, %p127
    %p130 = scmp.ne.s32.totalorder %s115, %s129
    %p131 = scmp.eq.s32.totalorder %s21, 0
    %p132 = por %p130, %p131
    %s134 = sadd.s32 %s133, 1
    %p137 = scmp.eq.s32.totalorder %s15, 1
    %p138 = scmp.ne.s32.totalorder %s133, %s135
    %p139 = scmp.eq.s32.totalorder %s15, 0
    %p140 = por %p138, %p139
    %p141 = scmp.ne.s32.totalorder %s133, %s135
    %p142 = scmp.eq.s32.totalorder %s20, 1
    %p143 = por %p141, %p142
    %p144 = scmp.ne.s32.totalorder %s135, %s136
    %p145 = scmp.eq.s32.totalorder %s20, 0
    %p146 = por %p144, %p145
    %p147 = scmp.ne.s32.totalorder %s135, %s136
    %p148 = scmp.eq.s32.totalorder %s21, 1
    %p149 = por %p147, %p148
    %p151 = scmp.ne.s32.totalorder %s136, %s150
    %p152 = scmp.eq.s32.totalorder %s21, 0
    %p153 = por %p151, %p152
    %s155 = sadd.s32 %s154, 1
    %p158 = scmp.eq.s32.totalorder %s15, 1
    %p159 = scmp.ne.s32.totalorder %s154, %s156
    %p160 = scmp.eq.s32.totalorder %s15, 0
    %p161 = por %p159, %p160
    %p162 = scmp.ne.s32.totalorder %s154, %s156
    %p163 = scmp.eq.s32.totalorder %s20, 1
    %p164 = por %p162, %p163
    %p165 = scmp.ne.s32.totalorder %s156, %s157
    %p166 = scmp.eq.s32.totalorder %s20, 0
    %p167 = por %p165, %p166
    %p168 = scmp.ne.s32.totalorder %s156, %s157
    %p169 = scmp.eq.s32.totalorder %s21, 1
    %p170 = por %p168, %p169
    %p172 = scmp.ne.s32.totalorder %s157, %s171
    %p173 = scmp.eq.s32.totalorder %s21, 0
    %p174 = por %p172, %p173
    %s175 = ssub.s32 %s15, %s22
    %p176 = scmp.eq.s32.totalorder %s175, 0
    %s178 = sadd.s32 %s177, 1
    %s179 = scalar_select %p176, %s177, %s178
    %p182 = pneg %p176
    %p183 = scmp.eq.s32.totalorder %s15, 1
    %p184 = por %p182, %p183
    %p185 = scmp.ne.s32.totalorder %s177, %s180
    %p186 = scmp.eq.s32.totalorder %s15, 0
    %p187 = por %p185, %p186
    %p188 = scmp.ne.s32.totalorder %s177, %s180
    %p189 = scmp.eq.s32.totalorder %s20, 1
    %p190 = por %p188, %p189
    %p191 = scmp.ne.s32.totalorder %s180, %s181
    %p192 = scmp.eq.s32.totalorder %s20, 0
    %p193 = por %p191, %p192
    %p194 = scmp.ne.s32.totalorder %s180, %s181
    %p195 = scmp.eq.s32.totalorder %s21, 1
    %p196 = por %p194, %p195
    %p198 = scmp.ne.s32.totalorder %s181, %s197
    %p199 = scmp.eq.s32.totalorder %s21, 0
    %p200 = por %p198, %p199
    %p201 = scmp.le.s32.totalorder 1, %s15
    %p202 = scmp.lt.s32.totalorder %s15, 3
    %p203 = pnand %p201, %p202
    %p204 = pneg %p203
    // Predicated region
    $region9: #{neural_net_forward.1} parent=5 // pred_check
      _
    $region10: #{neural_net_forward.1} parent=5 // pred_check_branch
      %206 = sbr.rel (%p203) target = $region12
    $region11: #{neural_net_forward.1} parent=5 // pred_region
      %s207 = ssub.s32 %s15, 1
      // Predicated region
      $region13: #{neural_net_forward.1} parent=11 // pred_check
        %p208 = pneg %p62
      $region14: #{neural_net_forward.1} parent=11 // pred_check_branch
        %210 = sbr.rel (%p208) target = $region16
      $region15: #{neural_net_forward.1} parent=11 // pred_region
        _
      $region16: #{neural_net_forward.1} parent=11 // pred_fallthru
        _
      // Predicated region
      $region17: #{neural_net_forward.1} parent=11 // pred_check
        %p211 = pneg %p83
      $region18: #{neural_net_forward.1} parent=11 // pred_check_branch
        %213 = sbr.rel (%p211) target = $region20
      $region19: #{neural_net_forward.1} parent=11 // pred_region
        _
      $region20: #{neural_net_forward.1} parent=11 // pred_fallthru
        _
      // Predicated region
      $region21: #{neural_net_forward.1} parent=11 // pred_check
        %p214 = pneg %p104
      $region22: #{neural_net_forward.1} parent=11 // pred_check_branch
        %216 = sbr.rel (%p214) target = $region24
      $region23: #{neural_net_forward.1} parent=11 // pred_region
        _
      $region24: #{neural_net_forward.1} parent=11 // pred_fallthru
        _
      // Predicated region
      $region25: #{neural_net_forward.1} parent=11 // pred_check
        %p217 = pneg %p125
      $region26: #{neural_net_forward.1} parent=11 // pred_check_branch
        %219 = sbr.rel (%p217) target = $region28
      $region27: #{neural_net_forward.1} parent=11 // pred_region
        _
      $region28: #{neural_net_forward.1} parent=11 // pred_fallthru
        _
      // Predicated region
      $region29: #{neural_net_forward.1} parent=11 // pred_check
        %p220 = pneg %p146
      $region30: #{neural_net_forward.1} parent=11 // pred_check_branch
        %222 = sbr.rel (%p220) target = $region32
      $region31: #{neural_net_forward.1} parent=11 // pred_region
        _
      $region32: #{neural_net_forward.1} parent=11 // pred_fallthru
        _
      // Predicated region
      $region33: #{neural_net_forward.1} parent=11 // pred_check
        %p223 = pneg %p167
      $region34: #{neural_net_forward.1} parent=11 // pred_check_branch
        %225 = sbr.rel (%p223) target = $region36
      $region35: #{neural_net_forward.1} parent=11 // pred_region
        _
      $region36: #{neural_net_forward.1} parent=11 // pred_fallthru
        _
    $region12: #{neural_net_forward.1} parent=5 // pred_fallthru
      _
    %p226 = scmp.lt.s32.totalorder %s15, 2
    // Predicated region
    $region37: #{neural_net_forward.1} parent=5 // pred_check
      %p227 = pneg %p226
    $region38: #{neural_net_forward.1} parent=5 // pred_check_branch
      %229 = sbr.rel (%p227) target = $region40
    $region39: #{neural_net_forward.1} parent=5 // pred_region
      // Predicated region
      $region41: #{neural_net_forward.1} parent=39 // pred_check
        %p230 = pneg %p35
      $region42: #{neural_net_forward.1} parent=39 // pred_check_branch
        %232 = sbr.rel (%p230) target = $region44
      $region43: #{neural_net_forward.1} parent=39 // pred_region
        %s233 = smul.u32 64, %s15
        %p234 = scmp.lt.s32.totalorder %s233, 127
        %s235 = scalar_select %p234, %s233, 127
        %s236 = smul.addr %s235, 8
        %s237 = scalar_lea.vmem %s0, %s236
        %s238 = smul.u32 64, %s15
      $region44: #{neural_net_forward.1} parent=39 // pred_fallthru
        _
    $region40: #{neural_net_forward.1} parent=5 // pred_fallthru
      _
    %p239 = scmp.le.s32.totalorder 1, %s15
    %p240 = scmp.lt.s32.totalorder %s15, 3
    %p241 = pnand %p239, %p240
    %p242 = pneg %p241
    // Predicated region
    $region45: #{neural_net_forward.1} parent=5 // pred_check
      _
    $region46: #{neural_net_forward.1} parent=5 // pred_check_branch
      %244 = sbr.rel (%p241) target = $region48
    $region47: #{neural_net_forward.1} parent=5 // pred_region
      %s245 = ssub.s32 %s15, 1
      %s246 = smul.u32 64, %s20
      %p247 = scmp.lt.s32.totalorder %s246, 127
      %s248 = scalar_select %p247, %s246, 127
      %s249 = smul.addr %s248, 8
      %s250 = scalar_lea.vmem %s0, %s249
      %p251 = pneg %p41
      %p252 = pneg %p38
      %p253 = pneg %p62
      %p254 = pneg %p59
      %p255 = pneg %p83
      %p256 = pneg %p80
      %p257 = pneg %p104
      %p258 = pneg %p101
      %p259 = pneg %p125
      %p260 = pneg %p122
      %p261 = pneg %p146
      %p262 = pneg %p143
      %p263 = pneg %p167
      %p264 = pneg %p164
      %p265 = pneg %p193
      %p266 = pneg %p190
      %s267 = smul.u32 64, %s20
      %p268 = scmp.lt.s32.totalorder %s267, 127
      %s269 = scalar_select %p268, %s267, 127
      %s270 = smul.addr %s269, 8
      %s271 = scalar_lea.vmem %s7, %s270
      %s272 = smul.u32 64, %s20
      %p273 = scmp.lt.s32.totalorder %s272, 127
      %s274 = scalar_select %p273, %s272, 127
      %s275 = smul.addr %s274, 8
      %s276 = scalar_lea.vmem %s0, %s275
      %s277 = smul.u32 64, %s20
      %s278 = smul.u32 64, %s20
      %p279 = scmp.lt.s32.totalorder %s278, 127
      %s280 = scalar_select %p279, %s278, 127
      %s281 = smul.addr %s280, 8
      %s282 = scalar_lea.vmem %s7, %s281
      %s283 = smul.u32 64, %s20
      %v284 = vld [vmem:[%s276] sm:$0xff]
      %v285 = vld [vmem:[%s276 + $0x8] sm:$0xff]
      %v286 = vld [vmem:[%s276 + $0x10] sm:$0xff]
      %v287 = vld [vmem:[%s276 + $0x18] sm:$0xff]
      %v288 = vld [vmem:[%s276 + $0x20] sm:$0xff]
      %v289 = vld [vmem:[%s276 + $0x28] sm:$0xff]
      %v290 = vld [vmem:[%s276 + $0x30] sm:$0xff]
      %v291 = vld [vmem:[%s276 + $0x38] sm:$0xff]
      %v292 = vld [vmem:[%s276 + $0x40] sm:$0xff]
      %v293 = vld [vmem:[%s276 + $0x48] sm:$0xff]
      %v294 = vld [vmem:[%s276 + $0x50] sm:$0xff]
      %v295 = vld [vmem:[%s276 + $0x58] sm:$0xff]
      %v296 = vld [vmem:[%s276 + $0x60] sm:$0xff]
      %v297 = vld [vmem:[%s276 + $0x68] sm:$0xff]
      %v298 = vld [vmem:[%s276 + $0x70] sm:$0xff]
      %v299 = vld [vmem:[%s276 + $0x78] sm:$0xff]
      %v300 = vld [vmem:[%s276 + $0x80] sm:$0xff]
      %v301 = vld [vmem:[%s276 + $0x88] sm:$0xff]
      %v302 = vld [vmem:[%s276 + $0x90] sm:$0xff]
      %v303 = vld [vmem:[%s276 + $0x98] sm:$0xff]
      %v304 = vld [vmem:[%s276 + $0xa0] sm:$0xff]
      %v305 = vld [vmem:[%s276 + $0xa8] sm:$0xff]
      %v306 = vld [vmem:[%s276 + $0xb0] sm:$0xff]
      %v307 = vld [vmem:[%s276 + $0xb8] sm:$0xff]
      %v308 = vld [vmem:[%s276 + $0xc0] sm:$0xff]
      %v309 = vld [vmem:[%s276 + $0xc8] sm:$0xff]
      %v310 = vld [vmem:[%s276 + $0xd0] sm:$0xff]
      %v311 = vld [vmem:[%s276 + $0xd8] sm:$0xff]
      %v312 = vld [vmem:[%s276 + $0xe0] sm:$0xff]
      %v313 = vld [vmem:[%s276 + $0xe8] sm:$0xff]
      %v314 = vld [vmem:[%s276 + $0xf0] sm:$0xff]
      %v315 = vld [vmem:[%s276 + $0xf8] sm:$0xff]
      %v316 = vld [vmem:[%s276 + $0x100] sm:$0xff]
      %v317 = vld [vmem:[%s276 + $0x108] sm:$0xff]
      %v318 = vld [vmem:[%s276 + $0x110] sm:$0xff]
      %v319 = vld [vmem:[%s276 + $0x118] sm:$0xff]
      %v320 = vld [vmem:[%s276 + $0x120] sm:$0xff]
      %v321 = vld [vmem:[%s276 + $0x128] sm:$0xff]
      %v322 = vld [vmem:[%s276 + $0x130] sm:$0xff]
      %v323 = vld [vmem:[%s276 + $0x138] sm:$0xff]
      %v324 = vld [vmem:[%s276 + $0x140] sm:$0xff]
      %v325 = vld [vmem:[%s276 + $0x148] sm:$0xff]
      %v326 = vld [vmem:[%s276 + $0x150] sm:$0xff]
      %v327 = vld [vmem:[%s276 + $0x158] sm:$0xff]
      %v328 = vld [vmem:[%s276 + $0x160] sm:$0xff]
      %v329 = vld [vmem:[%s276 + $0x168] sm:$0xff]
      %v330 = vld [vmem:[%s276 + $0x170] sm:$0xff]
      %v331 = vld [vmem:[%s276 + $0x178] sm:$0xff]
      %v332 = vld [vmem:[%s276 + $0x180] sm:$0xff]
      %v333 = vld [vmem:[%s276 + $0x188] sm:$0xff]
      %v334 = vld [vmem:[%s276 + $0x190] sm:$0xff]
      %v335 = vld [vmem:[%s276 + $0x198] sm:$0xff]
      %v336 = vld [vmem:[%s276 + $0x1a0] sm:$0xff]
      %v337 = vld [vmem:[%s276 + $0x1a8] sm:$0xff]
      %v338 = vld [vmem:[%s276 + $0x1b0] sm:$0xff]
      %v339 = vld [vmem:[%s276 + $0x1b8] sm:$0xff]
      %v340 = vld [vmem:[%s276 + $0x1c0] sm:$0xff]
      %v341 = vld [vmem:[%s276 + $0x1c8] sm:$0xff]
      %v342 = vld [vmem:[%s276 + $0x1d0] sm:$0xff]
      %v343 = vld [vmem:[%s276 + $0x1d8] sm:$0xff]
      %v344 = vld [vmem:[%s276 + $0x1e0] sm:$0xff]
      %v345 = vld [vmem:[%s276 + $0x1e8] sm:$0xff]
      %v346 = vld [vmem:[%s276 + $0x1f0] sm:$0xff]
      %v347 = vld [vmem:[%s276 + $0x1f8] sm:$0xff]
      %v348 = vld [vmem:[%s1] ss:$2 sm:$0x3]
      %350 = vset.pattern.permute.xlu0 0
      %351 = vperm.xlu0 %350, %v284
      %v352 = vpop.permute.xlu0 %351
      %355 = vset.pattern.permute.xlu0 0
      %356 = vperm.xlu0 %355, %v285
      %v357 = vpop.permute.xlu0 %356
      %360 = vset.pattern.permute.xlu0 0
      %361 = vperm.xlu0 %360, %v286
      %v362 = vpop.permute.xlu0 %361
      %365 = vset.pattern.permute.xlu0 0
      %366 = vperm.xlu0 %365, %v287
      %v367 = vpop.permute.xlu0 %366
      %370 = vset.pattern.permute.xlu0 0
      %371 = vperm.xlu0 %370, %v288
      %v372 = vpop.permute.xlu0 %371
      %375 = vset.pattern.permute.xlu0 0
      %376 = vperm.xlu0 %375, %v289
      %v377 = vpop.permute.xlu0 %376
      %380 = vset.pattern.permute.xlu0 0
      %381 = vperm.xlu0 %380, %v290
      %v382 = vpop.permute.xlu0 %381
      %385 = vset.pattern.permute.xlu0 0
      %386 = vperm.xlu0 %385, %v291
      %v387 = vpop.permute.xlu0 %386
      %390 = vset.pattern.permute.xlu0 0
      %391 = vperm.xlu0 %390, %v292
      %v392 = vpop.permute.xlu0 %391
      %395 = vset.pattern.permute.xlu0 0
      %396 = vperm.xlu0 %395, %v293
      %v397 = vpop.permute.xlu0 %396
      %400 = vset.pattern.permute.xlu0 0
      %401 = vperm.xlu0 %400, %v294
      %v402 = vpop.permute.xlu0 %401
      %405 = vset.pattern.permute.xlu0 0
      %406 = vperm.xlu0 %405, %v295
      %v407 = vpop.permute.xlu0 %406
      %410 = vset.pattern.permute.xlu0 0
      %411 = vperm.xlu0 %410, %v296
      %v412 = vpop.permute.xlu0 %411
      %415 = vset.pattern.permute.xlu0 0
      %416 = vperm.xlu0 %415, %v297
      %v417 = vpop.permute.xlu0 %416
      %420 = vset.pattern.permute.xlu0 0
      %421 = vperm.xlu0 %420, %v298
      %v422 = vpop.permute.xlu0 %421
      %425 = vset.pattern.permute.xlu0 0
      %426 = vperm.xlu0 %425, %v299
      %v427 = vpop.permute.xlu0 %426
      %430 = vset.pattern.permute.xlu0 0
      %431 = vperm.xlu0 %430, %v300
      %v432 = vpop.permute.xlu0 %431
      %435 = vset.pattern.permute.xlu0 0
      %436 = vperm.xlu0 %435, %v301
      %v437 = vpop.permute.xlu0 %436
      %440 = vset.pattern.permute.xlu0 0
      %441 = vperm.xlu0 %440, %v302
      %v442 = vpop.permute.xlu0 %441
      %445 = vset.pattern.permute.xlu0 0
      %446 = vperm.xlu0 %445, %v303
      %v447 = vpop.permute.xlu0 %446
      %450 = vset.pattern.permute.xlu0 0
      %451 = vperm.xlu0 %450, %v304
      %v452 = vpop.permute.xlu0 %451
      %455 = vset.pattern.permute.xlu0 0
      %456 = vperm.xlu0 %455, %v305
      %v457 = vpop.permute.xlu0 %456
      %460 = vset.pattern.permute.xlu0 0
      %461 = vperm.xlu0 %460, %v306
      %v462 = vpop.permute.xlu0 %461
      %465 = vset.pattern.permute.xlu0 0
      %466 = vperm.xlu0 %465, %v307
      %v467 = vpop.permute.xlu0 %466
      %470 = vset.pattern.permute.xlu0 0
      %471 = vperm.xlu0 %470, %v308
      %v472 = vpop.permute.xlu0 %471
      %475 = vset.pattern.permute.xlu0 0
      %476 = vperm.xlu0 %475, %v309
      %v477 = vpop.permute.xlu0 %476
      %480 = vset.pattern.permute.xlu0 0
      %481 = vperm.xlu0 %480, %v310
      %v482 = vpop.permute.xlu0 %481
      %485 = vset.pattern.permute.xlu0 0
      %486 = vperm.xlu0 %485, %v311
      %v487 = vpop.permute.xlu0 %486
      %490 = vset.pattern.permute.xlu0 0
      %491 = vperm.xlu0 %490, %v312
      %v492 = vpop.permute.xlu0 %491
      %495 = vset.pattern.permute.xlu0 0
      %496 = vperm.xlu0 %495, %v313
      %v497 = vpop.permute.xlu0 %496
      %500 = vset.pattern.permute.xlu0 0
      %501 = vperm.xlu0 %500, %v314
      %v502 = vpop.permute.xlu0 %501
      %505 = vset.pattern.permute.xlu0 0
      %506 = vperm.xlu0 %505, %v315
      %v507 = vpop.permute.xlu0 %506
      %510 = vset.pattern.permute.xlu0 0
      %511 = vperm.xlu0 %510, %v316
      %v512 = vpop.permute.xlu0 %511
      %515 = vset.pattern.permute.xlu0 0
      %516 = vperm.xlu0 %515, %v317
      %v517 = vpop.permute.xlu0 %516
      %520 = vset.pattern.permute.xlu0 0
      %521 = vperm.xlu0 %520, %v318
      %v522 = vpop.permute.xlu0 %521
      %525 = vset.pattern.permute.xlu0 0
      %526 = vperm.xlu0 %525, %v319
      %v527 = vpop.permute.xlu0 %526
      %530 = vset.pattern.permute.xlu0 0
      %531 = vperm.xlu0 %530, %v320
      %v532 = vpop.permute.xlu0 %531
      %535 = vset.pattern.permute.xlu0 0
      %536 = vperm.xlu0 %535, %v321
      %v537 = vpop.permute.xlu0 %536
      %540 = vset.pattern.permute.xlu0 0
      %541 = vperm.xlu0 %540, %v322
      %v542 = vpop.permute.xlu0 %541
      %545 = vset.pattern.permute.xlu0 0
      %546 = vperm.xlu0 %545, %v323
      %v547 = vpop.permute.xlu0 %546
      %550 = vset.pattern.permute.xlu0 0
      %551 = vperm.xlu0 %550, %v324
      %v552 = vpop.permute.xlu0 %551
      %555 = vset.pattern.permute.xlu0 0
      %556 = vperm.xlu0 %555, %v325
      %v557 = vpop.permute.xlu0 %556
      %560 = vset.pattern.permute.xlu0 0
      %561 = vperm.xlu0 %560, %v326
      %v562 = vpop.permute.xlu0 %561
      %565 = vset.pattern.permute.xlu0 0
      %566 = vperm.xlu0 %565, %v327
      %v567 = vpop.permute.xlu0 %566
      %570 = vset.pattern.permute.xlu0 0
      %571 = vperm.xlu0 %570, %v328
      %v572 = vpop.permute.xlu0 %571
      %575 = vset.pattern.permute.xlu0 0
      %576 = vperm.xlu0 %575, %v329
      %v577 = vpop.permute.xlu0 %576
      %580 = vset.pattern.permute.xlu0 0
      %581 = vperm.xlu0 %580, %v330
      %v582 = vpop.permute.xlu0 %581
      %585 = vset.pattern.permute.xlu0 0
      %586 = vperm.xlu0 %585, %v331
      %v587 = vpop.permute.xlu0 %586
      %590 = vset.pattern.permute.xlu0 0
      %591 = vperm.xlu0 %590, %v332
      %v592 = vpop.permute.xlu0 %591
      %595 = vset.pattern.permute.xlu0 0
      %596 = vperm.xlu0 %595, %v333
      %v597 = vpop.permute.xlu0 %596
      %600 = vset.pattern.permute.xlu0 0
      %601 = vperm.xlu0 %600, %v334
      %v602 = vpop.permute.xlu0 %601
      %605 = vset.pattern.permute.xlu0 0
      %606 = vperm.xlu0 %605, %v335
      %v607 = vpop.permute.xlu0 %606
      %610 = vset.pattern.permute.xlu0 0
      %611 = vperm.xlu0 %610, %v336
      %v612 = vpop.permute.xlu0 %611
      %615 = vset.pattern.permute.xlu0 0
      %616 = vperm.xlu0 %615, %v337
      %v617 = vpop.permute.xlu0 %616
      %620 = vset.pattern.permute.xlu0 0
      %621 = vperm.xlu0 %620, %v338
      %v622 = vpop.permute.xlu0 %621
      %625 = vset.pattern.permute.xlu0 0
      %626 = vperm.xlu0 %625, %v339
      %v627 = vpop.permute.xlu0 %626
      %630 = vset.pattern.permute.xlu0 0
      %631 = vperm.xlu0 %630, %v340
      %v632 = vpop.permute.xlu0 %631
      %635 = vset.pattern.permute.xlu0 0
      %636 = vperm.xlu0 %635, %v341
      %v637 = vpop.permute.xlu0 %636
      %640 = vset.pattern.permute.xlu0 0
      %641 = vperm.xlu0 %640, %v342
      %v642 = vpop.permute.xlu0 %641
      %645 = vset.pattern.permute.xlu0 0
      %646 = vperm.xlu0 %645, %v343
      %v647 = vpop.permute.xlu0 %646
      %650 = vset.pattern.permute.xlu0 0
      %651 = vperm.xlu0 %650, %v344
      %v652 = vpop.permute.xlu0 %651
      %655 = vset.pattern.permute.xlu0 0
      %656 = vperm.xlu0 %655, %v345
      %v657 = vpop.permute.xlu0 %656
      %660 = vset.pattern.permute.xlu0 0
      %661 = vperm.xlu0 %660, %v346
      %v662 = vpop.permute.xlu0 %661
      %665 = vset.pattern.permute.xlu0 0
      %666 = vperm.xlu0 %665, %v347
      %v667 = vpop.permute.xlu0 %666
      %v670 = vperm.slane %v348, 0
      %v671 = vperm.slane %v348, 1
      %v674 = vmul.f32 %v352, %v670
      %v675 = vmul.f32 %v352, %v671
      %v676 = vmul.f32 %v357, %v670
      %v677 = vmul.f32 %v357, %v671
      %v678 = vmul.f32 %v362, %v670
      %v679 = vmul.f32 %v362, %v671
      %v680 = vmul.f32 %v367, %v670
      %v681 = vmul.f32 %v367, %v671
      %v682 = vmul.f32 %v372, %v670
      %v683 = vmul.f32 %v372, %v671
      %v684 = vmul.f32 %v377, %v670
      %v685 = vmul.f32 %v377, %v671
      %v686 = vmul.f32 %v382, %v670
      %v687 = vmul.f32 %v382, %v671
      %v688 = vmul.f32 %v387, %v670
      %v689 = vmul.f32 %v387, %v671
      %v690 = vmul.f32 %v392, %v670
      %v691 = vmul.f32 %v392, %v671
      %v692 = vmul.f32 %v397, %v670
      %v693 = vmul.f32 %v397, %v671
      %v694 = vmul.f32 %v402, %v670
      %v695 = vmul.f32 %v402, %v671
      %v696 = vmul.f32 %v407, %v670
      %v697 = vmul.f32 %v407, %v671
      %v698 = vmul.f32 %v412, %v670
      %v699 = vmul.f32 %v412, %v671
      %v700 = vmul.f32 %v417, %v670
      %v701 = vmul.f32 %v417, %v671
      %v702 = vmul.f32 %v422, %v670
      %v703 = vmul.f32 %v422, %v671
      %v704 = vmul.f32 %v427, %v670
      %v705 = vmul.f32 %v427, %v671
      %v706 = vmul.f32 %v432, %v670
      %v707 = vmul.f32 %v432, %v671
      %v708 = vmul.f32 %v437, %v670
      %v709 = vmul.f32 %v437, %v671
      %v710 = vmul.f32 %v442, %v670
      %v711 = vmul.f32 %v442, %v671
      %v712 = vmul.f32 %v447, %v670
      %v713 = vmul.f32 %v447, %v671
      %v714 = vmul.f32 %v452, %v670
      %v715 = vmul.f32 %v452, %v671
      %v716 = vmul.f32 %v457, %v670
      %v717 = vmul.f32 %v457, %v671
      %v718 = vmul.f32 %v462, %v670
      %v719 = vmul.f32 %v462, %v671
      %v720 = vmul.f32 %v467, %v670
      %v721 = vmul.f32 %v467, %v671
      %v722 = vmul.f32 %v472, %v670
      %v723 = vmul.f32 %v472, %v671
      %v724 = vmul.f32 %v477, %v670
      %v725 = vmul.f32 %v477, %v671
      %v726 = vmul.f32 %v482, %v670
      %v727 = vmul.f32 %v482, %v671
      %v728 = vmul.f32 %v487, %v670
      %v729 = vmul.f32 %v487, %v671
      %v730 = vmul.f32 %v492, %v670
      %v731 = vmul.f32 %v492, %v671
      %v732 = vmul.f32 %v497, %v670
      %v733 = vmul.f32 %v497, %v671
      %v734 = vmul.f32 %v502, %v670
      %v735 = vmul.f32 %v502, %v671
      %v736 = vmul.f32 %v507, %v670
      %v737 = vmul.f32 %v507, %v671
      %v738 = vmul.f32 %v512, %v670
      %v739 = vmul.f32 %v512, %v671
      %v740 = vmul.f32 %v517, %v670
      %v741 = vmul.f32 %v517, %v671
      %v742 = vmul.f32 %v522, %v670
      %v743 = vmul.f32 %v522, %v671
      %v744 = vmul.f32 %v527, %v670
      %v745 = vmul.f32 %v527, %v671
      %v746 = vmul.f32 %v532, %v670
      %v747 = vmul.f32 %v532, %v671
      %v748 = vmul.f32 %v537, %v670
      %v749 = vmul.f32 %v537, %v671
      %v750 = vmul.f32 %v542, %v670
      %v751 = vmul.f32 %v542, %v671
      %v752 = vmul.f32 %v547, %v670
      %v753 = vmul.f32 %v547, %v671
      %v754 = vmul.f32 %v552, %v670
      %v755 = vmul.f32 %v552, %v671
      %v756 = vmul.f32 %v557, %v670
      %v757 = vmul.f32 %v557, %v671
      %v758 = vmul.f32 %v562, %v670
      %v759 = vmul.f32 %v562, %v671
      %v760 = vmul.f32 %v567, %v670
      %v761 = vmul.f32 %v567, %v671
      %v762 = vmul.f32 %v572, %v670
      %v763 = vmul.f32 %v572, %v671
      %v764 = vmul.f32 %v577, %v670
      %v765 = vmul.f32 %v577, %v671
      %v766 = vmul.f32 %v582, %v670
      %v767 = vmul.f32 %v582, %v671
      %v768 = vmul.f32 %v587, %v670
      %v769 = vmul.f32 %v587, %v671
      %v770 = vmul.f32 %v592, %v670
      %v771 = vmul.f32 %v592, %v671
      %v772 = vmul.f32 %v597, %v670
      %v773 = vmul.f32 %v597, %v671
      %v774 = vmul.f32 %v602, %v670
      %v775 = vmul.f32 %v602, %v671
      %v776 = vmul.f32 %v607, %v670
      %v777 = vmul.f32 %v607, %v671
      %v778 = vmul.f32 %v612, %v670
      %v779 = vmul.f32 %v612, %v671
      %v780 = vmul.f32 %v617, %v670
      %v781 = vmul.f32 %v617, %v671
      %v782 = vmul.f32 %v622, %v670
      %v783 = vmul.f32 %v622, %v671
      %v784 = vmul.f32 %v627, %v670
      %v785 = vmul.f32 %v627, %v671
      %v786 = vmul.f32 %v632, %v670
      %v787 = vmul.f32 %v632, %v671
      %v788 = vmul.f32 %v637, %v670
      %v789 = vmul.f32 %v637, %v671
      %v790 = vmul.f32 %v642, %v670
      %v791 = vmul.f32 %v642, %v671
      %v792 = vmul.f32 %v647, %v670
      %v793 = vmul.f32 %v647, %v671
      %v794 = vmul.f32 %v652, %v670
      %v795 = vmul.f32 %v652, %v671
      %v796 = vmul.f32 %v657, %v670
      %v797 = vmul.f32 %v657, %v671
      %v798 = vmul.f32 %v662, %v670
      %v799 = vmul.f32 %v662, %v671
      %v800 = vmul.f32 %v667, %v670
      %v801 = vmul.f32 %v667, %v671
      %s802 = scalar_lea.vmem %s1, 1
      %v803 = vld [vmem:[%s802] ss:$2 sm:$0x3]
      %804 = vset.pattern.permute.xlu0 1
      %805 = vperm.xlu0 %804, %v284
      %v806 = vpop.permute.xlu0 %805
      %808 = vset.pattern.permute.xlu0 1
      %809 = vperm.xlu0 %808, %v285
      %v810 = vpop.permute.xlu0 %809
      %812 = vset.pattern.permute.xlu0 1
      %813 = vperm.xlu0 %812, %v286
      %v814 = vpop.permute.xlu0 %813
      %816 = vset.pattern.permute.xlu0 1
      %817 = vperm.xlu0 %816, %v287
      %v818 = vpop.permute.xlu0 %817
      %820 = vset.pattern.permute.xlu0 1
      %821 = vperm.xlu0 %820, %v288
      %v822 = vpop.permute.xlu0 %821
      %824 = vset.pattern.permute.xlu0 1
      %825 = vperm.xlu0 %824, %v289
      %v826 = vpop.permute.xlu0 %825
      %828 = vset.pattern.permute.xlu0 1
      %829 = vperm.xlu0 %828, %v290
      %v830 = vpop.permute.xlu0 %829
      %832 = vset.pattern.permute.xlu0 1
      %833 = vperm.xlu0 %832, %v291
      %v834 = vpop.permute.xlu0 %833
      %836 = vset.pattern.permute.xlu0 1
      %837 = vperm.xlu0 %836, %v292
      %v838 = vpop.permute.xlu0 %837
      %840 = vset.pattern.permute.xlu0 1
      %841 = vperm.xlu0 %840, %v293
      %v842 = vpop.permute.xlu0 %841
      %844 = vset.pattern.permute.xlu0 1
      %845 = vperm.xlu0 %844, %v294
      %v846 = vpop.permute.xlu0 %845
      %848 = vset.pattern.permute.xlu0 1
      %849 = vperm.xlu0 %848, %v295
      %v850 = vpop.permute.xlu0 %849
      %852 = vset.pattern.permute.xlu0 1
      %853 = vperm.xlu0 %852, %v296
      %v854 = vpop.permute.xlu0 %853
      %856 = vset.pattern.permute.xlu0 1
      %857 = vperm.xlu0 %856, %v297
      %v858 = vpop.permute.xlu0 %857
      %860 = vset.pattern.permute.xlu0 1
      %861 = vperm.xlu0 %860, %v298
      %v862 = vpop.permute.xlu0 %861
      %864 = vset.pattern.permute.xlu0 1
      %865 = vperm.xlu0 %864, %v299
      %v866 = vpop.permute.xlu0 %865
      %868 = vset.pattern.permute.xlu0 1
      %869 = vperm.xlu0 %868, %v300
      %v870 = vpop.permute.xlu0 %869
      %872 = vset.pattern.permute.xlu0 1
      %873 = vperm.xlu0 %872, %v301
      %v874 = vpop.permute.xlu0 %873
      %876 = vset.pattern.permute.xlu0 1
      %877 = vperm.xlu0 %876, %v302
      %v878 = vpop.permute.xlu0 %877
      %880 = vset.pattern.permute.xlu0 1
      %881 = vperm.xlu0 %880, %v303
      %v882 = vpop.permute.xlu0 %881
      %884 = vset.pattern.permute.xlu0 1
      %885 = vperm.xlu0 %884, %v304
      %v886 = vpop.permute.xlu0 %885
      %888 = vset.pattern.permute.xlu0 1
      %889 = vperm.xlu0 %888, %v305
      %v890 = vpop.permute.xlu0 %889
      %892 = vset.pattern.permute.xlu0 1
      %893 = vperm.xlu0 %892, %v306
      %v894 = vpop.permute.xlu0 %893
      %896 = vset.pattern.permute.xlu0 1
      %897 = vperm.xlu0 %896, %v307
      %v898 = vpop.permute.xlu0 %897
      %900 = vset.pattern.permute.xlu0 1
      %901 = vperm.xlu0 %900, %v308
      %v902 = vpop.permute.xlu0 %901
      %904 = vset.pattern.permute.xlu0 1
      %905 = vperm.xlu0 %904, %v309
      %v906 = vpop.permute.xlu0 %905
      %908 = vset.pattern.permute.xlu0 1
      %909 = vperm.xlu0 %908, %v310
      %v910 = vpop.permute.xlu0 %909
      %912 = vset.pattern.permute.xlu0 1
      %913 = vperm.xlu0 %912, %v311
      %v914 = vpop.permute.xlu0 %913
      %916 = vset.pattern.permute.xlu0 1
      %917 = vperm.xlu0 %916, %v312
      %v918 = vpop.permute.xlu0 %917
      %920 = vset.pattern.permute.xlu0 1
      %921 = vperm.xlu0 %920, %v313
      %v922 = vpop.permute.xlu0 %921
      %924 = vset.pattern.permute.xlu0 1
      %925 = vperm.xlu0 %924, %v314
      %v926 = vpop.permute.xlu0 %925
      %928 = vset.pattern.permute.xlu0 1
      %929 = vperm.xlu0 %928, %v315
      %v930 = vpop.permute.xlu0 %929
      %932 = vset.pattern.permute.xlu0 1
      %933 = vperm.xlu0 %932, %v316
      %v934 = vpop.permute.xlu0 %933
      %936 = vset.pattern.permute.xlu0 1
      %937 = vperm.xlu0 %936, %v317
      %v938 = vpop.permute.xlu0 %937
      %940 = vset.pattern.permute.xlu0 1
      %941 = vperm.xlu0 %940, %v318
      %v942 = vpop.permute.xlu0 %941
      %944 = vset.pattern.permute.xlu0 1
      %945 = vperm.xlu0 %944, %v319
      %v946 = vpop.permute.xlu0 %945
      %948 = vset.pattern.permute.xlu0 1
      %949 = vperm.xlu0 %948, %v320
      %v950 = vpop.permute.xlu0 %949
      %952 = vset.pattern.permute.xlu0 1
      %953 = vperm.xlu0 %952, %v321
      %v954 = vpop.permute.xlu0 %953
      %956 = vset.pattern.permute.xlu0 1
      %957 = vperm.xlu0 %956, %v322
      %v958 = vpop.permute.xlu0 %957
      %960 = vset.pattern.permute.xlu0 1
      %961 = vperm.xlu0 %960, %v323
      %v962 = vpop.permute.xlu0 %961
      %964 = vset.pattern.permute.xlu0 1
      %965 = vperm.xlu0 %964, %v324
      %v966 = vpop.permute.xlu0 %965
      %968 = vset.pattern.permute.xlu0 1
      %969 = vperm.xlu0 %968, %v325
      %v970 = vpop.permute.xlu0 %969
      %972 = vset.pattern.permute.xlu0 1
      %973 = vperm.xlu0 %972, %v326
      %v974 = vpop.permute.xlu0 %973
      %976 = vset.pattern.permute.xlu0 1
      %977 = vperm.xlu0 %976, %v327
      %v978 = vpop.permute.xlu0 %977
      %980 = vset.pattern.permute.xlu0 1
      %981 = vperm.xlu0 %980, %v328
      %v982 = vpop.permute.xlu0 %981
      %984 = vset.pattern.permute.xlu0 1
      %985 = vperm.xlu0 %984, %v329
      %v986 = vpop.permute.xlu0 %985
      %988 = vset.pattern.permute.xlu0 1
      %989 = vperm.xlu0 %988, %v330
      %v990 = vpop.permute.xlu0 %989
      %992 = vset.pattern.permute.xlu0 1
      %993 = vperm.xlu0 %992, %v331
      %v994 = vpop.permute.xlu0 %993
      %996 = vset.pattern.permute.xlu0 1
      %997 = vperm.xlu0 %996, %v332
      %v998 = vpop.permute.xlu0 %997
      %1000 = vset.pattern.permute.xlu0 1
      %1001 = vperm.xlu0 %1000, %v333
      %v1002 = vpop.permute.xlu0 %1001
      %1004 = vset.pattern.permute.xlu0 1
      %1005 = vperm.xlu0 %1004, %v334
      %v1006 = vpop.permute.xlu0 %1005
      %1008 = vset.pattern.permute.xlu0 1
      %1009 = vperm.xlu0 %1008, %v335
      %v1010 = vpop.permute.xlu0 %1009
      %1012 = vset.pattern.permute.xlu0 1
      %1013 = vperm.xlu0 %1012, %v336
      %v1014 = vpop.permute.xlu0 %1013
      %1016 = vset.pattern.permute.xlu0 1
      %1017 = vperm.xlu0 %1016, %v337
      %v1018 = vpop.permute.xlu0 %1017
      %1020 = vset.pattern.permute.xlu0 1
      %1021 = vperm.xlu0 %1020, %v338
      %v1022 = vpop.permute.xlu0 %1021
      %1024 = vset.pattern.permute.xlu0 1
      %1025 = vperm.xlu0 %1024, %v339
      %v1026 = vpop.permute.xlu0 %1025
      %1028 = vset.pattern.permute.xlu0 1
      %1029 = vperm.xlu0 %1028, %v340
      %v1030 = vpop.permute.xlu0 %1029
      %1032 = vset.pattern.permute.xlu0 1
      %1033 = vperm.xlu0 %1032, %v341
      %v1034 = vpop.permute.xlu0 %1033
      %1036 = vset.pattern.permute.xlu0 1
      %1037 = vperm.xlu0 %1036, %v342
      %v1038 = vpop.permute.xlu0 %1037
      %1040 = vset.pattern.permute.xlu0 1
      %1041 = vperm.xlu0 %1040, %v343
      %v1042 = vpop.permute.xlu0 %1041
      %1044 = vset.pattern.permute.xlu0 1
      %1045 = vperm.xlu0 %1044, %v344
      %v1046 = vpop.permute.xlu0 %1045
      %1048 = vset.pattern.permute.xlu0 1
      %1049 = vperm.xlu0 %1048, %v345
      %v1050 = vpop.permute.xlu0 %1049
      %1052 = vset.pattern.permute.xlu0 1
      %1053 = vperm.xlu0 %1052, %v346
      %v1054 = vpop.permute.xlu0 %1053
      %1056 = vset.pattern.permute.xlu0 1
      %1057 = vperm.xlu0 %1056, %v347
      %v1058 = vpop.permute.xlu0 %1057
      %v1061 = vperm.slane %v803, 0
      %v1062 = vperm.slane %v803, 1
      %v1065 = vmul.f32 %v806, %v1061
      %v1066 = vmul.f32 %v806, %v1062
      %v1067 = vmul.f32 %v810, %v1061
      %v1068 = vmul.f32 %v810, %v1062
      %v1069 = vmul.f32 %v814, %v1061
      %v1070 = vmul.f32 %v814, %v1062
      %v1071 = vmul.f32 %v818, %v1061
      %v1072 = vmul.f32 %v818, %v1062
      %v1073 = vmul.f32 %v822, %v1061
      %v1074 = vmul.f32 %v822, %v1062
      %v1075 = vmul.f32 %v826, %v1061
      %v1076 = vmul.f32 %v826, %v1062
      %v1077 = vmul.f32 %v830, %v1061
      %v1078 = vmul.f32 %v830, %v1062
      %v1079 = vmul.f32 %v834, %v1061
      %v1080 = vmul.f32 %v834, %v1062
      %v1081 = vmul.f32 %v838, %v1061
      %v1082 = vmul.f32 %v838, %v1062
      %v1083 = vmul.f32 %v842, %v1061
      %v1084 = vmul.f32 %v842, %v1062
      %v1085 = vmul.f32 %v846, %v1061
      %v1086 = vmul.f32 %v846, %v1062
      %v1087 = vmul.f32 %v850, %v1061
      %v1088 = vmul.f32 %v850, %v1062
      %v1089 = vmul.f32 %v854, %v1061
      %v1090 = vmul.f32 %v854, %v1062
      %v1091 = vmul.f32 %v858, %v1061
      %v1092 = vmul.f32 %v858, %v1062
      %v1093 = vmul.f32 %v862, %v1061
      %v1094 = vmul.f32 %v862, %v1062
      %v1095 = vmul.f32 %v866, %v1061
      %v1096 = vmul.f32 %v866, %v1062
      %v1097 = vmul.f32 %v870, %v1061
      %v1098 = vmul.f32 %v870, %v1062
      %v1099 = vmul.f32 %v874, %v1061
      %v1100 = vmul.f32 %v874, %v1062
      %v1101 = vmul.f32 %v878, %v1061
      %v1102 = vmul.f32 %v878, %v1062
      %v1103 = vmul.f32 %v882, %v1061
      %v1104 = vmul.f32 %v882, %v1062
      %v1105 = vmul.f32 %v886, %v1061
      %v1106 = vmul.f32 %v886, %v1062
      %v1107 = vmul.f32 %v890, %v1061
      %v1108 = vmul.f32 %v890, %v1062
      %v1109 = vmul.f32 %v894, %v1061
      %v1110 = vmul.f32 %v894, %v1062
      %v1111 = vmul.f32 %v898, %v1061
      %v1112 = vmul.f32 %v898, %v1062
      %v1113 = vmul.f32 %v902, %v1061
      %v1114 = vmul.f32 %v902, %v1062
      %v1115 = vmul.f32 %v906, %v1061
      %v1116 = vmul.f32 %v906, %v1062
      %v1117 = vmul.f32 %v910, %v1061
      %v1118 = vmul.f32 %v910, %v1062
      %v1119 = vmul.f32 %v914, %v1061
      %v1120 = vmul.f32 %v914, %v1062
      %v1121 = vmul.f32 %v918, %v1061
      %v1122 = vmul.f32 %v918, %v1062
      %v1123 = vmul.f32 %v922, %v1061
      %v1124 = vmul.f32 %v922, %v1062
      %v1125 = vmul.f32 %v926, %v1061
      %v1126 = vmul.f32 %v926, %v1062
      %v1127 = vmul.f32 %v930, %v1061
      %v1128 = vmul.f32 %v930, %v1062
      %v1129 = vmul.f32 %v934, %v1061
      %v1130 = vmul.f32 %v934, %v1062
      %v1131 = vmul.f32 %v938, %v1061
      %v1132 = vmul.f32 %v938, %v1062
      %v1133 = vmul.f32 %v942, %v1061
      %v1134 = vmul.f32 %v942, %v1062
      %v1135 = vmul.f32 %v946, %v1061
      %v1136 = vmul.f32 %v946, %v1062
      %v1137 = vmul.f32 %v950, %v1061
      %v1138 = vmul.f32 %v950, %v1062
      %v1139 = vmul.f32 %v954, %v1061
      %v1140 = vmul.f32 %v954, %v1062
      %v1141 = vmul.f32 %v958, %v1061
      %v1142 = vmul.f32 %v958, %v1062
      %v1143 = vmul.f32 %v962, %v1061
      %v1144 = vmul.f32 %v962, %v1062
      %v1145 = vmul.f32 %v966, %v1061
      %v1146 = vmul.f32 %v966, %v1062
      %v1147 = vmul.f32 %v970, %v1061
      %v1148 = vmul.f32 %v970, %v1062
      %v1149 = vmul.f32 %v974, %v1061
      %v1150 = vmul.f32 %v974, %v1062
      %v1151 = vmul.f32 %v978, %v1061
      %v1152 = vmul.f32 %v978, %v1062
      %v1153 = vmul.f32 %v982, %v1061
      %v1154 = vmul.f32 %v982, %v1062
      %v1155 = vmul.f32 %v986, %v1061
      %v1156 = vmul.f32 %v986, %v1062
      %v1157 = vmul.f32 %v990, %v1061
      %v1158 = vmul.f32 %v990, %v1062
      %v1159 = vmul.f32 %v994, %v1061
      %v1160 = vmul.f32 %v994, %v1062
      %v1161 = vmul.f32 %v998, %v1061
      %v1162 = vmul.f32 %v998, %v1062
      %v1163 = vmul.f32 %v1002, %v1061
      %v1164 = vmul.f32 %v1002, %v1062
      %v1165 = vmul.f32 %v1006, %v1061
      %v1166 = vmul.f32 %v1006, %v1062
      %v1167 = vmul.f32 %v1010, %v1061
      %v1168 = vmul.f32 %v1010, %v1062
      %v1169 = vmul.f32 %v1014, %v1061
      %v1170 = vmul.f32 %v1014, %v1062
      %v1171 = vmul.f32 %v1018, %v1061
      %v1172 = vmul.f32 %v1018, %v1062
      %v1173 = vmul.f32 %v1022, %v1061
      %v1174 = vmul.f32 %v1022, %v1062
      %v1175 = vmul.f32 %v1026, %v1061
      %v1176 = vmul.f32 %v1026, %v1062
      %v1177 = vmul.f32 %v1030, %v1061
      %v1178 = vmul.f32 %v1030, %v1062
      %v1179 = vmul.f32 %v1034, %v1061
      %v1180 = vmul.f32 %v1034, %v1062
      %v1181 = vmul.f32 %v1038, %v1061
      %v1182 = vmul.f32 %v1038, %v1062
      %v1183 = vmul.f32 %v1042, %v1061
      %v1184 = vmul.f32 %v1042, %v1062
      %v1185 = vmul.f32 %v1046, %v1061
      %v1186 = vmul.f32 %v1046, %v1062
      %v1187 = vmul.f32 %v1050, %v1061
      %v1188 = vmul.f32 %v1050, %v1062
      %v1189 = vmul.f32 %v1054, %v1061
      %v1190 = vmul.f32 %v1054, %v1062
      %v1191 = vmul.f32 %v1058, %v1061
      %v1192 = vmul.f32 %v1058, %v1062
      %v1193 = vadd.f32 %v674, %v1065
      %v1194 = vadd.f32 %v675, %v1066
      %v1195 = vadd.f32 %v676, %v1067
      %v1196 = vadd.f32 %v677, %v1068
      %v1197 = vadd.f32 %v678, %v1069
      %v1198 = vadd.f32 %v679, %v1070
      %v1199 = vadd.f32 %v680, %v1071
      %v1200 = vadd.f32 %v681, %v1072
      %v1201 = vadd.f32 %v682, %v1073
      %v1202 = vadd.f32 %v683, %v1074
      %v1203 = vadd.f32 %v684, %v1075
      %v1204 = vadd.f32 %v685, %v1076
      %v1205 = vadd.f32 %v686, %v1077
      %v1206 = vadd.f32 %v687, %v1078
      %v1207 = vadd.f32 %v688, %v1079
      %v1208 = vadd.f32 %v689, %v1080
      %v1209 = vadd.f32 %v690, %v1081
      %v1210 = vadd.f32 %v691, %v1082
      %v1211 = vadd.f32 %v692, %v1083
      %v1212 = vadd.f32 %v693, %v1084
      %v1213 = vadd.f32 %v694, %v1085
      %v1214 = vadd.f32 %v695, %v1086
      %v1215 = vadd.f32 %v696, %v1087
      %v1216 = vadd.f32 %v697, %v1088
      %v1217 = vadd.f32 %v698, %v1089
      %v1218 = vadd.f32 %v699, %v1090
      %v1219 = vadd.f32 %v700, %v1091
      %v1220 = vadd.f32 %v701, %v1092
      %v1221 = vadd.f32 %v702, %v1093
      %v1222 = vadd.f32 %v703, %v1094
      %v1223 = vadd.f32 %v704, %v1095
      %v1224 = vadd.f32 %v705, %v1096
      %v1225 = vadd.f32 %v706, %v1097
      %v1226 = vadd.f32 %v707, %v1098
      %v1227 = vadd.f32 %v708, %v1099
      %v1228 = vadd.f32 %v709, %v1100
      %v1229 = vadd.f32 %v710, %v1101
      %v1230 = vadd.f32 %v711, %v1102
      %v1231 = vadd.f32 %v712, %v1103
      %v1232 = vadd.f32 %v713, %v1104
      %v1233 = vadd.f32 %v714, %v1105
      %v1234 = vadd.f32 %v715, %v1106
      %v1235 = vadd.f32 %v716, %v1107
      %v1236 = vadd.f32 %v717, %v1108
      %v1237 = vadd.f32 %v718, %v1109
      %v1238 = vadd.f32 %v719, %v1110
      %v1239 = vadd.f32 %v720, %v1111
      %v1240 = vadd.f32 %v721, %v1112
      %v1241 = vadd.f32 %v722, %v1113
      %v1242 = vadd.f32 %v723, %v1114
      %v1243 = vadd.f32 %v724, %v1115
      %v1244 = vadd.f32 %v725, %v1116
      %v1245 = vadd.f32 %v726, %v1117
      %v1246 = vadd.f32 %v727, %v1118
      %v1247 = vadd.f32 %v728, %v1119
      %v1248 = vadd.f32 %v729, %v1120
      %v1249 = vadd.f32 %v730, %v1121
      %v1250 = vadd.f32 %v731, %v1122
      %v1251 = vadd.f32 %v732, %v1123
      %v1252 = vadd.f32 %v733, %v1124
      %v1253 = vadd.f32 %v734, %v1125
      %v1254 = vadd.f32 %v735, %v1126
      %v1255 = vadd.f32 %v736, %v1127
      %v1256 = vadd.f32 %v737, %v1128
      %v1257 = vadd.f32 %v738, %v1129
      %v1258 = vadd.f32 %v739, %v1130
      %v1259 = vadd.f32 %v740, %v1131
      %v1260 = vadd.f32 %v741, %v1132
      %v1261 = vadd.f32 %v742, %v1133
      %v1262 = vadd.f32 %v743, %v1134
      %v1263 = vadd.f32 %v744, %v1135
      %v1264 = vadd.f32 %v745, %v1136
      %v1265 = vadd.f32 %v746, %v1137
      %v1266 = vadd.f32 %v747, %v1138
      %v1267 = vadd.f32 %v748, %v1139
      %v1268 = vadd.f32 %v749, %v1140
      %v1269 = vadd.f32 %v750, %v1141
      %v1270 = vadd.f32 %v751, %v1142
      %v1271 = vadd.f32 %v752, %v1143
      %v1272 = vadd.f32 %v753, %v1144
      %v1273 = vadd.f32 %v754, %v1145
      %v1274 = vadd.f32 %v755, %v1146
      %v1275 = vadd.f32 %v756, %v1147
      %v1276 = vadd.f32 %v757, %v1148
      %v1277 = vadd.f32 %v758, %v1149
      %v1278 = vadd.f32 %v759, %v1150
      %v1279 = vadd.f32 %v760, %v1151
      %v1280 = vadd.f32 %v761, %v1152
      %v1281 = vadd.f32 %v762, %v1153
      %v1282 = vadd.f32 %v763, %v1154
      %v1283 = vadd.f32 %v764, %v1155
      %v1284 = vadd.f32 %v765, %v1156
      %v1285 = vadd.f32 %v766, %v1157
      %v1286 = vadd.f32 %v767, %v1158
      %v1287 = vadd.f32 %v768, %v1159
      %v1288 = vadd.f32 %v769, %v1160
      %v1289 = vadd.f32 %v770, %v1161
      %v1290 = vadd.f32 %v771, %v1162
      %v1291 = vadd.f32 %v772, %v1163
      %v1292 = vadd.f32 %v773, %v1164
      %v1293 = vadd.f32 %v774, %v1165
      %v1294 = vadd.f32 %v775, %v1166
      %v1295 = vadd.f32 %v776, %v1167
      %v1296 = vadd.f32 %v777, %v1168
      %v1297 = vadd.f32 %v778, %v1169
      %v1298 = vadd.f32 %v779, %v1170
      %v1299 = vadd.f32 %v780, %v1171
      %v1300 = vadd.f32 %v781, %v1172
      %v1301 = vadd.f32 %v782, %v1173
      %v1302 = vadd.f32 %v783, %v1174
      %v1303 = vadd.f32 %v784, %v1175
      %v1304 = vadd.f32 %v785, %v1176
      %v1305 = vadd.f32 %v786, %v1177
      %v1306 = vadd.f32 %v787, %v1178
      %v1307 = vadd.f32 %v788, %v1179
      %v1308 = vadd.f32 %v789, %v1180
      %v1309 = vadd.f32 %v790, %v1181
      %v1310 = vadd.f32 %v791, %v1182
      %v1311 = vadd.f32 %v792, %v1183
      %v1312 = vadd.f32 %v793, %v1184
      %v1313 = vadd.f32 %v794, %v1185
      %v1314 = vadd.f32 %v795, %v1186
      %v1315 = vadd.f32 %v796, %v1187
      %v1316 = vadd.f32 %v797, %v1188
      %v1317 = vadd.f32 %v798, %v1189
      %v1318 = vadd.f32 %v799, %v1190
      %v1319 = vadd.f32 %v800, %v1191
      %v1320 = vadd.f32 %v801, %v1192
      %v1321 = vld [vmem:[%s2] sm:$0x3]
      %v1323 = vperm.slane %v1321, 0
      %v1324 = vperm.slane %v1321, 1
      %v1327 = vadd.f32 %v1193, %v1323
      %v1328 = vadd.f32 %v1194, %v1324
      %v1329 = vadd.f32 %v1195, %v1323
      %v1330 = vadd.f32 %v1196, %v1324
      %v1331 = vadd.f32 %v1197, %v1323
      %v1332 = vadd.f32 %v1198, %v1324
      %v1333 = vadd.f32 %v1199, %v1323
      %v1334 = vadd.f32 %v1200, %v1324
      %v1335 = vadd.f32 %v1201, %v1323
      %v1336 = vadd.f32 %v1202, %v1324
      %v1337 = vadd.f32 %v1203, %v1323
      %v1338 = vadd.f32 %v1204, %v1324
      %v1339 = vadd.f32 %v1205, %v1323
      %v1340 = vadd.f32 %v1206, %v1324
      %v1341 = vadd.f32 %v1207, %v1323
      %v1342 = vadd.f32 %v1208, %v1324
      %v1343 = vadd.f32 %v1209, %v1323
      %v1344 = vadd.f32 %v1210, %v1324
      %v1345 = vadd.f32 %v1211, %v1323
      %v1346 = vadd.f32 %v1212, %v1324
      %v1347 = vadd.f32 %v1213, %v1323
      %v1348 = vadd.f32 %v1214, %v1324
      %v1349 = vadd.f32 %v1215, %v1323
      %v1350 = vadd.f32 %v1216, %v1324
      %v1351 = vadd.f32 %v1217, %v1323
      %v1352 = vadd.f32 %v1218, %v1324
      %v1353 = vadd.f32 %v1219, %v1323
      %v1354 = vadd.f32 %v1220, %v1324
      %v1355 = vadd.f32 %v1221, %v1323
      %v1356 = vadd.f32 %v1222, %v1324
      %v1357 = vadd.f32 %v1223, %v1323
      %v1358 = vadd.f32 %v1224, %v1324
      %v1359 = vadd.f32 %v1225, %v1323
      %v1360 = vadd.f32 %v1226, %v1324
      %v1361 = vadd.f32 %v1227, %v1323
      %v1362 = vadd.f32 %v1228, %v1324
      %v1363 = vadd.f32 %v1229, %v1323
      %v1364 = vadd.f32 %v1230, %v1324
      %v1365 = vadd.f32 %v1231, %v1323
      %v1366 = vadd.f32 %v1232, %v1324
      %v1367 = vadd.f32 %v1233, %v1323
      %v1368 = vadd.f32 %v1234, %v1324
      %v1369 = vadd.f32 %v1235, %v1323
      %v1370 = vadd.f32 %v1236, %v1324
      %v1371 = vadd.f32 %v1237, %v1323
      %v1372 = vadd.f32 %v1238, %v1324
      %v1373 = vadd.f32 %v1239, %v1323
      %v1374 = vadd.f32 %v1240, %v1324
      %v1375 = vadd.f32 %v1241, %v1323
      %v1376 = vadd.f32 %v1242, %v1324
      %v1377 = vadd.f32 %v1243, %v1323
      %v1378 = vadd.f32 %v1244, %v1324
      %v1379 = vadd.f32 %v1245, %v1323
      %v1380 = vadd.f32 %v1246, %v1324
      %v1381 = vadd.f32 %v1247, %v1323
      %v1382 = vadd.f32 %v1248, %v1324
      %v1383 = vadd.f32 %v1249, %v1323
      %v1384 = vadd.f32 %v1250, %v1324
      %v1385 = vadd.f32 %v1251, %v1323
      %v1386 = vadd.f32 %v1252, %v1324
      %v1387 = vadd.f32 %v1253, %v1323
      %v1388 = vadd.f32 %v1254, %v1324
      %v1389 = vadd.f32 %v1255, %v1323
      %v1390 = vadd.f32 %v1256, %v1324
      %v1391 = vadd.f32 %v1257, %v1323
      %v1392 = vadd.f32 %v1258, %v1324
      %v1393 = vadd.f32 %v1259, %v1323
      %v1394 = vadd.f32 %v1260, %v1324
      %v1395 = vadd.f32 %v1261, %v1323
      %v1396 = vadd.f32 %v1262, %v1324
      %v1397 = vadd.f32 %v1263, %v1323
      %v1398 = vadd.f32 %v1264, %v1324
      %v1399 = vadd.f32 %v1265, %v1323
      %v1400 = vadd.f32 %v1266, %v1324
      %v1401 = vadd.f32 %v1267, %v1323
      %v1402 = vadd.f32 %v1268, %v1324
      %v1403 = vadd.f32 %v1269, %v1323
      %v1404 = vadd.f32 %v1270, %v1324
      %v1405 = vadd.f32 %v1271, %v1323
      %v1406 = vadd.f32 %v1272, %v1324
      %v1407 = vadd.f32 %v1273, %v1323
      %v1408 = vadd.f32 %v1274, %v1324
      %v1409 = vadd.f32 %v1275, %v1323
      %v1410 = vadd.f32 %v1276, %v1324
      %v1411 = vadd.f32 %v1277, %v1323
      %v1412 = vadd.f32 %v1278, %v1324
      %v1413 = vadd.f32 %v1279, %v1323
      %v1414 = vadd.f32 %v1280, %v1324
      %v1415 = vadd.f32 %v1281, %v1323
      %v1416 = vadd.f32 %v1282, %v1324
      %v1417 = vadd.f32 %v1283, %v1323
      %v1418 = vadd.f32 %v1284, %v1324
      %v1419 = vadd.f32 %v1285, %v1323
      %v1420 = vadd.f32 %v1286, %v1324
      %v1421 = vadd.f32 %v1287, %v1323
      %v1422 = vadd.f32 %v1288, %v1324
      %v1423 = vadd.f32 %v1289, %v1323
      %v1424 = vadd.f32 %v1290, %v1324
      %v1425 = vadd.f32 %v1291, %v1323
      %v1426 = vadd.f32 %v1292, %v1324
      %v1427 = vadd.f32 %v1293, %v1323
      %v1428 = vadd.f32 %v1294, %v1324
      %v1429 = vadd.f32 %v1295, %v1323
      %v1430 = vadd.f32 %v1296, %v1324
      %v1431 = vadd.f32 %v1297, %v1323
      %v1432 = vadd.f32 %v1298, %v1324
      %v1433 = vadd.f32 %v1299, %v1323
      %v1434 = vadd.f32 %v1300, %v1324
      %v1435 = vadd.f32 %v1301, %v1323
      %v1436 = vadd.f32 %v1302, %v1324
      %v1437 = vadd.f32 %v1303, %v1323
      %v1438 = vadd.f32 %v1304, %v1324
      %v1439 = vadd.f32 %v1305, %v1323
      %v1440 = vadd.f32 %v1306, %v1324
      %v1441 = vadd.f32 %v1307, %v1323
      %v1442 = vadd.f32 %v1308, %v1324
      %v1443 = vadd.f32 %v1309, %v1323
      %v1444 = vadd.f32 %v1310, %v1324
      %v1445 = vadd.f32 %v1311, %v1323
      %v1446 = vadd.f32 %v1312, %v1324
      %v1447 = vadd.f32 %v1313, %v1323
      %v1448 = vadd.f32 %v1314, %v1324
      %v1449 = vadd.f32 %v1315, %v1323
      %v1450 = vadd.f32 %v1316, %v1324
      %v1451 = vadd.f32 %v1317, %v1323
      %v1452 = vadd.f32 %v1318, %v1324
      %v1453 = vadd.f32 %v1319, %v1323
      %v1454 = vadd.f32 %v1320, %v1324
      %v1455 = vmax.f32 %v1327, 0.0
      %v1456 = vmax.f32 %v1328, 0.0
      %v1457 = vmax.f32 %v1329, 0.0
      %v1458 = vmax.f32 %v1330, 0.0
      %v1459 = vmax.f32 %v1331, 0.0
      %v1460 = vmax.f32 %v1332, 0.0
      %v1461 = vmax.f32 %v1333, 0.0
      %v1462 = vmax.f32 %v1334, 0.0
      %v1463 = vmax.f32 %v1335, 0.0
      %v1464 = vmax.f32 %v1336, 0.0
      %v1465 = vmax.f32 %v1337, 0.0
      %v1466 = vmax.f32 %v1338, 0.0
      %v1467 = vmax.f32 %v1339, 0.0
      %v1468 = vmax.f32 %v1340, 0.0
      %v1469 = vmax.f32 %v1341, 0.0
      %v1470 = vmax.f32 %v1342, 0.0
      %v1471 = vmax.f32 %v1343, 0.0
      %v1472 = vmax.f32 %v1344, 0.0
      %v1473 = vmax.f32 %v1345, 0.0
      %v1474 = vmax.f32 %v1346, 0.0
      %v1475 = vmax.f32 %v1347, 0.0
      %v1476 = vmax.f32 %v1348, 0.0
      %v1477 = vmax.f32 %v1349, 0.0
      %v1478 = vmax.f32 %v1350, 0.0
      %v1479 = vmax.f32 %v1351, 0.0
      %v1480 = vmax.f32 %v1352, 0.0
      %v1481 = vmax.f32 %v1353, 0.0
      %v1482 = vmax.f32 %v1354, 0.0
      %v1483 = vmax.f32 %v1355, 0.0
      %v1484 = vmax.f32 %v1356, 0.0
      %v1485 = vmax.f32 %v1357, 0.0
      %v1486 = vmax.f32 %v1358, 0.0
      %v1487 = vmax.f32 %v1359, 0.0
      %v1488 = vmax.f32 %v1360, 0.0
      %v1489 = vmax.f32 %v1361, 0.0
      %v1490 = vmax.f32 %v1362, 0.0
      %v1491 = vmax.f32 %v1363, 0.0
      %v1492 = vmax.f32 %v1364, 0.0
      %v1493 = vmax.f32 %v1365, 0.0
      %v1494 = vmax.f32 %v1366, 0.0
      %v1495 = vmax.f32 %v1367, 0.0
      %v1496 = vmax.f32 %v1368, 0.0
      %v1497 = vmax.f32 %v1369, 0.0
      %v1498 = vmax.f32 %v1370, 0.0
      %v1499 = vmax.f32 %v1371, 0.0
      %v1500 = vmax.f32 %v1372, 0.0
      %v1501 = vmax.f32 %v1373, 0.0
      %v1502 = vmax.f32 %v1374, 0.0
      %v1503 = vmax.f32 %v1375, 0.0
      %v1504 = vmax.f32 %v1376, 0.0
      %v1505 = vmax.f32 %v1377, 0.0
      %v1506 = vmax.f32 %v1378, 0.0
      %v1507 = vmax.f32 %v1379, 0.0
      %v1508 = vmax.f32 %v1380, 0.0
      %v1509 = vmax.f32 %v1381, 0.0
      %v1510 = vmax.f32 %v1382, 0.0
      %v1511 = vmax.f32 %v1383, 0.0
      %v1512 = vmax.f32 %v1384, 0.0
      %v1513 = vmax.f32 %v1385, 0.0
      %v1514 = vmax.f32 %v1386, 0.0
      %v1515 = vmax.f32 %v1387, 0.0
      %v1516 = vmax.f32 %v1388, 0.0
      %v1517 = vmax.f32 %v1389, 0.0
      %v1518 = vmax.f32 %v1390, 0.0
      %v1519 = vmax.f32 %v1391, 0.0
      %v1520 = vmax.f32 %v1392, 0.0
      %v1521 = vmax.f32 %v1393, 0.0
      %v1522 = vmax.f32 %v1394, 0.0
      %v1523 = vmax.f32 %v1395, 0.0
      %v1524 = vmax.f32 %v1396, 0.0
      %v1525 = vmax.f32 %v1397, 0.0
      %v1526 = vmax.f32 %v1398, 0.0
      %v1527 = vmax.f32 %v1399, 0.0
      %v1528 = vmax.f32 %v1400, 0.0
      %v1529 = vmax.f32 %v1401, 0.0
      %v1530 = vmax.f32 %v1402, 0.0
      %v1531 = vmax.f32 %v1403, 0.0
      %v1532 = vmax.f32 %v1404, 0.0
      %v1533 = vmax.f32 %v1405, 0.0
      %v1534 = vmax.f32 %v1406, 0.0
      %v1535 = vmax.f32 %v1407, 0.0
      %v1536 = vmax.f32 %v1408, 0.0
      %v1537 = vmax.f32 %v1409, 0.0
      %v1538 = vmax.f32 %v1410, 0.0
      %v1539 = vmax.f32 %v1411, 0.0
      %v1540 = vmax.f32 %v1412, 0.0
      %v1541 = vmax.f32 %v1413, 0.0
      %v1542 = vmax.f32 %v1414, 0.0
      %v1543 = vmax.f32 %v1415, 0.0
      %v1544 = vmax.f32 %v1416, 0.0
      %v1545 = vmax.f32 %v1417, 0.0
      %v1546 = vmax.f32 %v1418, 0.0
      %v1547 = vmax.f32 %v1419, 0.0
      %v1548 = vmax.f32 %v1420, 0.0
      %v1549 = vmax.f32 %v1421, 0.0
      %v1550 = vmax.f32 %v1422, 0.0
      %v1551 = vmax.f32 %v1423, 0.0
      %v1552 = vmax.f32 %v1424, 0.0
      %v1553 = vmax.f32 %v1425, 0.0
      %v1554 = vmax.f32 %v1426, 0.0
      %v1555 = vmax.f32 %v1427, 0.0
      %v1556 = vmax.f32 %v1428, 0.0
      %v1557 = vmax.f32 %v1429, 0.0
      %v1558 = vmax.f32 %v1430, 0.0
      %v1559 = vmax.f32 %v1431, 0.0
      %v1560 = vmax.f32 %v1432, 0.0
      %v1561 = vmax.f32 %v1433, 0.0
      %v1562 = vmax.f32 %v1434, 0.0
      %v1563 = vmax.f32 %v1435, 0.0
      %v1564 = vmax.f32 %v1436, 0.0
      %v1565 = vmax.f32 %v1437, 0.0
      %v1566 = vmax.f32 %v1438, 0.0
      %v1567 = vmax.f32 %v1439, 0.0
      %v1568 = vmax.f32 %v1440, 0.0
      %v1569 = vmax.f32 %v1441, 0.0
      %v1570 = vmax.f32 %v1442, 0.0
      %v1571 = vmax.f32 %v1443, 0.0
      %v1572 = vmax.f32 %v1444, 0.0
      %v1573 = vmax.f32 %v1445, 0.0
      %v1574 = vmax.f32 %v1446, 0.0
      %v1575 = vmax.f32 %v1447, 0.0
      %v1576 = vmax.f32 %v1448, 0.0
      %v1577 = vmax.f32 %v1449, 0.0
      %v1578 = vmax.f32 %v1450, 0.0
      %v1579 = vmax.f32 %v1451, 0.0
      %v1580 = vmax.f32 %v1452, 0.0
      %v1581 = vmax.f32 %v1453, 0.0
      %v1582 = vmax.f32 %v1454, 0.0
      %v1583 = vpack.c.bf16 %v1457, %v1455
      %v1584 = vpack.c.bf16 %v1458, %v1456
      %v1585 = vpack.c.bf16 %v1461, %v1459
      %v1586 = vpack.c.bf16 %v1462, %v1460
      %v1587 = vpack.c.bf16 %v1465, %v1463
      %v1588 = vpack.c.bf16 %v1466, %v1464
      %v1589 = vpack.c.bf16 %v1469, %v1467
      %v1590 = vpack.c.bf16 %v1470, %v1468
      %v1591 = vpack.c.bf16 %v1473, %v1471
      %v1592 = vpack.c.bf16 %v1474, %v1472
      %v1593 = vpack.c.bf16 %v1477, %v1475
      %v1594 = vpack.c.bf16 %v1478, %v1476
      %v1595 = vpack.c.bf16 %v1481, %v1479
      %v1596 = vpack.c.bf16 %v1482, %v1480
      %v1597 = vpack.c.bf16 %v1485, %v1483
      %v1598 = vpack.c.bf16 %v1486, %v1484
      %v1599 = vpack.c.bf16 %v1489, %v1487
      %v1600 = vpack.c.bf16 %v1490, %v1488
      %v1601 = vpack.c.bf16 %v1493, %v1491
      %v1602 = vpack.c.bf16 %v1494, %v1492
      %v1603 = vpack.c.bf16 %v1497, %v1495
      %v1604 = vpack.c.bf16 %v1498, %v1496
      %v1605 = vpack.c.bf16 %v1501, %v1499
      %v1606 = vpack.c.bf16 %v1502, %v1500
      %v1607 = vpack.c.bf16 %v1505, %v1503
      %v1608 = vpack.c.bf16 %v1506, %v1504
      %v1609 = vpack.c.bf16 %v1509, %v1507
      %v1610 = vpack.c.bf16 %v1510, %v1508
      %v1611 = vpack.c.bf16 %v1513, %v1511
      %v1612 = vpack.c.bf16 %v1514, %v1512
      %v1613 = vpack.c.bf16 %v1517, %v1515
      %v1614 = vpack.c.bf16 %v1518, %v1516
      %v1615 = vpack.c.bf16 %v1521, %v1519
      %v1616 = vpack.c.bf16 %v1522, %v1520
      %v1617 = vpack.c.bf16 %v1525, %v1523
      %v1618 = vpack.c.bf16 %v1526, %v1524
      %v1619 = vpack.c.bf16 %v1529, %v1527
      %v1620 = vpack.c.bf16 %v1530, %v1528
      %v1621 = vpack.c.bf16 %v1533, %v1531
      %v1622 = vpack.c.bf16 %v1534, %v1532
      %v1623 = vpack.c.bf16 %v1537, %v1535
      %v1624 = vpack.c.bf16 %v1538, %v1536
      %v1625 = vpack.c.bf16 %v1541, %v1539
      %v1626 = vpack.c.bf16 %v1542, %v1540
      %v1627 = vpack.c.bf16 %v1545, %v1543
      %v1628 = vpack.c.bf16 %v1546, %v1544
      %v1629 = vpack.c.bf16 %v1549, %v1547
      %v1630 = vpack.c.bf16 %v1550, %v1548
      %v1631 = vpack.c.bf16 %v1553, %v1551
      %v1632 = vpack.c.bf16 %v1554, %v1552
      %v1633 = vpack.c.bf16 %v1557, %v1555
      %v1634 = vpack.c.bf16 %v1558, %v1556
      %v1635 = vpack.c.bf16 %v1561, %v1559
      %v1636 = vpack.c.bf16 %v1562, %v1560
      %v1637 = vpack.c.bf16 %v1565, %v1563
      %v1638 = vpack.c.bf16 %v1566, %v1564
      %v1639 = vpack.c.bf16 %v1569, %v1567
      %v1640 = vpack.c.bf16 %v1570, %v1568
      %v1641 = vpack.c.bf16 %v1573, %v1571
      %v1642 = vpack.c.bf16 %v1574, %v1572
      %v1643 = vpack.c.bf16 %v1577, %v1575
      %v1644 = vpack.c.bf16 %v1578, %v1576
      %v1645 = vpack.c.bf16 %v1581, %v1579
      %v1646 = vpack.c.bf16 %v1582, %v1580
      %v1647 = vld [vmem:[%s3] sm:$0xff]
      %v1648 = vld [vmem:[%s3 + $0x8] sm:$0xff]
      %v1649 = vld [vmem:[%s3 + $0x10] sm:$0xff]
      %v1650 = vld [vmem:[%s3 + $0x18] sm:$0xff]
      %v1651 = vld [vmem:[%s3 + $0x20] sm:$0xff]
      %v1652 = vld [vmem:[%s3 + $0x28] sm:$0xff]
      %v1653 = vld [vmem:[%s3 + $0x30] sm:$0xff]
      %v1654 = vld [vmem:[%s3 + $0x38] sm:$0xff]
      %v1655 = vld [vmem:[%s3 + $0x40] sm:$0xff]
      %v1656 = vld [vmem:[%s3 + $0x48] sm:$0xff]
      %v1657 = vld [vmem:[%s3 + $0x50] sm:$0xff]
      %v1658 = vld [vmem:[%s3 + $0x58] sm:$0xff]
      %v1659 = vld [vmem:[%s3 + $0x60] sm:$0xff]
      %v1660 = vld [vmem:[%s3 + $0x68] sm:$0xff]
      %v1661 = vld [vmem:[%s3 + $0x70] sm:$0xff]
      %v1662 = vld [vmem:[%s3 + $0x78] sm:$0xff]
      %v1663 = vld [vmem:[%s3 + $0x80] sm:$0xff]
      %v1664 = vld [vmem:[%s3 + $0x88] sm:$0xff]
      %v1665 = vld [vmem:[%s3 + $0x90] sm:$0xff]
      %v1666 = vld [vmem:[%s3 + $0x98] sm:$0xff]
      %v1667 = vld [vmem:[%s3 + $0xa0] sm:$0xff]
      %v1668 = vld [vmem:[%s3 + $0xa8] sm:$0xff]
      %v1669 = vld [vmem:[%s3 + $0xb0] sm:$0xff]
      %v1670 = vld [vmem:[%s3 + $0xb8] sm:$0xff]
      %v1671 = vld [vmem:[%s3 + $0xc0] sm:$0xff]
      %v1672 = vld [vmem:[%s3 + $0xc8] sm:$0xff]
      %v1673 = vld [vmem:[%s3 + $0xd0] sm:$0xff]
      %v1674 = vld [vmem:[%s3 + $0xd8] sm:$0xff]
      %v1675 = vld [vmem:[%s3 + $0xe0] sm:$0xff]
      %v1676 = vld [vmem:[%s3 + $0xe8] sm:$0xff]
      %v1677 = vld [vmem:[%s3 + $0xf0] sm:$0xff]
      %v1678 = vld [vmem:[%s3 + $0xf8] sm:$0xff]
      %v1679 = vld [vmem:[%s4] sm:$0x3]
      %v1681 = vperm.slane %v1679, 0
      %v1682 = vperm.slane %v1679, 1
      %v1717 = vunpack.c.l.b16 %v1647
      %v1718 = vunpack.c.h.b16 %v1647
      %v1719 = vunpack.c.l.b16 %v1648
      %v1720 = vunpack.c.h.b16 %v1648
      %v1721 = vunpack.c.l.b16 %v1649
      %v1722 = vunpack.c.h.b16 %v1649
      %v1723 = vunpack.c.l.b16 %v1650
      %v1724 = vunpack.c.h.b16 %v1650
      %v1725 = vunpack.c.l.b16 %v1651
      %v1726 = vunpack.c.h.b16 %v1651
      %v1727 = vunpack.c.l.b16 %v1652
      %v1728 = vunpack.c.h.b16 %v1652
      %v1729 = vunpack.c.l.b16 %v1653
      %v1730 = vunpack.c.h.b16 %v1653
      %v1731 = vunpack.c.l.b16 %v1654
      %v1732 = vunpack.c.h.b16 %v1654
      %v1733 = vunpack.c.l.b16 %v1655
      %v1734 = vunpack.c.h.b16 %v1655
      %v1735 = vunpack.c.l.b16 %v1656
      %v1736 = vunpack.c.h.b16 %v1656
      %v1737 = vunpack.c.l.b16 %v1657
      %v1738 = vunpack.c.h.b16 %v1657
      %v1739 = vunpack.c.l.b16 %v1658
      %v1740 = vunpack.c.h.b16 %v1658
      %v1741 = vunpack.c.l.b16 %v1659
      %v1742 = vunpack.c.h.b16 %v1659
      %v1743 = vunpack.c.l.b16 %v1660
      %v1744 = vunpack.c.h.b16 %v1660
      %v1745 = vunpack.c.l.b16 %v1661
      %v1746 = vunpack.c.h.b16 %v1661
      %v1747 = vunpack.c.l.b16 %v1662
      %v1748 = vunpack.c.h.b16 %v1662
      %v1749 = vunpack.c.l.b16 %v1663
      %v1750 = vunpack.c.h.b16 %v1663
      %v1751 = vunpack.c.l.b16 %v1664
      %v1752 = vunpack.c.h.b16 %v1664
      %v1753 = vunpack.c.l.b16 %v1665
      %v1754 = vunpack.c.h.b16 %v1665
      %v1755 = vunpack.c.l.b16 %v1666
      %v1756 = vunpack.c.h.b16 %v1666
      %v1757 = vunpack.c.l.b16 %v1667
      %v1758 = vunpack.c.h.b16 %v1667
      %v1759 = vunpack.c.l.b16 %v1668
      %v1760 = vunpack.c.h.b16 %v1668
      %v1761 = vunpack.c.l.b16 %v1669
      %v1762 = vunpack.c.h.b16 %v1669
      %v1763 = vunpack.c.l.b16 %v1670
      %v1764 = vunpack.c.h.b16 %v1670
      %v1765 = vunpack.c.l.b16 %v1671
      %v1766 = vunpack.c.h.b16 %v1671
      %v1767 = vunpack.c.l.b16 %v1672
      %v1768 = vunpack.c.h.b16 %v1672
      %v1769 = vunpack.c.l.b16 %v1673
      %v1770 = vunpack.c.h.b16 %v1673
      %v1771 = vunpack.c.l.b16 %v1674
      %v1772 = vunpack.c.h.b16 %v1674
      %v1773 = vunpack.c.l.b16 %v1675
      %v1774 = vunpack.c.h.b16 %v1675
      %v1775 = vunpack.c.l.b16 %v1676
      %v1776 = vunpack.c.h.b16 %v1676
      %v1777 = vunpack.c.l.b16 %v1677
      %v1778 = vunpack.c.h.b16 %v1677
      %v1779 = vunpack.c.l.b16 %v1678
      %v1780 = vunpack.c.h.b16 %v1678
      %v1781 = vpack.c.b16 %v1719, %v1717
      %v1782 = vpack.c.b16 %v1720, %v1718
      %v1783 = vpack.c.b16 %v1723, %v1721
      %v1784 = vpack.c.b16 %v1724, %v1722
      %v1785 = vpack.c.b16 %v1727, %v1725
      %v1786 = vpack.c.b16 %v1728, %v1726
      %v1787 = vpack.c.b16 %v1731, %v1729
      %v1788 = vpack.c.b16 %v1732, %v1730
      %v1789 = vpack.c.b16 %v1735, %v1733
      %v1790 = vpack.c.b16 %v1736, %v1734
      %v1791 = vpack.c.b16 %v1739, %v1737
      %v1792 = vpack.c.b16 %v1740, %v1738
      %v1793 = vpack.c.b16 %v1743, %v1741
      %v1794 = vpack.c.b16 %v1744, %v1742
      %v1795 = vpack.c.b16 %v1747, %v1745
      %v1796 = vpack.c.b16 %v1748, %v1746
      %v1797 = vpack.c.b16 %v1751, %v1749
      %v1798 = vpack.c.b16 %v1752, %v1750
      %v1799 = vpack.c.b16 %v1755, %v1753
      %v1800 = vpack.c.b16 %v1756, %v1754
      %v1801 = vpack.c.b16 %v1759, %v1757
      %v1802 = vpack.c.b16 %v1760, %v1758
      %v1803 = vpack.c.b16 %v1763, %v1761
      %v1804 = vpack.c.b16 %v1764, %v1762
      %v1805 = vpack.c.b16 %v1767, %v1765
      %v1806 = vpack.c.b16 %v1768, %v1766
      %v1807 = vpack.c.b16 %v1771, %v1769
      %v1808 = vpack.c.b16 %v1772, %v1770
      %v1809 = vpack.c.b16 %v1775, %v1773
      %v1810 = vpack.c.b16 %v1776, %v1774
      %v1811 = vpack.c.b16 %v1779, %v1777
      %v1812 = vpack.c.b16 %v1780, %v1778
      %1845 = vmatpush.bf16.msra.mxu0 %v1795
      %1846 = vmatpush.bf16.msra.mxu0 %v1793
      %1847 = vmatpush.bf16.msra.mxu0 %v1791
      %1848 = vmatpush.bf16.msra.mxu0 %v1789
      %1849 = vmatpush.bf16.msra.mxu0 %v1787
      %1850 = vmatpush.bf16.msra.mxu0 %v1785
      %1851 = vmatpush.bf16.msra.mxu0 %v1783
      %1852 = vmatpush.bf16.msra.mxu0 %v1781
      %1853 = vmatmul.bf16.gmra.mxu0 %v1583
      %v1854 = vpop.f32.mrf.mxu0
      %v1855 = vadd.f32 %v1681, %v1854
      %v1856 = vpop.f32.mrf.mxu0
      %v1857 = vadd.f32 %v1681, %v1856
      %1858 = vmatmul.bf16.gmra.mxu0 %v1585
      %v1859 = vpop.f32.mrf.mxu0
      %v1860 = vadd.f32 %v1681, %v1859
      %v1861 = vpop.f32.mrf.mxu0
      %v1862 = vadd.f32 %v1681, %v1861
      %1863 = vmatmul.bf16.gmra.mxu0 %v1587
      %v1864 = vpop.f32.mrf.mxu0
      %v1865 = vadd.f32 %v1681, %v1864
      %v1866 = vpop.f32.mrf.mxu0
      %v1867 = vadd.f32 %v1681, %v1866
      %1868 = vmatmul.bf16.gmra.mxu0 %v1589
      %v1869 = vpop.f32.mrf.mxu0
      %v1870 = vadd.f32 %v1681, %v1869
      %v1871 = vpop.f32.mrf.mxu0
      %v1872 = vadd.f32 %v1681, %v1871
      %1873 = vmatmul.bf16.gmra.mxu0 %v1591
      %v1874 = vpop.f32.mrf.mxu0
      %v1875 = vadd.f32 %v1681, %v1874
      %v1876 = vpop.f32.mrf.mxu0
      %v1877 = vadd.f32 %v1681, %v1876
      %1878 = vmatmul.bf16.gmra.mxu0 %v1593
      %v1879 = vpop.f32.mrf.mxu0
      %v1880 = vadd.f32 %v1681, %v1879
      %v1881 = vpop.f32.mrf.mxu0
      %v1882 = vadd.f32 %v1681, %v1881
      %1883 = vmatmul.bf16.gmra.mxu0 %v1595
      %v1884 = vpop.f32.mrf.mxu0
      %v1885 = vadd.f32 %v1681, %v1884
      %v1886 = vpop.f32.mrf.mxu0
      %v1887 = vadd.f32 %v1681, %v1886
      %1888 = vmatmul.bf16.gmra.mxu0 %v1597
      %v1889 = vpop.f32.mrf.mxu0
      %v1890 = vadd.f32 %v1681, %v1889
      %v1891 = vpop.f32.mrf.mxu0
      %v1892 = vadd.f32 %v1681, %v1891
      %1893 = vmatmul.bf16.gmra.mxu0 %v1599
      %v1894 = vpop.f32.mrf.mxu0
      %v1895 = vadd.f32 %v1681, %v1894
      %v1896 = vpop.f32.mrf.mxu0
      %v1897 = vadd.f32 %v1681, %v1896
      %1898 = vmatmul.bf16.gmra.mxu0 %v1601
      %v1899 = vpop.f32.mrf.mxu0
      %v1900 = vadd.f32 %v1681, %v1899
      %v1901 = vpop.f32.mrf.mxu0
      %v1902 = vadd.f32 %v1681, %v1901
      %1903 = vmatmul.bf16.gmra.mxu0 %v1603
      %v1904 = vpop.f32.mrf.mxu0
      %v1905 = vadd.f32 %v1681, %v1904
      %v1906 = vpop.f32.mrf.mxu0
      %v1907 = vadd.f32 %v1681, %v1906
      %1908 = vmatmul.bf16.gmra.mxu0 %v1605
      %v1909 = vpop.f32.mrf.mxu0
      %v1910 = vadd.f32 %v1681, %v1909
      %v1911 = vpop.f32.mrf.mxu0
      %v1912 = vadd.f32 %v1681, %v1911
      %1913 = vmatmul.bf16.gmra.mxu0 %v1607
      %v1914 = vpop.f32.mrf.mxu0
      %v1915 = vadd.f32 %v1681, %v1914
      %v1916 = vpop.f32.mrf.mxu0
      %v1917 = vadd.f32 %v1681, %v1916
      %1918 = vmatmul.bf16.gmra.mxu0 %v1609
      %v1919 = vpop.f32.mrf.mxu0
      %v1920 = vadd.f32 %v1681, %v1919
      %v1921 = vpop.f32.mrf.mxu0
      %v1922 = vadd.f32 %v1681, %v1921
      %1923 = vmatmul.bf16.gmra.mxu0 %v1611
      %v1924 = vpop.f32.mrf.mxu0
      %v1925 = vadd.f32 %v1681, %v1924
      %v1926 = vpop.f32.mrf.mxu0
      %v1927 = vadd.f32 %v1681, %v1926
      %1928 = vmatmul.bf16.gmra.mxu0 %v1613
      %v1929 = vpop.f32.mrf.mxu0
      %v1930 = vadd.f32 %v1681, %v1929
      %v1931 = vpop.f32.mrf.mxu0
      %v1932 = vadd.f32 %v1681, %v1931
      %1933 = vmatmul.bf16.gmra.mxu0 %v1615
      %v1934 = vpop.f32.mrf.mxu0
      %v1935 = vadd.f32 %v1681, %v1934
      %v1936 = vpop.f32.mrf.mxu0
      %v1937 = vadd.f32 %v1681, %v1936
      %1938 = vmatmul.bf16.gmra.mxu0 %v1617
      %v1939 = vpop.f32.mrf.mxu0
      %v1940 = vadd.f32 %v1681, %v1939
      %v1941 = vpop.f32.mrf.mxu0
      %v1942 = vadd.f32 %v1681, %v1941
      %1943 = vmatmul.bf16.gmra.mxu0 %v1619
      %v1944 = vpop.f32.mrf.mxu0
      %v1945 = vadd.f32 %v1681, %v1944
      %v1946 = vpop.f32.mrf.mxu0
      %v1947 = vadd.f32 %v1681, %v1946
      %1948 = vmatmul.bf16.gmra.mxu0 %v1621
      %v1949 = vpop.f32.mrf.mxu0
      %v1950 = vadd.f32 %v1681, %v1949
      %v1951 = vpop.f32.mrf.mxu0
      %v1952 = vadd.f32 %v1681, %v1951
      %1953 = vmatmul.bf16.gmra.mxu0 %v1623
      %v1954 = vpop.f32.mrf.mxu0
      %v1955 = vadd.f32 %v1681, %v1954
      %v1956 = vpop.f32.mrf.mxu0
      %v1957 = vadd.f32 %v1681, %v1956
      %1958 = vmatmul.bf16.gmra.mxu0 %v1625
      %v1959 = vpop.f32.mrf.mxu0
      %v1960 = vadd.f32 %v1681, %v1959
      %v1961 = vpop.f32.mrf.mxu0
      %v1962 = vadd.f32 %v1681, %v1961
      %1963 = vmatmul.bf16.gmra.mxu0 %v1627
      %v1964 = vpop.f32.mrf.mxu0
      %v1965 = vadd.f32 %v1681, %v1964
      %v1966 = vpop.f32.mrf.mxu0
      %v1967 = vadd.f32 %v1681, %v1966
      %1968 = vmatmul.bf16.gmra.mxu0 %v1629
      %v1969 = vpop.f32.mrf.mxu0
      %v1970 = vadd.f32 %v1681, %v1969
      %v1971 = vpop.f32.mrf.mxu0
      %v1972 = vadd.f32 %v1681, %v1971
      %1973 = vmatmul.bf16.gmra.mxu0 %v1631
      %v1974 = vpop.f32.mrf.mxu0
      %v1975 = vadd.f32 %v1681, %v1974
      %v1976 = vpop.f32.mrf.mxu0
      %v1977 = vadd.f32 %v1681, %v1976
      %1978 = vmatmul.bf16.gmra.mxu0 %v1633
      %v1979 = vpop.f32.mrf.mxu0
      %v1980 = vadd.f32 %v1681, %v1979
      %v1981 = vpop.f32.mrf.mxu0
      %v1982 = vadd.f32 %v1681, %v1981
      %1983 = vmatmul.bf16.gmra.mxu0 %v1635
      %v1984 = vpop.f32.mrf.mxu0
      %v1985 = vadd.f32 %v1681, %v1984
      %v1986 = vpop.f32.mrf.mxu0
      %v1987 = vadd.f32 %v1681, %v1986
      %1988 = vmatmul.bf16.gmra.mxu0 %v1637
      %v1989 = vpop.f32.mrf.mxu0
      %v1990 = vadd.f32 %v1681, %v1989
      %v1991 = vpop.f32.mrf.mxu0
      %v1992 = vadd.f32 %v1681, %v1991
      %1993 = vmatmul.bf16.gmra.mxu0 %v1639
      %v1994 = vpop.f32.mrf.mxu0
      %v1995 = vadd.f32 %v1681, %v1994
      %v1996 = vpop.f32.mrf.mxu0
      %v1997 = vadd.f32 %v1681, %v1996
      %1998 = vmatmul.bf16.gmra.mxu0 %v1641
      %v1999 = vpop.f32.mrf.mxu0
      %v2000 = vadd.f32 %v1681, %v1999
      %v2001 = vpop.f32.mrf.mxu0
      %v2002 = vadd.f32 %v1681, %v2001
      %2003 = vmatmul.bf16.gmra.mxu0 %v1643
      %v2004 = vpop.f32.mrf.mxu0
      %v2005 = vadd.f32 %v1681, %v2004
      %v2006 = vpop.f32.mrf.mxu0
      %v2007 = vadd.f32 %v1681, %v2006
      %2008 = vmatmul.bf16.gmra.mxu0 %v1645
      %v2009 = vpop.f32.mrf.mxu0
      %v2010 = vadd.f32 %v1681, %v2009
      %v2011 = vpop.f32.mrf.mxu0
      %v2012 = vadd.f32 %v1681, %v2011
      %2013 = vdwg.mxu0
      %2014 = vmatpush.bf16.msra.mxu0 %v1811
      %2015 = vmatpush.bf16.msra.mxu0 %v1809
      %2016 = vmatpush.bf16.msra.mxu0 %v1807
      %2017 = vmatpush.bf16.msra.mxu0 %v1805
      %2018 = vmatpush.bf16.msra.mxu0 %v1803
      %2019 = vmatpush.bf16.msra.mxu0 %v1801
      %2020 = vmatpush.bf16.msra.mxu0 %v1799
      %2021 = vmatpush.bf16.msra.mxu0 %v1797
      %2022 = vmatmul.bf16.gmra.mxu0 %v1584
      %v2023 = vpop.f32.mrf.mxu0
      %v2024 = vadd.f32 %v1855, %v2023
      %v2025 = vpop.f32.mrf.mxu0
      %v2026 = vadd.f32 %v1857, %v2025
      %2027 = vmatmul.bf16.gmra.mxu0 %v1586
      %v2028 = vpop.f32.mrf.mxu0
      %v2029 = vadd.f32 %v1860, %v2028
      %v2030 = vpop.f32.mrf.mxu0
      %v2031 = vadd.f32 %v1862, %v2030
      %2032 = vmatmul.bf16.gmra.mxu0 %v1588
      %v2033 = vpop.f32.mrf.mxu0
      %v2034 = vadd.f32 %v1865, %v2033
      %v2035 = vpop.f32.mrf.mxu0
      %v2036 = vadd.f32 %v1867, %v2035
      %2037 = vmatmul.bf16.gmra.mxu0 %v1590
      %v2038 = vpop.f32.mrf.mxu0
      %v2039 = vadd.f32 %v1870, %v2038
      %v2040 = vpop.f32.mrf.mxu0
      %v2041 = vadd.f32 %v1872, %v2040
      %2042 = vmatmul.bf16.gmra.mxu0 %v1592
      %v2043 = vpop.f32.mrf.mxu0
      %v2044 = vadd.f32 %v1875, %v2043
      %v2045 = vpop.f32.mrf.mxu0
      %v2046 = vadd.f32 %v1877, %v2045
      %2047 = vmatmul.bf16.gmra.mxu0 %v1594
      %v2048 = vpop.f32.mrf.mxu0
      %v2049 = vadd.f32 %v1880, %v2048
      %v2050 = vpop.f32.mrf.mxu0
      %v2051 = vadd.f32 %v1882, %v2050
      %2052 = vmatmul.bf16.gmra.mxu0 %v1596
      %v2053 = vpop.f32.mrf.mxu0
      %v2054 = vadd.f32 %v1885, %v2053
      %v2055 = vpop.f32.mrf.mxu0
      %v2056 = vadd.f32 %v1887, %v2055
      %2057 = vmatmul.bf16.gmra.mxu0 %v1598
      %v2058 = vpop.f32.mrf.mxu0
      %v2059 = vadd.f32 %v1890, %v2058
      %v2060 = vpop.f32.mrf.mxu0
      %v2061 = vadd.f32 %v1892, %v2060
      %2062 = vmatmul.bf16.gmra.mxu0 %v1600
      %v2063 = vpop.f32.mrf.mxu0
      %v2064 = vadd.f32 %v1895, %v2063
      %v2065 = vpop.f32.mrf.mxu0
      %v2066 = vadd.f32 %v1897, %v2065
      %2067 = vmatmul.bf16.gmra.mxu0 %v1602
      %v2068 = vpop.f32.mrf.mxu0
      %v2069 = vadd.f32 %v1900, %v2068
      %v2070 = vpop.f32.mrf.mxu0
      %v2071 = vadd.f32 %v1902, %v2070
      %2072 = vmatmul.bf16.gmra.mxu0 %v1604
      %v2073 = vpop.f32.mrf.mxu0
      %v2074 = vadd.f32 %v1905, %v2073
      %v2075 = vpop.f32.mrf.mxu0
      %v2076 = vadd.f32 %v1907, %v2075
      %2077 = vmatmul.bf16.gmra.mxu0 %v1606
      %v2078 = vpop.f32.mrf.mxu0
      %v2079 = vadd.f32 %v1910, %v2078
      %v2080 = vpop.f32.mrf.mxu0
      %v2081 = vadd.f32 %v1912, %v2080
      %2082 = vmatmul.bf16.gmra.mxu0 %v1608
      %v2083 = vpop.f32.mrf.mxu0
      %v2084 = vadd.f32 %v1915, %v2083
      %v2085 = vpop.f32.mrf.mxu0
      %v2086 = vadd.f32 %v1917, %v2085
      %2087 = vmatmul.bf16.gmra.mxu0 %v1610
      %v2088 = vpop.f32.mrf.mxu0
      %v2089 = vadd.f32 %v1920, %v2088
      %v2090 = vpop.f32.mrf.mxu0
      %v2091 = vadd.f32 %v1922, %v2090
      %2092 = vmatmul.bf16.gmra.mxu0 %v1612
      %v2093 = vpop.f32.mrf.mxu0
      %v2094 = vadd.f32 %v1925, %v2093
      %v2095 = vpop.f32.mrf.mxu0
      %v2096 = vadd.f32 %v1927, %v2095
      %2097 = vmatmul.bf16.gmra.mxu0 %v1614
      %v2098 = vpop.f32.mrf.mxu0
      %v2099 = vadd.f32 %v1930, %v2098
      %v2100 = vpop.f32.mrf.mxu0
      %v2101 = vadd.f32 %v1932, %v2100
      %2102 = vmatmul.bf16.gmra.mxu0 %v1616
      %v2103 = vpop.f32.mrf.mxu0
      %v2104 = vadd.f32 %v1935, %v2103
      %v2105 = vpop.f32.mrf.mxu0
      %v2106 = vadd.f32 %v1937, %v2105
      %2107 = vmatmul.bf16.gmra.mxu0 %v1618
      %v2108 = vpop.f32.mrf.mxu0
      %v2109 = vadd.f32 %v1940, %v2108
      %v2110 = vpop.f32.mrf.mxu0
      %v2111 = vadd.f32 %v1942, %v2110
      %2112 = vmatmul.bf16.gmra.mxu0 %v1620
      %v2113 = vpop.f32.mrf.mxu0
      %v2114 = vadd.f32 %v1945, %v2113
      %v2115 = vpop.f32.mrf.mxu0
      %v2116 = vadd.f32 %v1947, %v2115
      %2117 = vmatmul.bf16.gmra.mxu0 %v1622
      %v2118 = vpop.f32.mrf.mxu0
      %v2119 = vadd.f32 %v1950, %v2118
      %v2120 = vpop.f32.mrf.mxu0
      %v2121 = vadd.f32 %v1952, %v2120
      %2122 = vmatmul.bf16.gmra.mxu0 %v1624
      %v2123 = vpop.f32.mrf.mxu0
      %v2124 = vadd.f32 %v1955, %v2123
      %v2125 = vpop.f32.mrf.mxu0
      %v2126 = vadd.f32 %v1957, %v2125
      %2127 = vmatmul.bf16.gmra.mxu0 %v1626
      %v2128 = vpop.f32.mrf.mxu0
      %v2129 = vadd.f32 %v1960, %v2128
      %v2130 = vpop.f32.mrf.mxu0
      %v2131 = vadd.f32 %v1962, %v2130
      %2132 = vmatmul.bf16.gmra.mxu0 %v1628
      %v2133 = vpop.f32.mrf.mxu0
      %v2134 = vadd.f32 %v1965, %v2133
      %v2135 = vpop.f32.mrf.mxu0
      %v2136 = vadd.f32 %v1967, %v2135
      %2137 = vmatmul.bf16.gmra.mxu0 %v1630
      %v2138 = vpop.f32.mrf.mxu0
      %v2139 = vadd.f32 %v1970, %v2138
      %v2140 = vpop.f32.mrf.mxu0
      %v2141 = vadd.f32 %v1972, %v2140
      %2142 = vmatmul.bf16.gmra.mxu0 %v1632
      %v2143 = vpop.f32.mrf.mxu0
      %v2144 = vadd.f32 %v1975, %v2143
      %v2145 = vpop.f32.mrf.mxu0
      %v2146 = vadd.f32 %v1977, %v2145
      %2147 = vmatmul.bf16.gmra.mxu0 %v1634
      %v2148 = vpop.f32.mrf.mxu0
      %v2149 = vadd.f32 %v1980, %v2148
      %v2150 = vpop.f32.mrf.mxu0
      %v2151 = vadd.f32 %v1982, %v2150
      %2152 = vmatmul.bf16.gmra.mxu0 %v1636
      %v2153 = vpop.f32.mrf.mxu0
      %v2154 = vadd.f32 %v1985, %v2153
      %v2155 = vpop.f32.mrf.mxu0
      %v2156 = vadd.f32 %v1987, %v2155
      %2157 = vmatmul.bf16.gmra.mxu0 %v1638
      %v2158 = vpop.f32.mrf.mxu0
      %v2159 = vadd.f32 %v1990, %v2158
      %v2160 = vpop.f32.mrf.mxu0
      %v2161 = vadd.f32 %v1992, %v2160
      %2162 = vmatmul.bf16.gmra.mxu0 %v1640
      %v2163 = vpop.f32.mrf.mxu0
      %v2164 = vadd.f32 %v1995, %v2163
      %v2165 = vpop.f32.mrf.mxu0
      %v2166 = vadd.f32 %v1997, %v2165
      %2167 = vmatmul.bf16.gmra.mxu0 %v1642
      %v2168 = vpop.f32.mrf.mxu0
      %v2169 = vadd.f32 %v2000, %v2168
      %v2170 = vpop.f32.mrf.mxu0
      %v2171 = vadd.f32 %v2002, %v2170
      %2172 = vmatmul.bf16.gmra.mxu0 %v1644
      %v2173 = vpop.f32.mrf.mxu0
      %v2174 = vadd.f32 %v2005, %v2173
      %v2175 = vpop.f32.mrf.mxu0
      %v2176 = vadd.f32 %v2007, %v2175
      %2177 = vmatmul.bf16.gmra.mxu0 %v1646
      %v2178 = vpop.f32.mrf.mxu0
      %v2179 = vadd.f32 %v2010, %v2178
      %v2180 = vpop.f32.mrf.mxu0
      %v2181 = vadd.f32 %v2012, %v2180
      %2182 = vdwg.mxu0
      %2183 = vmatpush.bf16.msra.mxu0 %v1796
      %2184 = vmatpush.bf16.msra.mxu0 %v1794
      %2185 = vmatpush.bf16.msra.mxu0 %v1792
      %2186 = vmatpush.bf16.msra.mxu0 %v1790
      %2187 = vmatpush.bf16.msra.mxu0 %v1788
      %2188 = vmatpush.bf16.msra.mxu0 %v1786
      %2189 = vmatpush.bf16.msra.mxu0 %v1784
      %2190 = vmatpush.bf16.msra.mxu0 %v1782
      %2191 = vmatmul.bf16.gmra.mxu0 %v1583
      %v2192 = vpop.f32.mrf.mxu0
      %v2193 = vadd.f32 %v1682, %v2192
      %v2194 = vpop.f32.mrf.mxu0
      %v2195 = vadd.f32 %v1682, %v2194
      %2196 = vmatmul.bf16.gmra.mxu0 %v1585
      %v2197 = vpop.f32.mrf.mxu0
      %v2198 = vadd.f32 %v1682, %v2197
      %v2199 = vpop.f32.mrf.mxu0
      %v2200 = vadd.f32 %v1682, %v2199
      %2201 = vmatmul.bf16.gmra.mxu0 %v1587
      %v2202 = vpop.f32.mrf.mxu0
      %v2203 = vadd.f32 %v1682, %v2202
      %v2204 = vpop.f32.mrf.mxu0
      %v2205 = vadd.f32 %v1682, %v2204
      %2206 = vmatmul.bf16.gmra.mxu0 %v1589
      %v2207 = vpop.f32.mrf.mxu0
      %v2208 = vadd.f32 %v1682, %v2207
      %v2209 = vpop.f32.mrf.mxu0
      %v2210 = vadd.f32 %v1682, %v2209
      %2211 = vmatmul.bf16.gmra.mxu0 %v1591
      %v2212 = vpop.f32.mrf.mxu0
      %v2213 = vadd.f32 %v1682, %v2212
      %v2214 = vpop.f32.mrf.mxu0
      %v2215 = vadd.f32 %v1682, %v2214
      %2216 = vmatmul.bf16.gmra.mxu0 %v1593
      %v2217 = vpop.f32.mrf.mxu0
      %v2218 = vadd.f32 %v1682, %v2217
      %v2219 = vpop.f32.mrf.mxu0
      %v2220 = vadd.f32 %v1682, %v2219
      %2221 = vmatmul.bf16.gmra.mxu0 %v1595
      %v2222 = vpop.f32.mrf.mxu0
      %v2223 = vadd.f32 %v1682, %v2222
      %v2224 = vpop.f32.mrf.mxu0
      %v2225 = vadd.f32 %v1682, %v2224
      %2226 = vmatmul.bf16.gmra.mxu0 %v1597
      %v2227 = vpop.f32.mrf.mxu0
      %v2228 = vadd.f32 %v1682, %v2227
      %v2229 = vpop.f32.mrf.mxu0
      %v2230 = vadd.f32 %v1682, %v2229
      %2231 = vmatmul.bf16.gmra.mxu0 %v1599
      %v2232 = vpop.f32.mrf.mxu0
      %v2233 = vadd.f32 %v1682, %v2232
      %v2234 = vpop.f32.mrf.mxu0
      %v2235 = vadd.f32 %v1682, %v2234
      %2236 = vmatmul.bf16.gmra.mxu0 %v1601
      %v2237 = vpop.f32.mrf.mxu0
      %v2238 = vadd.f32 %v1682, %v2237
      %v2239 = vpop.f32.mrf.mxu0
      %v2240 = vadd.f32 %v1682, %v2239
      %2241 = vmatmul.bf16.gmra.mxu0 %v1603
      %v2242 = vpop.f32.mrf.mxu0
      %v2243 = vadd.f32 %v1682, %v2242
      %v2244 = vpop.f32.mrf.mxu0
      %v2245 = vadd.f32 %v1682, %v2244
      %2246 = vmatmul.bf16.gmra.mxu0 %v1605
      %v2247 = vpop.f32.mrf.mxu0
      %v2248 = vadd.f32 %v1682, %v2247
      %v2249 = vpop.f32.mrf.mxu0
      %v2250 = vadd.f32 %v1682, %v2249
      %2251 = vmatmul.bf16.gmra.mxu0 %v1607
      %v2252 = vpop.f32.mrf.mxu0
      %v2253 = vadd.f32 %v1682, %v2252
      %v2254 = vpop.f32.mrf.mxu0
      %v2255 = vadd.f32 %v1682, %v2254
      %2256 = vmatmul.bf16.gmra.mxu0 %v1609
      %v2257 = vpop.f32.mrf.mxu0
      %v2258 = vadd.f32 %v1682, %v2257
      %v2259 = vpop.f32.mrf.mxu0
      %v2260 = vadd.f32 %v1682, %v2259
      %2261 = vmatmul.bf16.gmra.mxu0 %v1611
      %v2262 = vpop.f32.mrf.mxu0
      %v2263 = vadd.f32 %v1682, %v2262
      %v2264 = vpop.f32.mrf.mxu0
      %v2265 = vadd.f32 %v1682, %v2264
      %2266 = vmatmul.bf16.gmra.mxu0 %v1613
      %v2267 = vpop.f32.mrf.mxu0
      %v2268 = vadd.f32 %v1682, %v2267
      %v2269 = vpop.f32.mrf.mxu0
      %v2270 = vadd.f32 %v1682, %v2269
      %2271 = vmatmul.bf16.gmra.mxu0 %v1615
      %v2272 = vpop.f32.mrf.mxu0
      %v2273 = vadd.f32 %v1682, %v2272
      %v2274 = vpop.f32.mrf.mxu0
      %v2275 = vadd.f32 %v1682, %v2274
      %2276 = vmatmul.bf16.gmra.mxu0 %v1617
      %v2277 = vpop.f32.mrf.mxu0
      %v2278 = vadd.f32 %v1682, %v2277
      %v2279 = vpop.f32.mrf.mxu0
      %v2280 = vadd.f32 %v1682, %v2279
      %2281 = vmatmul.bf16.gmra.mxu0 %v1619
      %v2282 = vpop.f32.mrf.mxu0
      %v2283 = vadd.f32 %v1682, %v2282
      %v2284 = vpop.f32.mrf.mxu0
      %v2285 = vadd.f32 %v1682, %v2284
      %2286 = vmatmul.bf16.gmra.mxu0 %v1621
      %v2287 = vpop.f32.mrf.mxu0
      %v2288 = vadd.f32 %v1682, %v2287
      %v2289 = vpop.f32.mrf.mxu0
      %v2290 = vadd.f32 %v1682, %v2289
      %2291 = vmatmul.bf16.gmra.mxu0 %v1623
      %v2292 = vpop.f32.mrf.mxu0
      %v2293 = vadd.f32 %v1682, %v2292
      %v2294 = vpop.f32.mrf.mxu0
      %v2295 = vadd.f32 %v1682, %v2294
      %2296 = vmatmul.bf16.gmra.mxu0 %v1625
      %v2297 = vpop.f32.mrf.mxu0
      %v2298 = vadd.f32 %v1682, %v2297
      %v2299 = vpop.f32.mrf.mxu0
      %v2300 = vadd.f32 %v1682, %v2299
      %2301 = vmatmul.bf16.gmra.mxu0 %v1627
      %v2302 = vpop.f32.mrf.mxu0
      %v2303 = vadd.f32 %v1682, %v2302
      %v2304 = vpop.f32.mrf.mxu0
      %v2305 = vadd.f32 %v1682, %v2304
      %2306 = vmatmul.bf16.gmra.mxu0 %v1629
      %v2307 = vpop.f32.mrf.mxu0
      %v2308 = vadd.f32 %v1682, %v2307
      %v2309 = vpop.f32.mrf.mxu0
      %v2310 = vadd.f32 %v1682, %v2309
      %2311 = vmatmul.bf16.gmra.mxu0 %v1631
      %v2312 = vpop.f32.mrf.mxu0
      %v2313 = vadd.f32 %v1682, %v2312
      %v2314 = vpop.f32.mrf.mxu0
      %v2315 = vadd.f32 %v1682, %v2314
      %2316 = vmatmul.bf16.gmra.mxu0 %v1633
      %v2317 = vpop.f32.mrf.mxu0
      %v2318 = vadd.f32 %v1682, %v2317
      %v2319 = vpop.f32.mrf.mxu0
      %v2320 = vadd.f32 %v1682, %v2319
      %2321 = vmatmul.bf16.gmra.mxu0 %v1635
      %v2322 = vpop.f32.mrf.mxu0
      %v2323 = vadd.f32 %v1682, %v2322
      %v2324 = vpop.f32.mrf.mxu0
      %v2325 = vadd.f32 %v1682, %v2324
      %2326 = vmatmul.bf16.gmra.mxu0 %v1637
      %v2327 = vpop.f32.mrf.mxu0
      %v2328 = vadd.f32 %v1682, %v2327
      %v2329 = vpop.f32.mrf.mxu0
      %v2330 = vadd.f32 %v1682, %v2329
      %2331 = vmatmul.bf16.gmra.mxu0 %v1639
      %v2332 = vpop.f32.mrf.mxu0
      %v2333 = vadd.f32 %v1682, %v2332
      %v2334 = vpop.f32.mrf.mxu0
      %v2335 = vadd.f32 %v1682, %v2334
      %2336 = vmatmul.bf16.gmra.mxu0 %v1641
      %v2337 = vpop.f32.mrf.mxu0
      %v2338 = vadd.f32 %v1682, %v2337
      %v2339 = vpop.f32.mrf.mxu0
      %v2340 = vadd.f32 %v1682, %v2339
      %2341 = vmatmul.bf16.gmra.mxu0 %v1643
      %v2342 = vpop.f32.mrf.mxu0
      %v2343 = vadd.f32 %v1682, %v2342
      %v2344 = vpop.f32.mrf.mxu0
      %v2345 = vadd.f32 %v1682, %v2344
      %2346 = vmatmul.bf16.gmra.mxu0 %v1645
      %v2347 = vpop.f32.mrf.mxu0
      %v2348 = vadd.f32 %v1682, %v2347
      %v2349 = vpop.f32.mrf.mxu0
      %v2350 = vadd.f32 %v1682, %v2349
      %2351 = vdwg.mxu0
      %2352 = vmatpush.bf16.msra.mxu0 %v1812
      %2353 = vmatpush.bf16.msra.mxu0 %v1810
      %2354 = vmatpush.bf16.msra.mxu0 %v1808
      %2355 = vmatpush.bf16.msra.mxu0 %v1806
      %2356 = vmatpush.bf16.msra.mxu0 %v1804
      %2357 = vmatpush.bf16.msra.mxu0 %v1802
      %2358 = vmatpush.bf16.msra.mxu0 %v1800
      %2359 = vmatpush.bf16.msra.mxu0 %v1798
      %2360 = vmatmul.bf16.gmra.mxu0 %v1584
      %v2361 = vpop.f32.mrf.mxu0
      %v2362 = vadd.f32 %v2193, %v2361
      %v2363 = vpop.f32.mrf.mxu0
      %v2364 = vadd.f32 %v2195, %v2363
      %2365 = vmatmul.bf16.gmra.mxu0 %v1586
      %v2366 = vpop.f32.mrf.mxu0
      %v2367 = vadd.f32 %v2198, %v2366
      %v2368 = vpop.f32.mrf.mxu0
      %v2369 = vadd.f32 %v2200, %v2368
      %2370 = vmatmul.bf16.gmra.mxu0 %v1588
      %v2371 = vpop.f32.mrf.mxu0
      %v2372 = vadd.f32 %v2203, %v2371
      %v2373 = vpop.f32.mrf.mxu0
      %v2374 = vadd.f32 %v2205, %v2373
      %2375 = vmatmul.bf16.gmra.mxu0 %v1590
      %v2376 = vpop.f32.mrf.mxu0
      %v2377 = vadd.f32 %v2208, %v2376
      %v2378 = vpop.f32.mrf.mxu0
      %v2379 = vadd.f32 %v2210, %v2378
      %2380 = vmatmul.bf16.gmra.mxu0 %v1592
      %v2381 = vpop.f32.mrf.mxu0
      %v2382 = vadd.f32 %v2213, %v2381
      %v2383 = vpop.f32.mrf.mxu0
      %v2384 = vadd.f32 %v2215, %v2383
      %2385 = vmatmul.bf16.gmra.mxu0 %v1594
      %v2386 = vpop.f32.mrf.mxu0
      %v2387 = vadd.f32 %v2218, %v2386
      %v2388 = vpop.f32.mrf.mxu0
      %v2389 = vadd.f32 %v2220, %v2388
      %2390 = vmatmul.bf16.gmra.mxu0 %v1596
      %v2391 = vpop.f32.mrf.mxu0
      %v2392 = vadd.f32 %v2223, %v2391
      %v2393 = vpop.f32.mrf.mxu0
      %v2394 = vadd.f32 %v2225, %v2393
      %2395 = vmatmul.bf16.gmra.mxu0 %v1598
      %v2396 = vpop.f32.mrf.mxu0
      %v2397 = vadd.f32 %v2228, %v2396
      %v2398 = vpop.f32.mrf.mxu0
      %v2399 = vadd.f32 %v2230, %v2398
      %2400 = vmatmul.bf16.gmra.mxu0 %v1600
      %v2401 = vpop.f32.mrf.mxu0
      %v2402 = vadd.f32 %v2233, %v2401
      %v2403 = vpop.f32.mrf.mxu0
      %v2404 = vadd.f32 %v2235, %v2403
      %2405 = vmatmul.bf16.gmra.mxu0 %v1602
      %v2406 = vpop.f32.mrf.mxu0
      %v2407 = vadd.f32 %v2238, %v2406
      %v2408 = vpop.f32.mrf.mxu0
      %v2409 = vadd.f32 %v2240, %v2408
      %2410 = vmatmul.bf16.gmra.mxu0 %v1604
      %v2411 = vpop.f32.mrf.mxu0
      %v2412 = vadd.f32 %v2243, %v2411
      %v2413 = vpop.f32.mrf.mxu0
      %v2414 = vadd.f32 %v2245, %v2413
      %2415 = vmatmul.bf16.gmra.mxu0 %v1606
      %v2416 = vpop.f32.mrf.mxu0
      %v2417 = vadd.f32 %v2248, %v2416
      %v2418 = vpop.f32.mrf.mxu0
      %v2419 = vadd.f32 %v2250, %v2418
      %2420 = vmatmul.bf16.gmra.mxu0 %v1608
      %v2421 = vpop.f32.mrf.mxu0
      %v2422 = vadd.f32 %v2253, %v2421
      %v2423 = vpop.f32.mrf.mxu0
      %v2424 = vadd.f32 %v2255, %v2423
      %2425 = vmatmul.bf16.gmra.mxu0 %v1610
      %v2426 = vpop.f32.mrf.mxu0
      %v2427 = vadd.f32 %v2258, %v2426
      %v2428 = vpop.f32.mrf.mxu0
      %v2429 = vadd.f32 %v2260, %v2428
      %2430 = vmatmul.bf16.gmra.mxu0 %v1612
      %v2431 = vpop.f32.mrf.mxu0
      %v2432 = vadd.f32 %v2263, %v2431
      %v2433 = vpop.f32.mrf.mxu0
      %v2434 = vadd.f32 %v2265, %v2433
      %2435 = vmatmul.bf16.gmra.mxu0 %v1614
      %v2436 = vpop.f32.mrf.mxu0
      %v2437 = vadd.f32 %v2268, %v2436
      %v2438 = vpop.f32.mrf.mxu0
      %v2439 = vadd.f32 %v2270, %v2438
      %2440 = vmatmul.bf16.gmra.mxu0 %v1616
      %v2441 = vpop.f32.mrf.mxu0
      %v2442 = vadd.f32 %v2273, %v2441
      %v2443 = vpop.f32.mrf.mxu0
      %v2444 = vadd.f32 %v2275, %v2443
      %2445 = vmatmul.bf16.gmra.mxu0 %v1618
      %v2446 = vpop.f32.mrf.mxu0
      %v2447 = vadd.f32 %v2278, %v2446
      %v2448 = vpop.f32.mrf.mxu0
      %v2449 = vadd.f32 %v2280, %v2448
      %2450 = vmatmul.bf16.gmra.mxu0 %v1620
      %v2451 = vpop.f32.mrf.mxu0
      %v2452 = vadd.f32 %v2283, %v2451
      %v2453 = vpop.f32.mrf.mxu0
      %v2454 = vadd.f32 %v2285, %v2453
      %2455 = vmatmul.bf16.gmra.mxu0 %v1622
      %v2456 = vpop.f32.mrf.mxu0
      %v2457 = vadd.f32 %v2288, %v2456
      %v2458 = vpop.f32.mrf.mxu0
      %v2459 = vadd.f32 %v2290, %v2458
      %2460 = vmatmul.bf16.gmra.mxu0 %v1624
      %v2461 = vpop.f32.mrf.mxu0
      %v2462 = vadd.f32 %v2293, %v2461
      %v2463 = vpop.f32.mrf.mxu0
      %v2464 = vadd.f32 %v2295, %v2463
      %2465 = vmatmul.bf16.gmra.mxu0 %v1626
      %v2466 = vpop.f32.mrf.mxu0
      %v2467 = vadd.f32 %v2298, %v2466
      %v2468 = vpop.f32.mrf.mxu0
      %v2469 = vadd.f32 %v2300, %v2468
      %2470 = vmatmul.bf16.gmra.mxu0 %v1628
      %v2471 = vpop.f32.mrf.mxu0
      %v2472 = vadd.f32 %v2303, %v2471
      %v2473 = vpop.f32.mrf.mxu0
      %v2474 = vadd.f32 %v2305, %v2473
      %2475 = vmatmul.bf16.gmra.mxu0 %v1630
      %v2476 = vpop.f32.mrf.mxu0
      %v2477 = vadd.f32 %v2308, %v2476
      %v2478 = vpop.f32.mrf.mxu0
      %v2479 = vadd.f32 %v2310, %v2478
      %2480 = vmatmul.bf16.gmra.mxu0 %v1632
      %v2481 = vpop.f32.mrf.mxu0
      %v2482 = vadd.f32 %v2313, %v2481
      %v2483 = vpop.f32.mrf.mxu0
      %v2484 = vadd.f32 %v2315, %v2483
      %2485 = vmatmul.bf16.gmra.mxu0 %v1634
      %v2486 = vpop.f32.mrf.mxu0
      %v2487 = vadd.f32 %v2318, %v2486
      %v2488 = vpop.f32.mrf.mxu0
      %v2489 = vadd.f32 %v2320, %v2488
      %2490 = vmatmul.bf16.gmra.mxu0 %v1636
      %v2491 = vpop.f32.mrf.mxu0
      %v2492 = vadd.f32 %v2323, %v2491
      %v2493 = vpop.f32.mrf.mxu0
      %v2494 = vadd.f32 %v2325, %v2493
      %2495 = vmatmul.bf16.gmra.mxu0 %v1638
      %v2496 = vpop.f32.mrf.mxu0
      %v2497 = vadd.f32 %v2328, %v2496
      %v2498 = vpop.f32.mrf.mxu0
      %v2499 = vadd.f32 %v2330, %v2498
      %2500 = vmatmul.bf16.gmra.mxu0 %v1640
      %v2501 = vpop.f32.mrf.mxu0
      %v2502 = vadd.f32 %v2333, %v2501
      %v2503 = vpop.f32.mrf.mxu0
      %v2504 = vadd.f32 %v2335, %v2503
      %2505 = vmatmul.bf16.gmra.mxu0 %v1642
      %v2506 = vpop.f32.mrf.mxu0
      %v2507 = vadd.f32 %v2338, %v2506
      %v2508 = vpop.f32.mrf.mxu0
      %v2509 = vadd.f32 %v2340, %v2508
      %2510 = vmatmul.bf16.gmra.mxu0 %v1644
      %v2511 = vpop.f32.mrf.mxu0
      %v2512 = vadd.f32 %v2343, %v2511
      %v2513 = vpop.f32.mrf.mxu0
      %v2514 = vadd.f32 %v2345, %v2513
      %2515 = vmatmul.bf16.gmra.mxu0 %v1646
      %v2516 = vpop.f32.mrf.mxu0
      %v2517 = vadd.f32 %v2348, %v2516
      %v2518 = vpop.f32.mrf.mxu0
      %v2519 = vadd.f32 %v2350, %v2518
      %2520 = vdwg.mxu0
      %v2521 = vmax.f32 %v2024, 0.0
      %v2522 = vmax.f32 %v2362, 0.0
      %v2523 = vmax.f32 %v2026, 0.0
      %v2524 = vmax.f32 %v2364, 0.0
      %v2525 = vmax.f32 %v2029, 0.0
      %v2526 = vmax.f32 %v2367, 0.0
      %v2527 = vmax.f32 %v2031, 0.0
      %v2528 = vmax.f32 %v2369, 0.0
      %v2529 = vmax.f32 %v2034, 0.0
      %v2530 = vmax.f32 %v2372, 0.0
      %v2531 = vmax.f32 %v2036, 0.0
      %v2532 = vmax.f32 %v2374, 0.0
      %v2533 = vmax.f32 %v2039, 0.0
      %v2534 = vmax.f32 %v2377, 0.0
      %v2535 = vmax.f32 %v2041, 0.0
      %v2536 = vmax.f32 %v2379, 0.0
      %v2537 = vmax.f32 %v2044, 0.0
      %v2538 = vmax.f32 %v2382, 0.0
      %v2539 = vmax.f32 %v2046, 0.0
      %v2540 = vmax.f32 %v2384, 0.0
      %v2541 = vmax.f32 %v2049, 0.0
      %v2542 = vmax.f32 %v2387, 0.0
      %v2543 = vmax.f32 %v2051, 0.0
      %v2544 = vmax.f32 %v2389, 0.0
      %v2545 = vmax.f32 %v2054, 0.0
      %v2546 = vmax.f32 %v2392, 0.0
      %v2547 = vmax.f32 %v2056, 0.0
      %v2548 = vmax.f32 %v2394, 0.0
      %v2549 = vmax.f32 %v2059, 0.0
      %v2550 = vmax.f32 %v2397, 0.0
      %v2551 = vmax.f32 %v2061, 0.0
      %v2552 = vmax.f32 %v2399, 0.0
      %v2553 = vmax.f32 %v2064, 0.0
      %v2554 = vmax.f32 %v2402, 0.0
      %v2555 = vmax.f32 %v2066, 0.0
      %v2556 = vmax.f32 %v2404, 0.0
      %v2557 = vmax.f32 %v2069, 0.0
      %v2558 = vmax.f32 %v2407, 0.0
      %v2559 = vmax.f32 %v2071, 0.0
      %v2560 = vmax.f32 %v2409, 0.0
      %v2561 = vmax.f32 %v2074, 0.0
      %v2562 = vmax.f32 %v2412, 0.0
      %v2563 = vmax.f32 %v2076, 0.0
      %v2564 = vmax.f32 %v2414, 0.0
      %v2565 = vmax.f32 %v2079, 0.0
      %v2566 = vmax.f32 %v2417, 0.0
      %v2567 = vmax.f32 %v2081, 0.0
      %v2568 = vmax.f32 %v2419, 0.0
      %v2569 = vmax.f32 %v2084, 0.0
      %v2570 = vmax.f32 %v2422, 0.0
      %v2571 = vmax.f32 %v2086, 0.0
      %v2572 = vmax.f32 %v2424, 0.0
      %v2573 = vmax.f32 %v2089, 0.0
      %v2574 = vmax.f32 %v2427, 0.0
      %v2575 = vmax.f32 %v2091, 0.0
      %v2576 = vmax.f32 %v2429, 0.0
      %v2577 = vmax.f32 %v2094, 0.0
      %v2578 = vmax.f32 %v2432, 0.0
      %v2579 = vmax.f32 %v2096, 0.0
      %v2580 = vmax.f32 %v2434, 0.0
      %v2581 = vmax.f32 %v2099, 0.0
      %v2582 = vmax.f32 %v2437, 0.0
      %v2583 = vmax.f32 %v2101, 0.0
      %v2584 = vmax.f32 %v2439, 0.0
      %v2585 = vmax.f32 %v2104, 0.0
      %v2586 = vmax.f32 %v2442, 0.0
      %v2587 = vmax.f32 %v2106, 0.0
      %v2588 = vmax.f32 %v2444, 0.0
      %v2589 = vmax.f32 %v2109, 0.0
      %v2590 = vmax.f32 %v2447, 0.0
      %v2591 = vmax.f32 %v2111, 0.0
      %v2592 = vmax.f32 %v2449, 0.0
      %v2593 = vmax.f32 %v2114, 0.0
      %v2594 = vmax.f32 %v2452, 0.0
      %v2595 = vmax.f32 %v2116, 0.0
      %v2596 = vmax.f32 %v2454, 0.0
      %v2597 = vmax.f32 %v2119, 0.0
      %v2598 = vmax.f32 %v2457, 0.0
      %v2599 = vmax.f32 %v2121, 0.0
      %v2600 = vmax.f32 %v2459, 0.0
      %v2601 = vmax.f32 %v2124, 0.0
      %v2602 = vmax.f32 %v2462, 0.0
      %v2603 = vmax.f32 %v2126, 0.0
      %v2604 = vmax.f32 %v2464, 0.0
      %v2605 = vmax.f32 %v2129, 0.0
      %v2606 = vmax.f32 %v2467, 0.0
      %v2607 = vmax.f32 %v2131, 0.0
      %v2608 = vmax.f32 %v2469, 0.0
      %v2609 = vmax.f32 %v2134, 0.0
      %v2610 = vmax.f32 %v2472, 0.0
      %v2611 = vmax.f32 %v2136, 0.0
      %v2612 = vmax.f32 %v2474, 0.0
      %v2613 = vmax.f32 %v2139, 0.0
      %v2614 = vmax.f32 %v2477, 0.0
      %v2615 = vmax.f32 %v2141, 0.0
      %v2616 = vmax.f32 %v2479, 0.0
      %v2617 = vmax.f32 %v2144, 0.0
      %v2618 = vmax.f32 %v2482, 0.0
      %v2619 = vmax.f32 %v2146, 0.0
      %v2620 = vmax.f32 %v2484, 0.0
      %v2621 = vmax.f32 %v2149, 0.0
      %v2622 = vmax.f32 %v2487, 0.0
      %v2623 = vmax.f32 %v2151, 0.0
      %v2624 = vmax.f32 %v2489, 0.0
      %v2625 = vmax.f32 %v2154, 0.0
      %v2626 = vmax.f32 %v2492, 0.0
      %v2627 = vmax.f32 %v2156, 0.0
      %v2628 = vmax.f32 %v2494, 0.0
      %v2629 = vmax.f32 %v2159, 0.0
      %v2630 = vmax.f32 %v2497, 0.0
      %v2631 = vmax.f32 %v2161, 0.0
      %v2632 = vmax.f32 %v2499, 0.0
      %v2633 = vmax.f32 %v2164, 0.0
      %v2634 = vmax.f32 %v2502, 0.0
      %v2635 = vmax.f32 %v2166, 0.0
      %v2636 = vmax.f32 %v2504, 0.0
      %v2637 = vmax.f32 %v2169, 0.0
      %v2638 = vmax.f32 %v2507, 0.0
      %v2639 = vmax.f32 %v2171, 0.0
      %v2640 = vmax.f32 %v2509, 0.0
      %v2641 = vmax.f32 %v2174, 0.0
      %v2642 = vmax.f32 %v2512, 0.0
      %v2643 = vmax.f32 %v2176, 0.0
      %v2644 = vmax.f32 %v2514, 0.0
      %v2645 = vmax.f32 %v2179, 0.0
      %v2646 = vmax.f32 %v2517, 0.0
      %v2647 = vmax.f32 %v2181, 0.0
      %v2648 = vmax.f32 %v2519, 0.0
      %v2649 = vpack.c.bf16 %v2523, %v2521
      %v2650 = vpack.c.bf16 %v2524, %v2522
      %v2651 = vpack.c.bf16 %v2527, %v2525
      %v2652 = vpack.c.bf16 %v2528, %v2526
      %v2653 = vpack.c.bf16 %v2531, %v2529
      %v2654 = vpack.c.bf16 %v2532, %v2530
      %v2655 = vpack.c.bf16 %v2535, %v2533
      %v2656 = vpack.c.bf16 %v2536, %v2534
      %v2657 = vpack.c.bf16 %v2539, %v2537
      %v2658 = vpack.c.bf16 %v2540, %v2538
      %v2659 = vpack.c.bf16 %v2543, %v2541
      %v2660 = vpack.c.bf16 %v2544, %v2542
      %v2661 = vpack.c.bf16 %v2547, %v2545
      %v2662 = vpack.c.bf16 %v2548, %v2546
      %v2663 = vpack.c.bf16 %v2551, %v2549
      %v2664 = vpack.c.bf16 %v2552, %v2550
      %v2665 = vpack.c.bf16 %v2555, %v2553
      %v2666 = vpack.c.bf16 %v2556, %v2554
      %v2667 = vpack.c.bf16 %v2559, %v2557
      %v2668 = vpack.c.bf16 %v2560, %v2558
      %v2669 = vpack.c.bf16 %v2563, %v2561
      %v2670 = vpack.c.bf16 %v2564, %v2562
      %v2671 = vpack.c.bf16 %v2567, %v2565
      %v2672 = vpack.c.bf16 %v2568, %v2566
      %v2673 = vpack.c.bf16 %v2571, %v2569
      %v2674 = vpack.c.bf16 %v2572, %v2570
      %v2675 = vpack.c.bf16 %v2575, %v2573
      %v2676 = vpack.c.bf16 %v2576, %v2574
      %v2677 = vpack.c.bf16 %v2579, %v2577
      %v2678 = vpack.c.bf16 %v2580, %v2578
      %v2679 = vpack.c.bf16 %v2583, %v2581
      %v2680 = vpack.c.bf16 %v2584, %v2582
      %v2681 = vpack.c.bf16 %v2587, %v2585
      %v2682 = vpack.c.bf16 %v2588, %v2586
      %v2683 = vpack.c.bf16 %v2591, %v2589
      %v2684 = vpack.c.bf16 %v2592, %v2590
      %v2685 = vpack.c.bf16 %v2595, %v2593
      %v2686 = vpack.c.bf16 %v2596, %v2594
      %v2687 = vpack.c.bf16 %v2599, %v2597
      %v2688 = vpack.c.bf16 %v2600, %v2598
      %v2689 = vpack.c.bf16 %v2603, %v2601
      %v2690 = vpack.c.bf16 %v2604, %v2602
      %v2691 = vpack.c.bf16 %v2607, %v2605
      %v2692 = vpack.c.bf16 %v2608, %v2606
      %v2693 = vpack.c.bf16 %v2611, %v2609
      %v2694 = vpack.c.bf16 %v2612, %v2610
      %v2695 = vpack.c.bf16 %v2615, %v2613
      %v2696 = vpack.c.bf16 %v2616, %v2614
      %v2697 = vpack.c.bf16 %v2619, %v2617
      %v2698 = vpack.c.bf16 %v2620, %v2618
      %v2699 = vpack.c.bf16 %v2623, %v2621
      %v2700 = vpack.c.bf16 %v2624, %v2622
      %v2701 = vpack.c.bf16 %v2627, %v2625
      %v2702 = vpack.c.bf16 %v2628, %v2626
      %v2703 = vpack.c.bf16 %v2631, %v2629
      %v2704 = vpack.c.bf16 %v2632, %v2630
      %v2705 = vpack.c.bf16 %v2635, %v2633
      %v2706 = vpack.c.bf16 %v2636, %v2634
      %v2707 = vpack.c.bf16 %v2639, %v2637
      %v2708 = vpack.c.bf16 %v2640, %v2638
      %v2709 = vpack.c.bf16 %v2643, %v2641
      %v2710 = vpack.c.bf16 %v2644, %v2642
      %v2711 = vpack.c.bf16 %v2647, %v2645
      %v2712 = vpack.c.bf16 %v2648, %v2646
      %s2713 = scalar_lea.vmem %s3, 256
      %v2714 = vld [vmem:[%s2713] sm:$0xff]
      %v2715 = vld [vmem:[%s2713 + $0x8] sm:$0xff]
      %v2716 = vld [vmem:[%s2713 + $0x10] sm:$0xff]
      %v2717 = vld [vmem:[%s2713 + $0x18] sm:$0xff]
      %v2718 = vld [vmem:[%s2713 + $0x20] sm:$0xff]
      %v2719 = vld [vmem:[%s2713 + $0x28] sm:$0xff]
      %v2720 = vld [vmem:[%s2713 + $0x30] sm:$0xff]
      %v2721 = vld [vmem:[%s2713 + $0x38] sm:$0xff]
      %v2722 = vld [vmem:[%s2713 + $0x40] sm:$0xff]
      %v2723 = vld [vmem:[%s2713 + $0x48] sm:$0xff]
      %v2724 = vld [vmem:[%s2713 + $0x50] sm:$0xff]
      %v2725 = vld [vmem:[%s2713 + $0x58] sm:$0xff]
      %v2726 = vld [vmem:[%s2713 + $0x60] sm:$0xff]
      %v2727 = vld [vmem:[%s2713 + $0x68] sm:$0xff]
      %v2728 = vld [vmem:[%s2713 + $0x70] sm:$0xff]
      %v2729 = vld [vmem:[%s2713 + $0x78] sm:$0xff]
      %v2730 = vld [vmem:[%s2713 + $0x80] sm:$0xff]
      %v2731 = vld [vmem:[%s2713 + $0x88] sm:$0xff]
      %v2732 = vld [vmem:[%s2713 + $0x90] sm:$0xff]
      %v2733 = vld [vmem:[%s2713 + $0x98] sm:$0xff]
      %v2734 = vld [vmem:[%s2713 + $0xa0] sm:$0xff]
      %v2735 = vld [vmem:[%s2713 + $0xa8] sm:$0xff]
      %v2736 = vld [vmem:[%s2713 + $0xb0] sm:$0xff]
      %v2737 = vld [vmem:[%s2713 + $0xb8] sm:$0xff]
      %v2738 = vld [vmem:[%s2713 + $0xc0] sm:$0xff]
      %v2739 = vld [vmem:[%s2713 + $0xc8] sm:$0xff]
      %v2740 = vld [vmem:[%s2713 + $0xd0] sm:$0xff]
      %v2741 = vld [vmem:[%s2713 + $0xd8] sm:$0xff]
      %v2742 = vld [vmem:[%s2713 + $0xe0] sm:$0xff]
      %v2743 = vld [vmem:[%s2713 + $0xe8] sm:$0xff]
      %v2744 = vld [vmem:[%s2713 + $0xf0] sm:$0xff]
      %v2745 = vld [vmem:[%s2713 + $0xf8] sm:$0xff]
      %s2746 = scalar_lea.vmem %s4, 2
      %v2747 = vld [vmem:[%s2746] sm:$0x3]
      %v2749 = vperm.slane %v2747, 0
      %v2750 = vperm.slane %v2747, 1
      %v2785 = vunpack.c.l.b16 %v2714
      %v2786 = vunpack.c.h.b16 %v2714
      %v2787 = vunpack.c.l.b16 %v2715
      %v2788 = vunpack.c.h.b16 %v2715
      %v2789 = vunpack.c.l.b16 %v2716
      %v2790 = vunpack.c.h.b16 %v2716
      %v2791 = vunpack.c.l.b16 %v2717
      %v2792 = vunpack.c.h.b16 %v2717
      %v2793 = vunpack.c.l.b16 %v2718
      %v2794 = vunpack.c.h.b16 %v2718
      %v2795 = vunpack.c.l.b16 %v2719
      %v2796 = vunpack.c.h.b16 %v2719
      %v2797 = vunpack.c.l.b16 %v2720
      %v2798 = vunpack.c.h.b16 %v2720
      %v2799 = vunpack.c.l.b16 %v2721
      %v2800 = vunpack.c.h.b16 %v2721
      %v2801 = vunpack.c.l.b16 %v2722
      %v2802 = vunpack.c.h.b16 %v2722
      %v2803 = vunpack.c.l.b16 %v2723
      %v2804 = vunpack.c.h.b16 %v2723
      %v2805 = vunpack.c.l.b16 %v2724
      %v2806 = vunpack.c.h.b16 %v2724
      %v2807 = vunpack.c.l.b16 %v2725
      %v2808 = vunpack.c.h.b16 %v2725
      %v2809 = vunpack.c.l.b16 %v2726
      %v2810 = vunpack.c.h.b16 %v2726
      %v2811 = vunpack.c.l.b16 %v2727
      %v2812 = vunpack.c.h.b16 %v2727
      %v2813 = vunpack.c.l.b16 %v2728
      %v2814 = vunpack.c.h.b16 %v2728
      %v2815 = vunpack.c.l.b16 %v2729
      %v2816 = vunpack.c.h.b16 %v2729
      %v2817 = vunpack.c.l.b16 %v2730
      %v2818 = vunpack.c.h.b16 %v2730
      %v2819 = vunpack.c.l.b16 %v2731
      %v2820 = vunpack.c.h.b16 %v2731
      %v2821 = vunpack.c.l.b16 %v2732
      %v2822 = vunpack.c.h.b16 %v2732
      %v2823 = vunpack.c.l.b16 %v2733
      %v2824 = vunpack.c.h.b16 %v2733
      %v2825 = vunpack.c.l.b16 %v2734
      %v2826 = vunpack.c.h.b16 %v2734
      %v2827 = vunpack.c.l.b16 %v2735
      %v2828 = vunpack.c.h.b16 %v2735
      %v2829 = vunpack.c.l.b16 %v2736
      %v2830 = vunpack.c.h.b16 %v2736
      %v2831 = vunpack.c.l.b16 %v2737
      %v2832 = vunpack.c.h.b16 %v2737
      %v2833 = vunpack.c.l.b16 %v2738
      %v2834 = vunpack.c.h.b16 %v2738
      %v2835 = vunpack.c.l.b16 %v2739
      %v2836 = vunpack.c.h.b16 %v2739
      %v2837 = vunpack.c.l.b16 %v2740
      %v2838 = vunpack.c.h.b16 %v2740
      %v2839 = vunpack.c.l.b16 %v2741
      %v2840 = vunpack.c.h.b16 %v2741
      %v2841 = vunpack.c.l.b16 %v2742
      %v2842 = vunpack.c.h.b16 %v2742
      %v2843 = vunpack.c.l.b16 %v2743
      %v2844 = vunpack.c.h.b16 %v2743
      %v2845 = vunpack.c.l.b16 %v2744
      %v2846 = vunpack.c.h.b16 %v2744
      %v2847 = vunpack.c.l.b16 %v2745
      %v2848 = vunpack.c.h.b16 %v2745
      %v2849 = vpack.c.b16 %v2787, %v2785
      %v2850 = vpack.c.b16 %v2788, %v2786
      %v2851 = vpack.c.b16 %v2791, %v2789
      %v2852 = vpack.c.b16 %v2792, %v2790
      %v2853 = vpack.c.b16 %v2795, %v2793
      %v2854 = vpack.c.b16 %v2796, %v2794
      %v2855 = vpack.c.b16 %v2799, %v2797
      %v2856 = vpack.c.b16 %v2800, %v2798
      %v2857 = vpack.c.b16 %v2803, %v2801
      %v2858 = vpack.c.b16 %v2804, %v2802
      %v2859 = vpack.c.b16 %v2807, %v2805
      %v2860 = vpack.c.b16 %v2808, %v2806
      %v2861 = vpack.c.b16 %v2811, %v2809
      %v2862 = vpack.c.b16 %v2812, %v2810
      %v2863 = vpack.c.b16 %v2815, %v2813
      %v2864 = vpack.c.b16 %v2816, %v2814
      %v2865 = vpack.c.b16 %v2819, %v2817
      %v2866 = vpack.c.b16 %v2820, %v2818
      %v2867 = vpack.c.b16 %v2823, %v2821
      %v2868 = vpack.c.b16 %v2824, %v2822
      %v2869 = vpack.c.b16 %v2827, %v2825
      %v2870 = vpack.c.b16 %v2828, %v2826
      %v2871 = vpack.c.b16 %v2831, %v2829
      %v2872 = vpack.c.b16 %v2832, %v2830
      %v2873 = vpack.c.b16 %v2835, %v2833
      %v2874 = vpack.c.b16 %v2836, %v2834
      %v2875 = vpack.c.b16 %v2839, %v2837
      %v2876 = vpack.c.b16 %v2840, %v2838
      %v2877 = vpack.c.b16 %v2843, %v2841
      %v2878 = vpack.c.b16 %v2844, %v2842
      %v2879 = vpack.c.b16 %v2847, %v2845
      %v2880 = vpack.c.b16 %v2848, %v2846
      %2913 = vmatpush.bf16.msra.mxu0 %v2863
      %2914 = vmatpush.bf16.msra.mxu0 %v2861
      %2915 = vmatpush.bf16.msra.mxu0 %v2859
      %2916 = vmatpush.bf16.msra.mxu0 %v2857
      %2917 = vmatpush.bf16.msra.mxu0 %v2855
      %2918 = vmatpush.bf16.msra.mxu0 %v2853
      %2919 = vmatpush.bf16.msra.mxu0 %v2851
      %2920 = vmatpush.bf16.msra.mxu0 %v2849
      %2921 = vmatmul.bf16.gmra.mxu0 %v2649
      %v2922 = vpop.f32.mrf.mxu0
      %v2923 = vadd.f32 %v2749, %v2922
      %v2924 = vpop.f32.mrf.mxu0
      %v2925 = vadd.f32 %v2749, %v2924
      %2926 = vmatmul.bf16.gmra.mxu0 %v2651
      %v2927 = vpop.f32.mrf.mxu0
      %v2928 = vadd.f32 %v2749, %v2927
      %v2929 = vpop.f32.mrf.mxu0
      %v2930 = vadd.f32 %v2749, %v2929
      %2931 = vmatmul.bf16.gmra.mxu0 %v2653
      %v2932 = vpop.f32.mrf.mxu0
      %v2933 = vadd.f32 %v2749, %v2932
      %v2934 = vpop.f32.mrf.mxu0
      %v2935 = vadd.f32 %v2749, %v2934
      %2936 = vmatmul.bf16.gmra.mxu0 %v2655
      %v2937 = vpop.f32.mrf.mxu0
      %v2938 = vadd.f32 %v2749, %v2937
      %v2939 = vpop.f32.mrf.mxu0
      %v2940 = vadd.f32 %v2749, %v2939
      %2941 = vmatmul.bf16.gmra.mxu0 %v2657
      %v2942 = vpop.f32.mrf.mxu0
      %v2943 = vadd.f32 %v2749, %v2942
      %v2944 = vpop.f32.mrf.mxu0
      %v2945 = vadd.f32 %v2749, %v2944
      %2946 = vmatmul.bf16.gmra.mxu0 %v2659
      %v2947 = vpop.f32.mrf.mxu0
      %v2948 = vadd.f32 %v2749, %v2947
      %v2949 = vpop.f32.mrf.mxu0
      %v2950 = vadd.f32 %v2749, %v2949
      %2951 = vmatmul.bf16.gmra.mxu0 %v2661
      %v2952 = vpop.f32.mrf.mxu0
      %v2953 = vadd.f32 %v2749, %v2952
      %v2954 = vpop.f32.mrf.mxu0
      %v2955 = vadd.f32 %v2749, %v2954
      %2956 = vmatmul.bf16.gmra.mxu0 %v2663
      %v2957 = vpop.f32.mrf.mxu0
      %v2958 = vadd.f32 %v2749, %v2957
      %v2959 = vpop.f32.mrf.mxu0
      %v2960 = vadd.f32 %v2749, %v2959
      %2961 = vmatmul.bf16.gmra.mxu0 %v2665
      %v2962 = vpop.f32.mrf.mxu0
      %v2963 = vadd.f32 %v2749, %v2962
      %v2964 = vpop.f32.mrf.mxu0
      %v2965 = vadd.f32 %v2749, %v2964
      %2966 = vmatmul.bf16.gmra.mxu0 %v2667
      %v2967 = vpop.f32.mrf.mxu0
      %v2968 = vadd.f32 %v2749, %v2967
      %v2969 = vpop.f32.mrf.mxu0
      %v2970 = vadd.f32 %v2749, %v2969
      %2971 = vmatmul.bf16.gmra.mxu0 %v2669
      %v2972 = vpop.f32.mrf.mxu0
      %v2973 = vadd.f32 %v2749, %v2972
      %v2974 = vpop.f32.mrf.mxu0
      %v2975 = vadd.f32 %v2749, %v2974
      %2976 = vmatmul.bf16.gmra.mxu0 %v2671
      %v2977 = vpop.f32.mrf.mxu0
      %v2978 = vadd.f32 %v2749, %v2977
      %v2979 = vpop.f32.mrf.mxu0
      %v2980 = vadd.f32 %v2749, %v2979
      %2981 = vmatmul.bf16.gmra.mxu0 %v2673
      %v2982 = vpop.f32.mrf.mxu0
      %v2983 = vadd.f32 %v2749, %v2982
      %v2984 = vpop.f32.mrf.mxu0
      %v2985 = vadd.f32 %v2749, %v2984
      %2986 = vmatmul.bf16.gmra.mxu0 %v2675
      %v2987 = vpop.f32.mrf.mxu0
      %v2988 = vadd.f32 %v2749, %v2987
      %v2989 = vpop.f32.mrf.mxu0
      %v2990 = vadd.f32 %v2749, %v2989
      %2991 = vmatmul.bf16.gmra.mxu0 %v2677
      %v2992 = vpop.f32.mrf.mxu0
      %v2993 = vadd.f32 %v2749, %v2992
      %v2994 = vpop.f32.mrf.mxu0
      %v2995 = vadd.f32 %v2749, %v2994
      %2996 = vmatmul.bf16.gmra.mxu0 %v2679
      %v2997 = vpop.f32.mrf.mxu0
      %v2998 = vadd.f32 %v2749, %v2997
      %v2999 = vpop.f32.mrf.mxu0
      %v3000 = vadd.f32 %v2749, %v2999
      %3001 = vmatmul.bf16.gmra.mxu0 %v2681
      %v3002 = vpop.f32.mrf.mxu0
      %v3003 = vadd.f32 %v2749, %v3002
      %v3004 = vpop.f32.mrf.mxu0
      %v3005 = vadd.f32 %v2749, %v3004
      %3006 = vmatmul.bf16.gmra.mxu0 %v2683
      %v3007 = vpop.f32.mrf.mxu0
      %v3008 = vadd.f32 %v2749, %v3007
      %v3009 = vpop.f32.mrf.mxu0
      %v3010 = vadd.f32 %v2749, %v3009
      %3011 = vmatmul.bf16.gmra.mxu0 %v2685
      %v3012 = vpop.f32.mrf.mxu0
      %v3013 = vadd.f32 %v2749, %v3012
      %v3014 = vpop.f32.mrf.mxu0
      %v3015 = vadd.f32 %v2749, %v3014
      %3016 = vmatmul.bf16.gmra.mxu0 %v2687
      %v3017 = vpop.f32.mrf.mxu0
      %v3018 = vadd.f32 %v2749, %v3017
      %v3019 = vpop.f32.mrf.mxu0
      %v3020 = vadd.f32 %v2749, %v3019
      %3021 = vmatmul.bf16.gmra.mxu0 %v2689
      %v3022 = vpop.f32.mrf.mxu0
      %v3023 = vadd.f32 %v2749, %v3022
      %v3024 = vpop.f32.mrf.mxu0
      %v3025 = vadd.f32 %v2749, %v3024
      %3026 = vmatmul.bf16.gmra.mxu0 %v2691
      %v3027 = vpop.f32.mrf.mxu0
      %v3028 = vadd.f32 %v2749, %v3027
      %v3029 = vpop.f32.mrf.mxu0
      %v3030 = vadd.f32 %v2749, %v3029
      %3031 = vmatmul.bf16.gmra.mxu0 %v2693
      %v3032 = vpop.f32.mrf.mxu0
      %v3033 = vadd.f32 %v2749, %v3032
      %v3034 = vpop.f32.mrf.mxu0
      %v3035 = vadd.f32 %v2749, %v3034
      %3036 = vmatmul.bf16.gmra.mxu0 %v2695
      %v3037 = vpop.f32.mrf.mxu0
      %v3038 = vadd.f32 %v2749, %v3037
      %v3039 = vpop.f32.mrf.mxu0
      %v3040 = vadd.f32 %v2749, %v3039
      %3041 = vmatmul.bf16.gmra.mxu0 %v2697
      %v3042 = vpop.f32.mrf.mxu0
      %v3043 = vadd.f32 %v2749, %v3042
      %v3044 = vpop.f32.mrf.mxu0
      %v3045 = vadd.f32 %v2749, %v3044
      %3046 = vmatmul.bf16.gmra.mxu0 %v2699
      %v3047 = vpop.f32.mrf.mxu0
      %v3048 = vadd.f32 %v2749, %v3047
      %v3049 = vpop.f32.mrf.mxu0
      %v3050 = vadd.f32 %v2749, %v3049
      %3051 = vmatmul.bf16.gmra.mxu0 %v2701
      %v3052 = vpop.f32.mrf.mxu0
      %v3053 = vadd.f32 %v2749, %v3052
      %v3054 = vpop.f32.mrf.mxu0
      %v3055 = vadd.f32 %v2749, %v3054
      %3056 = vmatmul.bf16.gmra.mxu0 %v2703
      %v3057 = vpop.f32.mrf.mxu0
      %v3058 = vadd.f32 %v2749, %v3057
      %v3059 = vpop.f32.mrf.mxu0
      %v3060 = vadd.f32 %v2749, %v3059
      %3061 = vmatmul.bf16.gmra.mxu0 %v2705
      %v3062 = vpop.f32.mrf.mxu0
      %v3063 = vadd.f32 %v2749, %v3062
      %v3064 = vpop.f32.mrf.mxu0
      %v3065 = vadd.f32 %v2749, %v3064
      %3066 = vmatmul.bf16.gmra.mxu0 %v2707
      %v3067 = vpop.f32.mrf.mxu0
      %v3068 = vadd.f32 %v2749, %v3067
      %v3069 = vpop.f32.mrf.mxu0
      %v3070 = vadd.f32 %v2749, %v3069
      %3071 = vmatmul.bf16.gmra.mxu0 %v2709
      %v3072 = vpop.f32.mrf.mxu0
      %v3073 = vadd.f32 %v2749, %v3072
      %v3074 = vpop.f32.mrf.mxu0
      %v3075 = vadd.f32 %v2749, %v3074
      %3076 = vmatmul.bf16.gmra.mxu0 %v2711
      %v3077 = vpop.f32.mrf.mxu0
      %v3078 = vadd.f32 %v2749, %v3077
      %v3079 = vpop.f32.mrf.mxu0
      %v3080 = vadd.f32 %v2749, %v3079
      %3081 = vdwg.mxu0
      %3082 = vmatpush.bf16.msra.mxu0 %v2879
      %3083 = vmatpush.bf16.msra.mxu0 %v2877
      %3084 = vmatpush.bf16.msra.mxu0 %v2875
      %3085 = vmatpush.bf16.msra.mxu0 %v2873
      %3086 = vmatpush.bf16.msra.mxu0 %v2871
      %3087 = vmatpush.bf16.msra.mxu0 %v2869
      %3088 = vmatpush.bf16.msra.mxu0 %v2867
      %3089 = vmatpush.bf16.msra.mxu0 %v2865
      %3090 = vmatmul.bf16.gmra.mxu0 %v2650
      %v3091 = vpop.f32.mrf.mxu0
      %v3092 = vadd.f32 %v2923, %v3091
      %v3093 = vpop.f32.mrf.mxu0
      %v3094 = vadd.f32 %v2925, %v3093
      %3095 = vmatmul.bf16.gmra.mxu0 %v2652
      %v3096 = vpop.f32.mrf.mxu0
      %v3097 = vadd.f32 %v2928, %v3096
      %v3098 = vpop.f32.mrf.mxu0
      %v3099 = vadd.f32 %v2930, %v3098
      %3100 = vmatmul.bf16.gmra.mxu0 %v2654
      %v3101 = vpop.f32.mrf.mxu0
      %v3102 = vadd.f32 %v2933, %v3101
      %v3103 = vpop.f32.mrf.mxu0
      %v3104 = vadd.f32 %v2935, %v3103
      %3105 = vmatmul.bf16.gmra.mxu0 %v2656
      %v3106 = vpop.f32.mrf.mxu0
      %v3107 = vadd.f32 %v2938, %v3106
      %v3108 = vpop.f32.mrf.mxu0
      %v3109 = vadd.f32 %v2940, %v3108
      %3110 = vmatmul.bf16.gmra.mxu0 %v2658
      %v3111 = vpop.f32.mrf.mxu0
      %v3112 = vadd.f32 %v2943, %v3111
      %v3113 = vpop.f32.mrf.mxu0
      %v3114 = vadd.f32 %v2945, %v3113
      %3115 = vmatmul.bf16.gmra.mxu0 %v2660
      %v3116 = vpop.f32.mrf.mxu0
      %v3117 = vadd.f32 %v2948, %v3116
      %v3118 = vpop.f32.mrf.mxu0
      %v3119 = vadd.f32 %v2950, %v3118
      %3120 = vmatmul.bf16.gmra.mxu0 %v2662
      %v3121 = vpop.f32.mrf.mxu0
      %v3122 = vadd.f32 %v2953, %v3121
      %v3123 = vpop.f32.mrf.mxu0
      %v3124 = vadd.f32 %v2955, %v3123
      %3125 = vmatmul.bf16.gmra.mxu0 %v2664
      %v3126 = vpop.f32.mrf.mxu0
      %v3127 = vadd.f32 %v2958, %v3126
      %v3128 = vpop.f32.mrf.mxu0
      %v3129 = vadd.f32 %v2960, %v3128
      %3130 = vmatmul.bf16.gmra.mxu0 %v2666
      %v3131 = vpop.f32.mrf.mxu0
      %v3132 = vadd.f32 %v2963, %v3131
      %v3133 = vpop.f32.mrf.mxu0
      %v3134 = vadd.f32 %v2965, %v3133
      %3135 = vmatmul.bf16.gmra.mxu0 %v2668
      %v3136 = vpop.f32.mrf.mxu0
      %v3137 = vadd.f32 %v2968, %v3136
      %v3138 = vpop.f32.mrf.mxu0
      %v3139 = vadd.f32 %v2970, %v3138
      %3140 = vmatmul.bf16.gmra.mxu0 %v2670
      %v3141 = vpop.f32.mrf.mxu0
      %v3142 = vadd.f32 %v2973, %v3141
      %v3143 = vpop.f32.mrf.mxu0
      %v3144 = vadd.f32 %v2975, %v3143
      %3145 = vmatmul.bf16.gmra.mxu0 %v2672
      %v3146 = vpop.f32.mrf.mxu0
      %v3147 = vadd.f32 %v2978, %v3146
      %v3148 = vpop.f32.mrf.mxu0
      %v3149 = vadd.f32 %v2980, %v3148
      %3150 = vmatmul.bf16.gmra.mxu0 %v2674
      %v3151 = vpop.f32.mrf.mxu0
      %v3152 = vadd.f32 %v2983, %v3151
      %v3153 = vpop.f32.mrf.mxu0
      %v3154 = vadd.f32 %v2985, %v3153
      %3155 = vmatmul.bf16.gmra.mxu0 %v2676
      %v3156 = vpop.f32.mrf.mxu0
      %v3157 = vadd.f32 %v2988, %v3156
      %v3158 = vpop.f32.mrf.mxu0
      %v3159 = vadd.f32 %v2990, %v3158
      %3160 = vmatmul.bf16.gmra.mxu0 %v2678
      %v3161 = vpop.f32.mrf.mxu0
      %v3162 = vadd.f32 %v2993, %v3161
      %v3163 = vpop.f32.mrf.mxu0
      %v3164 = vadd.f32 %v2995, %v3163
      %3165 = vmatmul.bf16.gmra.mxu0 %v2680
      %v3166 = vpop.f32.mrf.mxu0
      %v3167 = vadd.f32 %v2998, %v3166
      %v3168 = vpop.f32.mrf.mxu0
      %v3169 = vadd.f32 %v3000, %v3168
      %3170 = vmatmul.bf16.gmra.mxu0 %v2682
      %v3171 = vpop.f32.mrf.mxu0
      %v3172 = vadd.f32 %v3003, %v3171
      %v3173 = vpop.f32.mrf.mxu0
      %v3174 = vadd.f32 %v3005, %v3173
      %3175 = vmatmul.bf16.gmra.mxu0 %v2684
      %v3176 = vpop.f32.mrf.mxu0
      %v3177 = vadd.f32 %v3008, %v3176
      %v3178 = vpop.f32.mrf.mxu0
      %v3179 = vadd.f32 %v3010, %v3178
      %3180 = vmatmul.bf16.gmra.mxu0 %v2686
      %v3181 = vpop.f32.mrf.mxu0
      %v3182 = vadd.f32 %v3013, %v3181
      %v3183 = vpop.f32.mrf.mxu0
      %v3184 = vadd.f32 %v3015, %v3183
      %3185 = vmatmul.bf16.gmra.mxu0 %v2688
      %v3186 = vpop.f32.mrf.mxu0
      %v3187 = vadd.f32 %v3018, %v3186
      %v3188 = vpop.f32.mrf.mxu0
      %v3189 = vadd.f32 %v3020, %v3188
      %3190 = vmatmul.bf16.gmra.mxu0 %v2690
      %v3191 = vpop.f32.mrf.mxu0
      %v3192 = vadd.f32 %v3023, %v3191
      %v3193 = vpop.f32.mrf.mxu0
      %v3194 = vadd.f32 %v3025, %v3193
      %3195 = vmatmul.bf16.gmra.mxu0 %v2692
      %v3196 = vpop.f32.mrf.mxu0
      %v3197 = vadd.f32 %v3028, %v3196
      %v3198 = vpop.f32.mrf.mxu0
      %v3199 = vadd.f32 %v3030, %v3198
      %3200 = vmatmul.bf16.gmra.mxu0 %v2694
      %v3201 = vpop.f32.mrf.mxu0
      %v3202 = vadd.f32 %v3033, %v3201
      %v3203 = vpop.f32.mrf.mxu0
      %v3204 = vadd.f32 %v3035, %v3203
      %3205 = vmatmul.bf16.gmra.mxu0 %v2696
      %v3206 = vpop.f32.mrf.mxu0
      %v3207 = vadd.f32 %v3038, %v3206
      %v3208 = vpop.f32.mrf.mxu0
      %v3209 = vadd.f32 %v3040, %v3208
      %3210 = vmatmul.bf16.gmra.mxu0 %v2698
      %v3211 = vpop.f32.mrf.mxu0
      %v3212 = vadd.f32 %v3043, %v3211
      %v3213 = vpop.f32.mrf.mxu0
      %v3214 = vadd.f32 %v3045, %v3213
      %3215 = vmatmul.bf16.gmra.mxu0 %v2700
      %v3216 = vpop.f32.mrf.mxu0
      %v3217 = vadd.f32 %v3048, %v3216
      %v3218 = vpop.f32.mrf.mxu0
      %v3219 = vadd.f32 %v3050, %v3218
      %3220 = vmatmul.bf16.gmra.mxu0 %v2702
      %v3221 = vpop.f32.mrf.mxu0
      %v3222 = vadd.f32 %v3053, %v3221
      %v3223 = vpop.f32.mrf.mxu0
      %v3224 = vadd.f32 %v3055, %v3223
      %3225 = vmatmul.bf16.gmra.mxu0 %v2704
      %v3226 = vpop.f32.mrf.mxu0
      %v3227 = vadd.f32 %v3058, %v3226
      %v3228 = vpop.f32.mrf.mxu0
      %v3229 = vadd.f32 %v3060, %v3228
      %3230 = vmatmul.bf16.gmra.mxu0 %v2706
      %v3231 = vpop.f32.mrf.mxu0
      %v3232 = vadd.f32 %v3063, %v3231
      %v3233 = vpop.f32.mrf.mxu0
      %v3234 = vadd.f32 %v3065, %v3233
      %3235 = vmatmul.bf16.gmra.mxu0 %v2708
      %v3236 = vpop.f32.mrf.mxu0
      %v3237 = vadd.f32 %v3068, %v3236
      %v3238 = vpop.f32.mrf.mxu0
      %v3239 = vadd.f32 %v3070, %v3238
      %3240 = vmatmul.bf16.gmra.mxu0 %v2710
      %v3241 = vpop.f32.mrf.mxu0
      %v3242 = vadd.f32 %v3073, %v3241
      %v3243 = vpop.f32.mrf.mxu0
      %v3244 = vadd.f32 %v3075, %v3243
      %3245 = vmatmul.bf16.gmra.mxu0 %v2712
      %v3246 = vpop.f32.mrf.mxu0
      %v3247 = vadd.f32 %v3078, %v3246
      %v3248 = vpop.f32.mrf.mxu0
      %v3249 = vadd.f32 %v3080, %v3248
      %3250 = vdwg.mxu0
      %3251 = vmatpush.bf16.msra.mxu0 %v2864
      %3252 = vmatpush.bf16.msra.mxu0 %v2862
      %3253 = vmatpush.bf16.msra.mxu0 %v2860
      %3254 = vmatpush.bf16.msra.mxu0 %v2858
      %3255 = vmatpush.bf16.msra.mxu0 %v2856
      %3256 = vmatpush.bf16.msra.mxu0 %v2854
      %3257 = vmatpush.bf16.msra.mxu0 %v2852
      %3258 = vmatpush.bf16.msra.mxu0 %v2850
      %3259 = vmatmul.bf16.gmra.mxu0 %v2649
      %v3260 = vpop.f32.mrf.mxu0
      %v3261 = vadd.f32 %v2750, %v3260
      %v3262 = vpop.f32.mrf.mxu0
      %v3263 = vadd.f32 %v2750, %v3262
      %3264 = vmatmul.bf16.gmra.mxu0 %v2651
      %v3265 = vpop.f32.mrf.mxu0
      %v3266 = vadd.f32 %v2750, %v3265
      %v3267 = vpop.f32.mrf.mxu0
      %v3268 = vadd.f32 %v2750, %v3267
      %3269 = vmatmul.bf16.gmra.mxu0 %v2653
      %v3270 = vpop.f32.mrf.mxu0
      %v3271 = vadd.f32 %v2750, %v3270
      %v3272 = vpop.f32.mrf.mxu0
      %v3273 = vadd.f32 %v2750, %v3272
      %3274 = vmatmul.bf16.gmra.mxu0 %v2655
      %v3275 = vpop.f32.mrf.mxu0
      %v3276 = vadd.f32 %v2750, %v3275
      %v3277 = vpop.f32.mrf.mxu0
      %v3278 = vadd.f32 %v2750, %v3277
      %3279 = vmatmul.bf16.gmra.mxu0 %v2657
      %v3280 = vpop.f32.mrf.mxu0
      %v3281 = vadd.f32 %v2750, %v3280
      %v3282 = vpop.f32.mrf.mxu0
      %v3283 = vadd.f32 %v2750, %v3282
      %3284 = vmatmul.bf16.gmra.mxu0 %v2659
      %v3285 = vpop.f32.mrf.mxu0
      %v3286 = vadd.f32 %v2750, %v3285
      %v3287 = vpop.f32.mrf.mxu0
      %v3288 = vadd.f32 %v2750, %v3287
      %3289 = vmatmul.bf16.gmra.mxu0 %v2661
      %v3290 = vpop.f32.mrf.mxu0
      %v3291 = vadd.f32 %v2750, %v3290
      %v3292 = vpop.f32.mrf.mxu0
      %v3293 = vadd.f32 %v2750, %v3292
      %3294 = vmatmul.bf16.gmra.mxu0 %v2663
      %v3295 = vpop.f32.mrf.mxu0
      %v3296 = vadd.f32 %v2750, %v3295
      %v3297 = vpop.f32.mrf.mxu0
      %v3298 = vadd.f32 %v2750, %v3297
      %3299 = vmatmul.bf16.gmra.mxu0 %v2665
      %v3300 = vpop.f32.mrf.mxu0
      %v3301 = vadd.f32 %v2750, %v3300
      %v3302 = vpop.f32.mrf.mxu0
      %v3303 = vadd.f32 %v2750, %v3302
      %3304 = vmatmul.bf16.gmra.mxu0 %v2667
      %v3305 = vpop.f32.mrf.mxu0
      %v3306 = vadd.f32 %v2750, %v3305
      %v3307 = vpop.f32.mrf.mxu0
      %v3308 = vadd.f32 %v2750, %v3307
      %3309 = vmatmul.bf16.gmra.mxu0 %v2669
      %v3310 = vpop.f32.mrf.mxu0
      %v3311 = vadd.f32 %v2750, %v3310
      %v3312 = vpop.f32.mrf.mxu0
      %v3313 = vadd.f32 %v2750, %v3312
      %3314 = vmatmul.bf16.gmra.mxu0 %v2671
      %v3315 = vpop.f32.mrf.mxu0
      %v3316 = vadd.f32 %v2750, %v3315
      %v3317 = vpop.f32.mrf.mxu0
      %v3318 = vadd.f32 %v2750, %v3317
      %3319 = vmatmul.bf16.gmra.mxu0 %v2673
      %v3320 = vpop.f32.mrf.mxu0
      %v3321 = vadd.f32 %v2750, %v3320
      %v3322 = vpop.f32.mrf.mxu0
      %v3323 = vadd.f32 %v2750, %v3322
      %3324 = vmatmul.bf16.gmra.mxu0 %v2675
      %v3325 = vpop.f32.mrf.mxu0
      %v3326 = vadd.f32 %v2750, %v3325
      %v3327 = vpop.f32.mrf.mxu0
      %v3328 = vadd.f32 %v2750, %v3327
      %3329 = vmatmul.bf16.gmra.mxu0 %v2677
      %v3330 = vpop.f32.mrf.mxu0
      %v3331 = vadd.f32 %v2750, %v3330
      %v3332 = vpop.f32.mrf.mxu0
      %v3333 = vadd.f32 %v2750, %v3332
      %3334 = vmatmul.bf16.gmra.mxu0 %v2679
      %v3335 = vpop.f32.mrf.mxu0
      %v3336 = vadd.f32 %v2750, %v3335
      %v3337 = vpop.f32.mrf.mxu0
      %v3338 = vadd.f32 %v2750, %v3337
      %3339 = vmatmul.bf16.gmra.mxu0 %v2681
      %v3340 = vpop.f32.mrf.mxu0
      %v3341 = vadd.f32 %v2750, %v3340
      %v3342 = vpop.f32.mrf.mxu0
      %v3343 = vadd.f32 %v2750, %v3342
      %3344 = vmatmul.bf16.gmra.mxu0 %v2683
      %v3345 = vpop.f32.mrf.mxu0
      %v3346 = vadd.f32 %v2750, %v3345
      %v3347 = vpop.f32.mrf.mxu0
      %v3348 = vadd.f32 %v2750, %v3347
      %3349 = vmatmul.bf16.gmra.mxu0 %v2685
      %v3350 = vpop.f32.mrf.mxu0
      %v3351 = vadd.f32 %v2750, %v3350
      %v3352 = vpop.f32.mrf.mxu0
      %v3353 = vadd.f32 %v2750, %v3352
      %3354 = vmatmul.bf16.gmra.mxu0 %v2687
      %v3355 = vpop.f32.mrf.mxu0
      %v3356 = vadd.f32 %v2750, %v3355
      %v3357 = vpop.f32.mrf.mxu0
      %v3358 = vadd.f32 %v2750, %v3357
      %3359 = vmatmul.bf16.gmra.mxu0 %v2689
      %v3360 = vpop.f32.mrf.mxu0
      %v3361 = vadd.f32 %v2750, %v3360
      %v3362 = vpop.f32.mrf.mxu0
      %v3363 = vadd.f32 %v2750, %v3362
      %3364 = vmatmul.bf16.gmra.mxu0 %v2691
      %v3365 = vpop.f32.mrf.mxu0
      %v3366 = vadd.f32 %v2750, %v3365
      %v3367 = vpop.f32.mrf.mxu0
      %v3368 = vadd.f32 %v2750, %v3367
      %3369 = vmatmul.bf16.gmra.mxu0 %v2693
      %v3370 = vpop.f32.mrf.mxu0
      %v3371 = vadd.f32 %v2750, %v3370
      %v3372 = vpop.f32.mrf.mxu0
      %v3373 = vadd.f32 %v2750, %v3372
      %3374 = vmatmul.bf16.gmra.mxu0 %v2695
      %v3375 = vpop.f32.mrf.mxu0
      %v3376 = vadd.f32 %v2750, %v3375
      %v3377 = vpop.f32.mrf.mxu0
      %v3378 = vadd.f32 %v2750, %v3377
      %3379 = vmatmul.bf16.gmra.mxu0 %v2697
      %v3380 = vpop.f32.mrf.mxu0
      %v3381 = vadd.f32 %v2750, %v3380
      %v3382 = vpop.f32.mrf.mxu0
      %v3383 = vadd.f32 %v2750, %v3382
      %3384 = vmatmul.bf16.gmra.mxu0 %v2699
      %v3385 = vpop.f32.mrf.mxu0
      %v3386 = vadd.f32 %v2750, %v3385
      %v3387 = vpop.f32.mrf.mxu0
      %v3388 = vadd.f32 %v2750, %v3387
      %3389 = vmatmul.bf16.gmra.mxu0 %v2701
      %v3390 = vpop.f32.mrf.mxu0
      %v3391 = vadd.f32 %v2750, %v3390
      %v3392 = vpop.f32.mrf.mxu0
      %v3393 = vadd.f32 %v2750, %v3392
      %3394 = vmatmul.bf16.gmra.mxu0 %v2703
      %v3395 = vpop.f32.mrf.mxu0
      %v3396 = vadd.f32 %v2750, %v3395
      %v3397 = vpop.f32.mrf.mxu0
      %v3398 = vadd.f32 %v2750, %v3397
      %3399 = vmatmul.bf16.gmra.mxu0 %v2705
      %v3400 = vpop.f32.mrf.mxu0
      %v3401 = vadd.f32 %v2750, %v3400
      %v3402 = vpop.f32.mrf.mxu0
      %v3403 = vadd.f32 %v2750, %v3402
      %3404 = vmatmul.bf16.gmra.mxu0 %v2707
      %v3405 = vpop.f32.mrf.mxu0
      %v3406 = vadd.f32 %v2750, %v3405
      %v3407 = vpop.f32.mrf.mxu0
      %v3408 = vadd.f32 %v2750, %v3407
      %3409 = vmatmul.bf16.gmra.mxu0 %v2709
      %v3410 = vpop.f32.mrf.mxu0
      %v3411 = vadd.f32 %v2750, %v3410
      %v3412 = vpop.f32.mrf.mxu0
      %v3413 = vadd.f32 %v2750, %v3412
      %3414 = vmatmul.bf16.gmra.mxu0 %v2711
      %v3415 = vpop.f32.mrf.mxu0
      %v3416 = vadd.f32 %v2750, %v3415
      %v3417 = vpop.f32.mrf.mxu0
      %v3418 = vadd.f32 %v2750, %v3417
      %3419 = vdwg.mxu0
      %3420 = vmatpush.bf16.msra.mxu0 %v2880
      %3421 = vmatpush.bf16.msra.mxu0 %v2878
      %3422 = vmatpush.bf16.msra.mxu0 %v2876
      %3423 = vmatpush.bf16.msra.mxu0 %v2874
      %3424 = vmatpush.bf16.msra.mxu0 %v2872
      %3425 = vmatpush.bf16.msra.mxu0 %v2870
      %3426 = vmatpush.bf16.msra.mxu0 %v2868
      %3427 = vmatpush.bf16.msra.mxu0 %v2866
      %3428 = vmatmul.bf16.gmra.mxu0 %v2650
      %v3429 = vpop.f32.mrf.mxu0
      %v3430 = vadd.f32 %v3261, %v3429
      %v3431 = vpop.f32.mrf.mxu0
      %v3432 = vadd.f32 %v3263, %v3431
      %3433 = vmatmul.bf16.gmra.mxu0 %v2652
      %v3434 = vpop.f32.mrf.mxu0
      %v3435 = vadd.f32 %v3266, %v3434
      %v3436 = vpop.f32.mrf.mxu0
      %v3437 = vadd.f32 %v3268, %v3436
      %3438 = vmatmul.bf16.gmra.mxu0 %v2654
      %v3439 = vpop.f32.mrf.mxu0
      %v3440 = vadd.f32 %v3271, %v3439
      %v3441 = vpop.f32.mrf.mxu0
      %v3442 = vadd.f32 %v3273, %v3441
      %3443 = vmatmul.bf16.gmra.mxu0 %v2656
      %v3444 = vpop.f32.mrf.mxu0
      %v3445 = vadd.f32 %v3276, %v3444
      %v3446 = vpop.f32.mrf.mxu0
      %v3447 = vadd.f32 %v3278, %v3446
      %3448 = vmatmul.bf16.gmra.mxu0 %v2658
      %v3449 = vpop.f32.mrf.mxu0
      %v3450 = vadd.f32 %v3281, %v3449
      %v3451 = vpop.f32.mrf.mxu0
      %v3452 = vadd.f32 %v3283, %v3451
      %3453 = vmatmul.bf16.gmra.mxu0 %v2660
      %v3454 = vpop.f32.mrf.mxu0
      %v3455 = vadd.f32 %v3286, %v3454
      %v3456 = vpop.f32.mrf.mxu0
      %v3457 = vadd.f32 %v3288, %v3456
      %3458 = vmatmul.bf16.gmra.mxu0 %v2662
      %v3459 = vpop.f32.mrf.mxu0
      %v3460 = vadd.f32 %v3291, %v3459
      %v3461 = vpop.f32.mrf.mxu0
      %v3462 = vadd.f32 %v3293, %v3461
      %3463 = vmatmul.bf16.gmra.mxu0 %v2664
      %v3464 = vpop.f32.mrf.mxu0
      %v3465 = vadd.f32 %v3296, %v3464
      %v3466 = vpop.f32.mrf.mxu0
      %v3467 = vadd.f32 %v3298, %v3466
      %3468 = vmatmul.bf16.gmra.mxu0 %v2666
      %v3469 = vpop.f32.mrf.mxu0
      %v3470 = vadd.f32 %v3301, %v3469
      %v3471 = vpop.f32.mrf.mxu0
      %v3472 = vadd.f32 %v3303, %v3471
      %3473 = vmatmul.bf16.gmra.mxu0 %v2668
      %v3474 = vpop.f32.mrf.mxu0
      %v3475 = vadd.f32 %v3306, %v3474
      %v3476 = vpop.f32.mrf.mxu0
      %v3477 = vadd.f32 %v3308, %v3476
      %3478 = vmatmul.bf16.gmra.mxu0 %v2670
      %v3479 = vpop.f32.mrf.mxu0
      %v3480 = vadd.f32 %v3311, %v3479
      %v3481 = vpop.f32.mrf.mxu0
      %v3482 = vadd.f32 %v3313, %v3481
      %3483 = vmatmul.bf16.gmra.mxu0 %v2672
      %v3484 = vpop.f32.mrf.mxu0
      %v3485 = vadd.f32 %v3316, %v3484
      %v3486 = vpop.f32.mrf.mxu0
      %v3487 = vadd.f32 %v3318, %v3486
      %3488 = vmatmul.bf16.gmra.mxu0 %v2674
      %v3489 = vpop.f32.mrf.mxu0
      %v3490 = vadd.f32 %v3321, %v3489
      %v3491 = vpop.f32.mrf.mxu0
      %v3492 = vadd.f32 %v3323, %v3491
      %3493 = vmatmul.bf16.gmra.mxu0 %v2676
      %v3494 = vpop.f32.mrf.mxu0
      %v3495 = vadd.f32 %v3326, %v3494
      %v3496 = vpop.f32.mrf.mxu0
      %v3497 = vadd.f32 %v3328, %v3496
      %3498 = vmatmul.bf16.gmra.mxu0 %v2678
      %v3499 = vpop.f32.mrf.mxu0
      %v3500 = vadd.f32 %v3331, %v3499
      %v3501 = vpop.f32.mrf.mxu0
      %v3502 = vadd.f32 %v3333, %v3501
      %3503 = vmatmul.bf16.gmra.mxu0 %v2680
      %v3504 = vpop.f32.mrf.mxu0
      %v3505 = vadd.f32 %v3336, %v3504
      %v3506 = vpop.f32.mrf.mxu0
      %v3507 = vadd.f32 %v3338, %v3506
      %3508 = vmatmul.bf16.gmra.mxu0 %v2682
      %v3509 = vpop.f32.mrf.mxu0
      %v3510 = vadd.f32 %v3341, %v3509
      %v3511 = vpop.f32.mrf.mxu0
      %v3512 = vadd.f32 %v3343, %v3511
      %3513 = vmatmul.bf16.gmra.mxu0 %v2684
      %v3514 = vpop.f32.mrf.mxu0
      %v3515 = vadd.f32 %v3346, %v3514
      %v3516 = vpop.f32.mrf.mxu0
      %v3517 = vadd.f32 %v3348, %v3516
      %3518 = vmatmul.bf16.gmra.mxu0 %v2686
      %v3519 = vpop.f32.mrf.mxu0
      %v3520 = vadd.f32 %v3351, %v3519
      %v3521 = vpop.f32.mrf.mxu0
      %v3522 = vadd.f32 %v3353, %v3521
      %3523 = vmatmul.bf16.gmra.mxu0 %v2688
      %v3524 = vpop.f32.mrf.mxu0
      %v3525 = vadd.f32 %v3356, %v3524
      %v3526 = vpop.f32.mrf.mxu0
      %v3527 = vadd.f32 %v3358, %v3526
      %3528 = vmatmul.bf16.gmra.mxu0 %v2690
      %v3529 = vpop.f32.mrf.mxu0
      %v3530 = vadd.f32 %v3361, %v3529
      %v3531 = vpop.f32.mrf.mxu0
      %v3532 = vadd.f32 %v3363, %v3531
      %3533 = vmatmul.bf16.gmra.mxu0 %v2692
      %v3534 = vpop.f32.mrf.mxu0
      %v3535 = vadd.f32 %v3366, %v3534
      %v3536 = vpop.f32.mrf.mxu0
      %v3537 = vadd.f32 %v3368, %v3536
      %3538 = vmatmul.bf16.gmra.mxu0 %v2694
      %v3539 = vpop.f32.mrf.mxu0
      %v3540 = vadd.f32 %v3371, %v3539
      %v3541 = vpop.f32.mrf.mxu0
      %v3542 = vadd.f32 %v3373, %v3541
      %3543 = vmatmul.bf16.gmra.mxu0 %v2696
      %v3544 = vpop.f32.mrf.mxu0
      %v3545 = vadd.f32 %v3376, %v3544
      %v3546 = vpop.f32.mrf.mxu0
      %v3547 = vadd.f32 %v3378, %v3546
      %3548 = vmatmul.bf16.gmra.mxu0 %v2698
      %v3549 = vpop.f32.mrf.mxu0
      %v3550 = vadd.f32 %v3381, %v3549
      %v3551 = vpop.f32.mrf.mxu0
      %v3552 = vadd.f32 %v3383, %v3551
      %3553 = vmatmul.bf16.gmra.mxu0 %v2700
      %v3554 = vpop.f32.mrf.mxu0
      %v3555 = vadd.f32 %v3386, %v3554
      %v3556 = vpop.f32.mrf.mxu0
      %v3557 = vadd.f32 %v3388, %v3556
      %3558 = vmatmul.bf16.gmra.mxu0 %v2702
      %v3559 = vpop.f32.mrf.mxu0
      %v3560 = vadd.f32 %v3391, %v3559
      %v3561 = vpop.f32.mrf.mxu0
      %v3562 = vadd.f32 %v3393, %v3561
      %3563 = vmatmul.bf16.gmra.mxu0 %v2704
      %v3564 = vpop.f32.mrf.mxu0
      %v3565 = vadd.f32 %v3396, %v3564
      %v3566 = vpop.f32.mrf.mxu0
      %v3567 = vadd.f32 %v3398, %v3566
      %3568 = vmatmul.bf16.gmra.mxu0 %v2706
      %v3569 = vpop.f32.mrf.mxu0
      %v3570 = vadd.f32 %v3401, %v3569
      %v3571 = vpop.f32.mrf.mxu0
      %v3572 = vadd.f32 %v3403, %v3571
      %3573 = vmatmul.bf16.gmra.mxu0 %v2708
      %v3574 = vpop.f32.mrf.mxu0
      %v3575 = vadd.f32 %v3406, %v3574
      %v3576 = vpop.f32.mrf.mxu0
      %v3577 = vadd.f32 %v3408, %v3576
      %3578 = vmatmul.bf16.gmra.mxu0 %v2710
      %v3579 = vpop.f32.mrf.mxu0
      %v3580 = vadd.f32 %v3411, %v3579
      %v3581 = vpop.f32.mrf.mxu0
      %v3582 = vadd.f32 %v3413, %v3581
      %3583 = vmatmul.bf16.gmra.mxu0 %v2712
      %v3584 = vpop.f32.mrf.mxu0
      %v3585 = vadd.f32 %v3416, %v3584
      %v3586 = vpop.f32.mrf.mxu0
      %v3587 = vadd.f32 %v3418, %v3586
      %3588 = vdwg.mxu0
      %v3589 = vmax.f32 %v3092, 0.0
      %v3590 = vmax.f32 %v3430, 0.0
      %v3591 = vmax.f32 %v3094, 0.0
      %v3592 = vmax.f32 %v3432, 0.0
      %v3593 = vmax.f32 %v3097, 0.0
      %v3594 = vmax.f32 %v3435, 0.0
      %v3595 = vmax.f32 %v3099, 0.0
      %v3596 = vmax.f32 %v3437, 0.0
      %v3597 = vmax.f32 %v3102, 0.0
      %v3598 = vmax.f32 %v3440, 0.0
      %v3599 = vmax.f32 %v3104, 0.0
      %v3600 = vmax.f32 %v3442, 0.0
      %v3601 = vmax.f32 %v3107, 0.0
      %v3602 = vmax.f32 %v3445, 0.0
      %v3603 = vmax.f32 %v3109, 0.0
      %v3604 = vmax.f32 %v3447, 0.0
      %v3605 = vmax.f32 %v3112, 0.0
      %v3606 = vmax.f32 %v3450, 0.0
      %v3607 = vmax.f32 %v3114, 0.0
      %v3608 = vmax.f32 %v3452, 0.0
      %v3609 = vmax.f32 %v3117, 0.0
      %v3610 = vmax.f32 %v3455, 0.0
      %v3611 = vmax.f32 %v3119, 0.0
      %v3612 = vmax.f32 %v3457, 0.0
      %v3613 = vmax.f32 %v3122, 0.0
      %v3614 = vmax.f32 %v3460, 0.0
      %v3615 = vmax.f32 %v3124, 0.0
      %v3616 = vmax.f32 %v3462, 0.0
      %v3617 = vmax.f32 %v3127, 0.0
      %v3618 = vmax.f32 %v3465, 0.0
      %v3619 = vmax.f32 %v3129, 0.0
      %v3620 = vmax.f32 %v3467, 0.0
      %v3621 = vmax.f32 %v3132, 0.0
      %v3622 = vmax.f32 %v3470, 0.0
      %v3623 = vmax.f32 %v3134, 0.0
      %v3624 = vmax.f32 %v3472, 0.0
      %v3625 = vmax.f32 %v3137, 0.0
      %v3626 = vmax.f32 %v3475, 0.0
      %v3627 = vmax.f32 %v3139, 0.0
      %v3628 = vmax.f32 %v3477, 0.0
      %v3629 = vmax.f32 %v3142, 0.0
      %v3630 = vmax.f32 %v3480, 0.0
      %v3631 = vmax.f32 %v3144, 0.0
      %v3632 = vmax.f32 %v3482, 0.0
      %v3633 = vmax.f32 %v3147, 0.0
      %v3634 = vmax.f32 %v3485, 0.0
      %v3635 = vmax.f32 %v3149, 0.0
      %v3636 = vmax.f32 %v3487, 0.0
      %v3637 = vmax.f32 %v3152, 0.0
      %v3638 = vmax.f32 %v3490, 0.0
      %v3639 = vmax.f32 %v3154, 0.0
      %v3640 = vmax.f32 %v3492, 0.0
      %v3641 = vmax.f32 %v3157, 0.0
      %v3642 = vmax.f32 %v3495, 0.0
      %v3643 = vmax.f32 %v3159, 0.0
      %v3644 = vmax.f32 %v3497, 0.0
      %v3645 = vmax.f32 %v3162, 0.0
      %v3646 = vmax.f32 %v3500, 0.0
      %v3647 = vmax.f32 %v3164, 0.0
      %v3648 = vmax.f32 %v3502, 0.0
      %v3649 = vmax.f32 %v3167, 0.0
      %v3650 = vmax.f32 %v3505, 0.0
      %v3651 = vmax.f32 %v3169, 0.0
      %v3652 = vmax.f32 %v3507, 0.0
      %v3653 = vmax.f32 %v3172, 0.0
      %v3654 = vmax.f32 %v3510, 0.0
      %v3655 = vmax.f32 %v3174, 0.0
      %v3656 = vmax.f32 %v3512, 0.0
      %v3657 = vmax.f32 %v3177, 0.0
      %v3658 = vmax.f32 %v3515, 0.0
      %v3659 = vmax.f32 %v3179, 0.0
      %v3660 = vmax.f32 %v3517, 0.0
      %v3661 = vmax.f32 %v3182, 0.0
      %v3662 = vmax.f32 %v3520, 0.0
      %v3663 = vmax.f32 %v3184, 0.0
      %v3664 = vmax.f32 %v3522, 0.0
      %v3665 = vmax.f32 %v3187, 0.0
      %v3666 = vmax.f32 %v3525, 0.0
      %v3667 = vmax.f32 %v3189, 0.0
      %v3668 = vmax.f32 %v3527, 0.0
      %v3669 = vmax.f32 %v3192, 0.0
      %v3670 = vmax.f32 %v3530, 0.0
      %v3671 = vmax.f32 %v3194, 0.0
      %v3672 = vmax.f32 %v3532, 0.0
      %v3673 = vmax.f32 %v3197, 0.0
      %v3674 = vmax.f32 %v3535, 0.0
      %v3675 = vmax.f32 %v3199, 0.0
      %v3676 = vmax.f32 %v3537, 0.0
      %v3677 = vmax.f32 %v3202, 0.0
      %v3678 = vmax.f32 %v3540, 0.0
      %v3679 = vmax.f32 %v3204, 0.0
      %v3680 = vmax.f32 %v3542, 0.0
      %v3681 = vmax.f32 %v3207, 0.0
      %v3682 = vmax.f32 %v3545, 0.0
      %v3683 = vmax.f32 %v3209, 0.0
      %v3684 = vmax.f32 %v3547, 0.0
      %v3685 = vmax.f32 %v3212, 0.0
      %v3686 = vmax.f32 %v3550, 0.0
      %v3687 = vmax.f32 %v3214, 0.0
      %v3688 = vmax.f32 %v3552, 0.0
      %v3689 = vmax.f32 %v3217, 0.0
      %v3690 = vmax.f32 %v3555, 0.0
      %v3691 = vmax.f32 %v3219, 0.0
      %v3692 = vmax.f32 %v3557, 0.0
      %v3693 = vmax.f32 %v3222, 0.0
      %v3694 = vmax.f32 %v3560, 0.0
      %v3695 = vmax.f32 %v3224, 0.0
      %v3696 = vmax.f32 %v3562, 0.0
      %v3697 = vmax.f32 %v3227, 0.0
      %v3698 = vmax.f32 %v3565, 0.0
      %v3699 = vmax.f32 %v3229, 0.0
      %v3700 = vmax.f32 %v3567, 0.0
      %v3701 = vmax.f32 %v3232, 0.0
      %v3702 = vmax.f32 %v3570, 0.0
      %v3703 = vmax.f32 %v3234, 0.0
      %v3704 = vmax.f32 %v3572, 0.0
      %v3705 = vmax.f32 %v3237, 0.0
      %v3706 = vmax.f32 %v3575, 0.0
      %v3707 = vmax.f32 %v3239, 0.0
      %v3708 = vmax.f32 %v3577, 0.0
      %v3709 = vmax.f32 %v3242, 0.0
      %v3710 = vmax.f32 %v3580, 0.0
      %v3711 = vmax.f32 %v3244, 0.0
      %v3712 = vmax.f32 %v3582, 0.0
      %v3713 = vmax.f32 %v3247, 0.0
      %v3714 = vmax.f32 %v3585, 0.0
      %v3715 = vmax.f32 %v3249, 0.0
      %v3716 = vmax.f32 %v3587, 0.0
      %v3717 = vpack.c.bf16 %v3591, %v3589
      %v3718 = vpack.c.bf16 %v3592, %v3590
      %v3719 = vpack.c.bf16 %v3595, %v3593
      %v3720 = vpack.c.bf16 %v3596, %v3594
      %v3721 = vpack.c.bf16 %v3599, %v3597
      %v3722 = vpack.c.bf16 %v3600, %v3598
      %v3723 = vpack.c.bf16 %v3603, %v3601
      %v3724 = vpack.c.bf16 %v3604, %v3602
      %v3725 = vpack.c.bf16 %v3607, %v3605
      %v3726 = vpack.c.bf16 %v3608, %v3606
      %v3727 = vpack.c.bf16 %v3611, %v3609
      %v3728 = vpack.c.bf16 %v3612, %v3610
      %v3729 = vpack.c.bf16 %v3615, %v3613
      %v3730 = vpack.c.bf16 %v3616, %v3614
      %v3731 = vpack.c.bf16 %v3619, %v3617
      %v3732 = vpack.c.bf16 %v3620, %v3618
      %v3733 = vpack.c.bf16 %v3623, %v3621
      %v3734 = vpack.c.bf16 %v3624, %v3622
      %v3735 = vpack.c.bf16 %v3627, %v3625
      %v3736 = vpack.c.bf16 %v3628, %v3626
      %v3737 = vpack.c.bf16 %v3631, %v3629
      %v3738 = vpack.c.bf16 %v3632, %v3630
      %v3739 = vpack.c.bf16 %v3635, %v3633
      %v3740 = vpack.c.bf16 %v3636, %v3634
      %v3741 = vpack.c.bf16 %v3639, %v3637
      %v3742 = vpack.c.bf16 %v3640, %v3638
      %v3743 = vpack.c.bf16 %v3643, %v3641
      %v3744 = vpack.c.bf16 %v3644, %v3642
      %v3745 = vpack.c.bf16 %v3647, %v3645
      %v3746 = vpack.c.bf16 %v3648, %v3646
      %v3747 = vpack.c.bf16 %v3651, %v3649
      %v3748 = vpack.c.bf16 %v3652, %v3650
      %v3749 = vpack.c.bf16 %v3655, %v3653
      %v3750 = vpack.c.bf16 %v3656, %v3654
      %v3751 = vpack.c.bf16 %v3659, %v3657
      %v3752 = vpack.c.bf16 %v3660, %v3658
      %v3753 = vpack.c.bf16 %v3663, %v3661
      %v3754 = vpack.c.bf16 %v3664, %v3662
      %v3755 = vpack.c.bf16 %v3667, %v3665
      %v3756 = vpack.c.bf16 %v3668, %v3666
      %v3757 = vpack.c.bf16 %v3671, %v3669
      %v3758 = vpack.c.bf16 %v3672, %v3670
      %v3759 = vpack.c.bf16 %v3675, %v3673
      %v3760 = vpack.c.bf16 %v3676, %v3674
      %v3761 = vpack.c.bf16 %v3679, %v3677
      %v3762 = vpack.c.bf16 %v3680, %v3678
      %v3763 = vpack.c.bf16 %v3683, %v3681
      %v3764 = vpack.c.bf16 %v3684, %v3682
      %v3765 = vpack.c.bf16 %v3687, %v3685
      %v3766 = vpack.c.bf16 %v3688, %v3686
      %v3767 = vpack.c.bf16 %v3691, %v3689
      %v3768 = vpack.c.bf16 %v3692, %v3690
      %v3769 = vpack.c.bf16 %v3695, %v3693
      %v3770 = vpack.c.bf16 %v3696, %v3694
      %v3771 = vpack.c.bf16 %v3699, %v3697
      %v3772 = vpack.c.bf16 %v3700, %v3698
      %v3773 = vpack.c.bf16 %v3703, %v3701
      %v3774 = vpack.c.bf16 %v3704, %v3702
      %v3775 = vpack.c.bf16 %v3707, %v3705
      %v3776 = vpack.c.bf16 %v3708, %v3706
      %v3777 = vpack.c.bf16 %v3711, %v3709
      %v3778 = vpack.c.bf16 %v3712, %v3710
      %v3779 = vpack.c.bf16 %v3715, %v3713
      %v3780 = vpack.c.bf16 %v3716, %v3714
      %s3781 = scalar_lea.vmem %s3, 512
      %v3782 = vld [vmem:[%s3781] sm:$0xff]
      %v3783 = vld [vmem:[%s3781 + $0x8] sm:$0xff]
      %v3784 = vld [vmem:[%s3781 + $0x10] sm:$0xff]
      %v3785 = vld [vmem:[%s3781 + $0x18] sm:$0xff]
      %v3786 = vld [vmem:[%s3781 + $0x20] sm:$0xff]
      %v3787 = vld [vmem:[%s3781 + $0x28] sm:$0xff]
      %v3788 = vld [vmem:[%s3781 + $0x30] sm:$0xff]
      %v3789 = vld [vmem:[%s3781 + $0x38] sm:$0xff]
      %v3790 = vld [vmem:[%s3781 + $0x40] sm:$0xff]
      %v3791 = vld [vmem:[%s3781 + $0x48] sm:$0xff]
      %v3792 = vld [vmem:[%s3781 + $0x50] sm:$0xff]
      %v3793 = vld [vmem:[%s3781 + $0x58] sm:$0xff]
      %v3794 = vld [vmem:[%s3781 + $0x60] sm:$0xff]
      %v3795 = vld [vmem:[%s3781 + $0x68] sm:$0xff]
      %v3796 = vld [vmem:[%s3781 + $0x70] sm:$0xff]
      %v3797 = vld [vmem:[%s3781 + $0x78] sm:$0xff]
      %v3798 = vld [vmem:[%s3781 + $0x80] sm:$0xff]
      %v3799 = vld [vmem:[%s3781 + $0x88] sm:$0xff]
      %v3800 = vld [vmem:[%s3781 + $0x90] sm:$0xff]
      %v3801 = vld [vmem:[%s3781 + $0x98] sm:$0xff]
      %v3802 = vld [vmem:[%s3781 + $0xa0] sm:$0xff]
      %v3803 = vld [vmem:[%s3781 + $0xa8] sm:$0xff]
      %v3804 = vld [vmem:[%s3781 + $0xb0] sm:$0xff]
      %v3805 = vld [vmem:[%s3781 + $0xb8] sm:$0xff]
      %v3806 = vld [vmem:[%s3781 + $0xc0] sm:$0xff]
      %v3807 = vld [vmem:[%s3781 + $0xc8] sm:$0xff]
      %v3808 = vld [vmem:[%s3781 + $0xd0] sm:$0xff]
      %v3809 = vld [vmem:[%s3781 + $0xd8] sm:$0xff]
      %v3810 = vld [vmem:[%s3781 + $0xe0] sm:$0xff]
      %v3811 = vld [vmem:[%s3781 + $0xe8] sm:$0xff]
      %v3812 = vld [vmem:[%s3781 + $0xf0] sm:$0xff]
      %v3813 = vld [vmem:[%s3781 + $0xf8] sm:$0xff]
      %s3814 = scalar_lea.vmem %s4, 4
      %v3815 = vld [vmem:[%s3814] sm:$0x3]
      %v3817 = vperm.slane %v3815, 0
      %v3818 = vperm.slane %v3815, 1
      %v3853 = vunpack.c.l.b16 %v3782
      %v3854 = vunpack.c.h.b16 %v3782
      %v3855 = vunpack.c.l.b16 %v3783
      %v3856 = vunpack.c.h.b16 %v3783
      %v3857 = vunpack.c.l.b16 %v3784
      %v3858 = vunpack.c.h.b16 %v3784
      %v3859 = vunpack.c.l.b16 %v3785
      %v3860 = vunpack.c.h.b16 %v3785
      %v3861 = vunpack.c.l.b16 %v3786
      %v3862 = vunpack.c.h.b16 %v3786
      %v3863 = vunpack.c.l.b16 %v3787
      %v3864 = vunpack.c.h.b16 %v3787
      %v3865 = vunpack.c.l.b16 %v3788
      %v3866 = vunpack.c.h.b16 %v3788
      %v3867 = vunpack.c.l.b16 %v3789
      %v3868 = vunpack.c.h.b16 %v3789
      %v3869 = vunpack.c.l.b16 %v3790
      %v3870 = vunpack.c.h.b16 %v3790
      %v3871 = vunpack.c.l.b16 %v3791
      %v3872 = vunpack.c.h.b16 %v3791
      %v3873 = vunpack.c.l.b16 %v3792
      %v3874 = vunpack.c.h.b16 %v3792
      %v3875 = vunpack.c.l.b16 %v3793
      %v3876 = vunpack.c.h.b16 %v3793
      %v3877 = vunpack.c.l.b16 %v3794
      %v3878 = vunpack.c.h.b16 %v3794
      %v3879 = vunpack.c.l.b16 %v3795
      %v3880 = vunpack.c.h.b16 %v3795
      %v3881 = vunpack.c.l.b16 %v3796
      %v3882 = vunpack.c.h.b16 %v3796
      %v3883 = vunpack.c.l.b16 %v3797
      %v3884 = vunpack.c.h.b16 %v3797
      %v3885 = vunpack.c.l.b16 %v3798
      %v3886 = vunpack.c.h.b16 %v3798
      %v3887 = vunpack.c.l.b16 %v3799
      %v3888 = vunpack.c.h.b16 %v3799
      %v3889 = vunpack.c.l.b16 %v3800
      %v3890 = vunpack.c.h.b16 %v3800
      %v3891 = vunpack.c.l.b16 %v3801
      %v3892 = vunpack.c.h.b16 %v3801
      %v3893 = vunpack.c.l.b16 %v3802
      %v3894 = vunpack.c.h.b16 %v3802
      %v3895 = vunpack.c.l.b16 %v3803
      %v3896 = vunpack.c.h.b16 %v3803
      %v3897 = vunpack.c.l.b16 %v3804
      %v3898 = vunpack.c.h.b16 %v3804
      %v3899 = vunpack.c.l.b16 %v3805
      %v3900 = vunpack.c.h.b16 %v3805
      %v3901 = vunpack.c.l.b16 %v3806
      %v3902 = vunpack.c.h.b16 %v3806
      %v3903 = vunpack.c.l.b16 %v3807
      %v3904 = vunpack.c.h.b16 %v3807
      %v3905 = vunpack.c.l.b16 %v3808
      %v3906 = vunpack.c.h.b16 %v3808
      %v3907 = vunpack.c.l.b16 %v3809
      %v3908 = vunpack.c.h.b16 %v3809
      %v3909 = vunpack.c.l.b16 %v3810
      %v3910 = vunpack.c.h.b16 %v3810
      %v3911 = vunpack.c.l.b16 %v3811
      %v3912 = vunpack.c.h.b16 %v3811
      %v3913 = vunpack.c.l.b16 %v3812
      %v3914 = vunpack.c.h.b16 %v3812
      %v3915 = vunpack.c.l.b16 %v3813
      %v3916 = vunpack.c.h.b16 %v3813
      %v3917 = vpack.c.b16 %v3855, %v3853
      %v3918 = vpack.c.b16 %v3856, %v3854
      %v3919 = vpack.c.b16 %v3859, %v3857
      %v3920 = vpack.c.b16 %v3860, %v3858
      %v3921 = vpack.c.b16 %v3863, %v3861
      %v3922 = vpack.c.b16 %v3864, %v3862
      %v3923 = vpack.c.b16 %v3867, %v3865
      %v3924 = vpack.c.b16 %v3868, %v3866
      %v3925 = vpack.c.b16 %v3871, %v3869
      %v3926 = vpack.c.b16 %v3872, %v3870
      %v3927 = vpack.c.b16 %v3875, %v3873
      %v3928 = vpack.c.b16 %v3876, %v3874
      %v3929 = vpack.c.b16 %v3879, %v3877
      %v3930 = vpack.c.b16 %v3880, %v3878
      %v3931 = vpack.c.b16 %v3883, %v3881
      %v3932 = vpack.c.b16 %v3884, %v3882
      %v3933 = vpack.c.b16 %v3887, %v3885
      %v3934 = vpack.c.b16 %v3888, %v3886
      %v3935 = vpack.c.b16 %v3891, %v3889
      %v3936 = vpack.c.b16 %v3892, %v3890
      %v3937 = vpack.c.b16 %v3895, %v3893
      %v3938 = vpack.c.b16 %v3896, %v3894
      %v3939 = vpack.c.b16 %v3899, %v3897
      %v3940 = vpack.c.b16 %v3900, %v3898
      %v3941 = vpack.c.b16 %v3903, %v3901
      %v3942 = vpack.c.b16 %v3904, %v3902
      %v3943 = vpack.c.b16 %v3907, %v3905
      %v3944 = vpack.c.b16 %v3908, %v3906
      %v3945 = vpack.c.b16 %v3911, %v3909
      %v3946 = vpack.c.b16 %v3912, %v3910
      %v3947 = vpack.c.b16 %v3915, %v3913
      %v3948 = vpack.c.b16 %v3916, %v3914
      %3981 = vmatpush.bf16.msra.mxu0 %v3931
      %3982 = vmatpush.bf16.msra.mxu0 %v3929
      %3983 = vmatpush.bf16.msra.mxu0 %v3927
      %3984 = vmatpush.bf16.msra.mxu0 %v3925
      %3985 = vmatpush.bf16.msra.mxu0 %v3923
      %3986 = vmatpush.bf16.msra.mxu0 %v3921
      %3987 = vmatpush.bf16.msra.mxu0 %v3919
      %3988 = vmatpush.bf16.msra.mxu0 %v3917
      %3989 = vmatmul.bf16.gmra.mxu0 %v3717
      %v3990 = vpop.f32.mrf.mxu0
      %v3991 = vadd.f32 %v3817, %v3990
      %v3992 = vpop.f32.mrf.mxu0
      %v3993 = vadd.f32 %v3817, %v3992
      %3994 = vmatmul.bf16.gmra.mxu0 %v3719
      %v3995 = vpop.f32.mrf.mxu0
      %v3996 = vadd.f32 %v3817, %v3995
      %v3997 = vpop.f32.mrf.mxu0
      %v3998 = vadd.f32 %v3817, %v3997
      %3999 = vmatmul.bf16.gmra.mxu0 %v3721
      %v4000 = vpop.f32.mrf.mxu0
      %v4001 = vadd.f32 %v3817, %v4000
      %v4002 = vpop.f32.mrf.mxu0
      %v4003 = vadd.f32 %v3817, %v4002
      %4004 = vmatmul.bf16.gmra.mxu0 %v3723
      %v4005 = vpop.f32.mrf.mxu0
      %v4006 = vadd.f32 %v3817, %v4005
      %v4007 = vpop.f32.mrf.mxu0
      %v4008 = vadd.f32 %v3817, %v4007
      %4009 = vmatmul.bf16.gmra.mxu0 %v3725
      %v4010 = vpop.f32.mrf.mxu0
      %v4011 = vadd.f32 %v3817, %v4010
      %v4012 = vpop.f32.mrf.mxu0
      %v4013 = vadd.f32 %v3817, %v4012
      %4014 = vmatmul.bf16.gmra.mxu0 %v3727
      %v4015 = vpop.f32.mrf.mxu0
      %v4016 = vadd.f32 %v3817, %v4015
      %v4017 = vpop.f32.mrf.mxu0
      %v4018 = vadd.f32 %v3817, %v4017
      %4019 = vmatmul.bf16.gmra.mxu0 %v3729
      %v4020 = vpop.f32.mrf.mxu0
      %v4021 = vadd.f32 %v3817, %v4020
      %v4022 = vpop.f32.mrf.mxu0
      %v4023 = vadd.f32 %v3817, %v4022
      %4024 = vmatmul.bf16.gmra.mxu0 %v3731
      %v4025 = vpop.f32.mrf.mxu0
      %v4026 = vadd.f32 %v3817, %v4025
      %v4027 = vpop.f32.mrf.mxu0
      %v4028 = vadd.f32 %v3817, %v4027
      %4029 = vmatmul.bf16.gmra.mxu0 %v3733
      %v4030 = vpop.f32.mrf.mxu0
      %v4031 = vadd.f32 %v3817, %v4030
      %v4032 = vpop.f32.mrf.mxu0
      %v4033 = vadd.f32 %v3817, %v4032
      %4034 = vmatmul.bf16.gmra.mxu0 %v3735
      %v4035 = vpop.f32.mrf.mxu0
      %v4036 = vadd.f32 %v3817, %v4035
      %v4037 = vpop.f32.mrf.mxu0
      %v4038 = vadd.f32 %v3817, %v4037
      %4039 = vmatmul.bf16.gmra.mxu0 %v3737
      %v4040 = vpop.f32.mrf.mxu0
      %v4041 = vadd.f32 %v3817, %v4040
      %v4042 = vpop.f32.mrf.mxu0
      %v4043 = vadd.f32 %v3817, %v4042
      %4044 = vmatmul.bf16.gmra.mxu0 %v3739
      %v4045 = vpop.f32.mrf.mxu0
      %v4046 = vadd.f32 %v3817, %v4045
      %v4047 = vpop.f32.mrf.mxu0
      %v4048 = vadd.f32 %v3817, %v4047
      %4049 = vmatmul.bf16.gmra.mxu0 %v3741
      %v4050 = vpop.f32.mrf.mxu0
      %v4051 = vadd.f32 %v3817, %v4050
      %v4052 = vpop.f32.mrf.mxu0
      %v4053 = vadd.f32 %v3817, %v4052
      %4054 = vmatmul.bf16.gmra.mxu0 %v3743
      %v4055 = vpop.f32.mrf.mxu0
      %v4056 = vadd.f32 %v3817, %v4055
      %v4057 = vpop.f32.mrf.mxu0
      %v4058 = vadd.f32 %v3817, %v4057
      %4059 = vmatmul.bf16.gmra.mxu0 %v3745
      %v4060 = vpop.f32.mrf.mxu0
      %v4061 = vadd.f32 %v3817, %v4060
      %v4062 = vpop.f32.mrf.mxu0
      %v4063 = vadd.f32 %v3817, %v4062
      %4064 = vmatmul.bf16.gmra.mxu0 %v3747
      %v4065 = vpop.f32.mrf.mxu0
      %v4066 = vadd.f32 %v3817, %v4065
      %v4067 = vpop.f32.mrf.mxu0
      %v4068 = vadd.f32 %v3817, %v4067
      %4069 = vmatmul.bf16.gmra.mxu0 %v3749
      %v4070 = vpop.f32.mrf.mxu0
      %v4071 = vadd.f32 %v3817, %v4070
      %v4072 = vpop.f32.mrf.mxu0
      %v4073 = vadd.f32 %v3817, %v4072
      %4074 = vmatmul.bf16.gmra.mxu0 %v3751
      %v4075 = vpop.f32.mrf.mxu0
      %v4076 = vadd.f32 %v3817, %v4075
      %v4077 = vpop.f32.mrf.mxu0
      %v4078 = vadd.f32 %v3817, %v4077
      %4079 = vmatmul.bf16.gmra.mxu0 %v3753
      %v4080 = vpop.f32.mrf.mxu0
      %v4081 = vadd.f32 %v3817, %v4080
      %v4082 = vpop.f32.mrf.mxu0
      %v4083 = vadd.f32 %v3817, %v4082
      %4084 = vmatmul.bf16.gmra.mxu0 %v3755
      %v4085 = vpop.f32.mrf.mxu0
      %v4086 = vadd.f32 %v3817, %v4085
      %v4087 = vpop.f32.mrf.mxu0
      %v4088 = vadd.f32 %v3817, %v4087
      %4089 = vmatmul.bf16.gmra.mxu0 %v3757
      %v4090 = vpop.f32.mrf.mxu0
      %v4091 = vadd.f32 %v3817, %v4090
      %v4092 = vpop.f32.mrf.mxu0
      %v4093 = vadd.f32 %v3817, %v4092
      %4094 = vmatmul.bf16.gmra.mxu0 %v3759
      %v4095 = vpop.f32.mrf.mxu0
      %v4096 = vadd.f32 %v3817, %v4095
      %v4097 = vpop.f32.mrf.mxu0
      %v4098 = vadd.f32 %v3817, %v4097
      %4099 = vmatmul.bf16.gmra.mxu0 %v3761
      %v4100 = vpop.f32.mrf.mxu0
      %v4101 = vadd.f32 %v3817, %v4100
      %v4102 = vpop.f32.mrf.mxu0
      %v4103 = vadd.f32 %v3817, %v4102
      %4104 = vmatmul.bf16.gmra.mxu0 %v3763
      %v4105 = vpop.f32.mrf.mxu0
      %v4106 = vadd.f32 %v3817, %v4105
      %v4107 = vpop.f32.mrf.mxu0
      %v4108 = vadd.f32 %v3817, %v4107
      %4109 = vmatmul.bf16.gmra.mxu0 %v3765
      %v4110 = vpop.f32.mrf.mxu0
      %v4111 = vadd.f32 %v3817, %v4110
      %v4112 = vpop.f32.mrf.mxu0
      %v4113 = vadd.f32 %v3817, %v4112
      %4114 = vmatmul.bf16.gmra.mxu0 %v3767
      %v4115 = vpop.f32.mrf.mxu0
      %v4116 = vadd.f32 %v3817, %v4115
      %v4117 = vpop.f32.mrf.mxu0
      %v4118 = vadd.f32 %v3817, %v4117
      %4119 = vmatmul.bf16.gmra.mxu0 %v3769
      %v4120 = vpop.f32.mrf.mxu0
      %v4121 = vadd.f32 %v3817, %v4120
      %v4122 = vpop.f32.mrf.mxu0
      %v4123 = vadd.f32 %v3817, %v4122
      %4124 = vmatmul.bf16.gmra.mxu0 %v3771
      %v4125 = vpop.f32.mrf.mxu0
      %v4126 = vadd.f32 %v3817, %v4125
      %v4127 = vpop.f32.mrf.mxu0
      %v4128 = vadd.f32 %v3817, %v4127
      %4129 = vmatmul.bf16.gmra.mxu0 %v3773
      %v4130 = vpop.f32.mrf.mxu0
      %v4131 = vadd.f32 %v3817, %v4130
      %v4132 = vpop.f32.mrf.mxu0
      %v4133 = vadd.f32 %v3817, %v4132
      %4134 = vmatmul.bf16.gmra.mxu0 %v3775
      %v4135 = vpop.f32.mrf.mxu0
      %v4136 = vadd.f32 %v3817, %v4135
      %v4137 = vpop.f32.mrf.mxu0
      %v4138 = vadd.f32 %v3817, %v4137
      %4139 = vmatmul.bf16.gmra.mxu0 %v3777
      %v4140 = vpop.f32.mrf.mxu0
      %v4141 = vadd.f32 %v3817, %v4140
      %v4142 = vpop.f32.mrf.mxu0
      %v4143 = vadd.f32 %v3817, %v4142
      %4144 = vmatmul.bf16.gmra.mxu0 %v3779
      %v4145 = vpop.f32.mrf.mxu0
      %v4146 = vadd.f32 %v3817, %v4145
      %v4147 = vpop.f32.mrf.mxu0
      %v4148 = vadd.f32 %v3817, %v4147
      %4149 = vdwg.mxu0
      %4150 = vmatpush.bf16.msra.mxu0 %v3947
      %4151 = vmatpush.bf16.msra.mxu0 %v3945
      %4152 = vmatpush.bf16.msra.mxu0 %v3943
      %4153 = vmatpush.bf16.msra.mxu0 %v3941
      %4154 = vmatpush.bf16.msra.mxu0 %v3939
      %4155 = vmatpush.bf16.msra.mxu0 %v3937
      %4156 = vmatpush.bf16.msra.mxu0 %v3935
      %4157 = vmatpush.bf16.msra.mxu0 %v3933
      %4158 = vmatmul.bf16.gmra.mxu0 %v3718
      %v4159 = vpop.f32.mrf.mxu0
      %v4160 = vadd.f32 %v3991, %v4159
      %v4161 = vpop.f32.mrf.mxu0
      %v4162 = vadd.f32 %v3993, %v4161
      %4163 = vmatmul.bf16.gmra.mxu0 %v3720
      %v4164 = vpop.f32.mrf.mxu0
      %v4165 = vadd.f32 %v3996, %v4164
      %v4166 = vpop.f32.mrf.mxu0
      %v4167 = vadd.f32 %v3998, %v4166
      %4168 = vmatmul.bf16.gmra.mxu0 %v3722
      %v4169 = vpop.f32.mrf.mxu0
      %v4170 = vadd.f32 %v4001, %v4169
      %v4171 = vpop.f32.mrf.mxu0
      %v4172 = vadd.f32 %v4003, %v4171
      %4173 = vmatmul.bf16.gmra.mxu0 %v3724
      %v4174 = vpop.f32.mrf.mxu0
      %v4175 = vadd.f32 %v4006, %v4174
      %v4176 = vpop.f32.mrf.mxu0
      %v4177 = vadd.f32 %v4008, %v4176
      %4178 = vmatmul.bf16.gmra.mxu0 %v3726
      %v4179 = vpop.f32.mrf.mxu0
      %v4180 = vadd.f32 %v4011, %v4179
      %v4181 = vpop.f32.mrf.mxu0
      %v4182 = vadd.f32 %v4013, %v4181
      %4183 = vmatmul.bf16.gmra.mxu0 %v3728
      %v4184 = vpop.f32.mrf.mxu0
      %v4185 = vadd.f32 %v4016, %v4184
      %v4186 = vpop.f32.mrf.mxu0
      %v4187 = vadd.f32 %v4018, %v4186
      %4188 = vmatmul.bf16.gmra.mxu0 %v3730
      %v4189 = vpop.f32.mrf.mxu0
      %v4190 = vadd.f32 %v4021, %v4189
      %v4191 = vpop.f32.mrf.mxu0
      %v4192 = vadd.f32 %v4023, %v4191
      %4193 = vmatmul.bf16.gmra.mxu0 %v3732
      %v4194 = vpop.f32.mrf.mxu0
      %v4195 = vadd.f32 %v4026, %v4194
      %v4196 = vpop.f32.mrf.mxu0
      %v4197 = vadd.f32 %v4028, %v4196
      %4198 = vmatmul.bf16.gmra.mxu0 %v3734
      %v4199 = vpop.f32.mrf.mxu0
      %v4200 = vadd.f32 %v4031, %v4199
      %v4201 = vpop.f32.mrf.mxu0
      %v4202 = vadd.f32 %v4033, %v4201
      %4203 = vmatmul.bf16.gmra.mxu0 %v3736
      %v4204 = vpop.f32.mrf.mxu0
      %v4205 = vadd.f32 %v4036, %v4204
      %v4206 = vpop.f32.mrf.mxu0
      %v4207 = vadd.f32 %v4038, %v4206
      %4208 = vmatmul.bf16.gmra.mxu0 %v3738
      %v4209 = vpop.f32.mrf.mxu0
      %v4210 = vadd.f32 %v4041, %v4209
      %v4211 = vpop.f32.mrf.mxu0
      %v4212 = vadd.f32 %v4043, %v4211
      %4213 = vmatmul.bf16.gmra.mxu0 %v3740
      %v4214 = vpop.f32.mrf.mxu0
      %v4215 = vadd.f32 %v4046, %v4214
      %v4216 = vpop.f32.mrf.mxu0
      %v4217 = vadd.f32 %v4048, %v4216
      %4218 = vmatmul.bf16.gmra.mxu0 %v3742
      %v4219 = vpop.f32.mrf.mxu0
      %v4220 = vadd.f32 %v4051, %v4219
      %v4221 = vpop.f32.mrf.mxu0
      %v4222 = vadd.f32 %v4053, %v4221
      %4223 = vmatmul.bf16.gmra.mxu0 %v3744
      %v4224 = vpop.f32.mrf.mxu0
      %v4225 = vadd.f32 %v4056, %v4224
      %v4226 = vpop.f32.mrf.mxu0
      %v4227 = vadd.f32 %v4058, %v4226
      %4228 = vmatmul.bf16.gmra.mxu0 %v3746
      %v4229 = vpop.f32.mrf.mxu0
      %v4230 = vadd.f32 %v4061, %v4229
      %v4231 = vpop.f32.mrf.mxu0
      %v4232 = vadd.f32 %v4063, %v4231
      %4233 = vmatmul.bf16.gmra.mxu0 %v3748
      %v4234 = vpop.f32.mrf.mxu0
      %v4235 = vadd.f32 %v4066, %v4234
      %v4236 = vpop.f32.mrf.mxu0
      %v4237 = vadd.f32 %v4068, %v4236
      %4238 = vmatmul.bf16.gmra.mxu0 %v3750
      %v4239 = vpop.f32.mrf.mxu0
      %v4240 = vadd.f32 %v4071, %v4239
      %v4241 = vpop.f32.mrf.mxu0
      %v4242 = vadd.f32 %v4073, %v4241
      %4243 = vmatmul.bf16.gmra.mxu0 %v3752
      %v4244 = vpop.f32.mrf.mxu0
      %v4245 = vadd.f32 %v4076, %v4244
      %v4246 = vpop.f32.mrf.mxu0
      %v4247 = vadd.f32 %v4078, %v4246
      %4248 = vmatmul.bf16.gmra.mxu0 %v3754
      %v4249 = vpop.f32.mrf.mxu0
      %v4250 = vadd.f32 %v4081, %v4249
      %v4251 = vpop.f32.mrf.mxu0
      %v4252 = vadd.f32 %v4083, %v4251
      %4253 = vmatmul.bf16.gmra.mxu0 %v3756
      %v4254 = vpop.f32.mrf.mxu0
      %v4255 = vadd.f32 %v4086, %v4254
      %v4256 = vpop.f32.mrf.mxu0
      %v4257 = vadd.f32 %v4088, %v4256
      %4258 = vmatmul.bf16.gmra.mxu0 %v3758
      %v4259 = vpop.f32.mrf.mxu0
      %v4260 = vadd.f32 %v4091, %v4259
      %v4261 = vpop.f32.mrf.mxu0
      %v4262 = vadd.f32 %v4093, %v4261
      %4263 = vmatmul.bf16.gmra.mxu0 %v3760
      %v4264 = vpop.f32.mrf.mxu0
      %v4265 = vadd.f32 %v4096, %v4264
      %v4266 = vpop.f32.mrf.mxu0
      %v4267 = vadd.f32 %v4098, %v4266
      %4268 = vmatmul.bf16.gmra.mxu0 %v3762
      %v4269 = vpop.f32.mrf.mxu0
      %v4270 = vadd.f32 %v4101, %v4269
      %v4271 = vpop.f32.mrf.mxu0
      %v4272 = vadd.f32 %v4103, %v4271
      %4273 = vmatmul.bf16.gmra.mxu0 %v3764
      %v4274 = vpop.f32.mrf.mxu0
      %v4275 = vadd.f32 %v4106, %v4274
      %v4276 = vpop.f32.mrf.mxu0
      %v4277 = vadd.f32 %v4108, %v4276
      %4278 = vmatmul.bf16.gmra.mxu0 %v3766
      %v4279 = vpop.f32.mrf.mxu0
      %v4280 = vadd.f32 %v4111, %v4279
      %v4281 = vpop.f32.mrf.mxu0
      %v4282 = vadd.f32 %v4113, %v4281
      %4283 = vmatmul.bf16.gmra.mxu0 %v3768
      %v4284 = vpop.f32.mrf.mxu0
      %v4285 = vadd.f32 %v4116, %v4284
      %v4286 = vpop.f32.mrf.mxu0
      %v4287 = vadd.f32 %v4118, %v4286
      %4288 = vmatmul.bf16.gmra.mxu0 %v3770
      %v4289 = vpop.f32.mrf.mxu0
      %v4290 = vadd.f32 %v4121, %v4289
      %v4291 = vpop.f32.mrf.mxu0
      %v4292 = vadd.f32 %v4123, %v4291
      %4293 = vmatmul.bf16.gmra.mxu0 %v3772
      %v4294 = vpop.f32.mrf.mxu0
      %v4295 = vadd.f32 %v4126, %v4294
      %v4296 = vpop.f32.mrf.mxu0
      %v4297 = vadd.f32 %v4128, %v4296
      %4298 = vmatmul.bf16.gmra.mxu0 %v3774
      %v4299 = vpop.f32.mrf.mxu0
      %v4300 = vadd.f32 %v4131, %v4299
      %v4301 = vpop.f32.mrf.mxu0
      %v4302 = vadd.f32 %v4133, %v4301
      %4303 = vmatmul.bf16.gmra.mxu0 %v3776
      %v4304 = vpop.f32.mrf.mxu0
      %v4305 = vadd.f32 %v4136, %v4304
      %v4306 = vpop.f32.mrf.mxu0
      %v4307 = vadd.f32 %v4138, %v4306
      %4308 = vmatmul.bf16.gmra.mxu0 %v3778
      %v4309 = vpop.f32.mrf.mxu0
      %v4310 = vadd.f32 %v4141, %v4309
      %v4311 = vpop.f32.mrf.mxu0
      %v4312 = vadd.f32 %v4143, %v4311
      %4313 = vmatmul.bf16.gmra.mxu0 %v3780
      %v4314 = vpop.f32.mrf.mxu0
      %v4315 = vadd.f32 %v4146, %v4314
      %v4316 = vpop.f32.mrf.mxu0
      %v4317 = vadd.f32 %v4148, %v4316
      %4318 = vdwg.mxu0
      %4319 = vmatpush.bf16.msra.mxu0 %v3932
      %4320 = vmatpush.bf16.msra.mxu0 %v3930
      %4321 = vmatpush.bf16.msra.mxu0 %v3928
      %4322 = vmatpush.bf16.msra.mxu0 %v3926
      %4323 = vmatpush.bf16.msra.mxu0 %v3924
      %4324 = vmatpush.bf16.msra.mxu0 %v3922
      %4325 = vmatpush.bf16.msra.mxu0 %v3920
      %4326 = vmatpush.bf16.msra.mxu0 %v3918
      %4327 = vmatmul.bf16.gmra.mxu0 %v3717
      %v4328 = vpop.f32.mrf.mxu0
      %v4329 = vadd.f32 %v3818, %v4328
      %v4330 = vpop.f32.mrf.mxu0
      %v4331 = vadd.f32 %v3818, %v4330
      %4332 = vmatmul.bf16.gmra.mxu0 %v3719
      %v4333 = vpop.f32.mrf.mxu0
      %v4334 = vadd.f32 %v3818, %v4333
      %v4335 = vpop.f32.mrf.mxu0
      %v4336 = vadd.f32 %v3818, %v4335
      %4337 = vmatmul.bf16.gmra.mxu0 %v3721
      %v4338 = vpop.f32.mrf.mxu0
      %v4339 = vadd.f32 %v3818, %v4338
      %v4340 = vpop.f32.mrf.mxu0
      %v4341 = vadd.f32 %v3818, %v4340
      %4342 = vmatmul.bf16.gmra.mxu0 %v3723
      %v4343 = vpop.f32.mrf.mxu0
      %v4344 = vadd.f32 %v3818, %v4343
      %v4345 = vpop.f32.mrf.mxu0
      %v4346 = vadd.f32 %v3818, %v4345
      %4347 = vmatmul.bf16.gmra.mxu0 %v3725
      %v4348 = vpop.f32.mrf.mxu0
      %v4349 = vadd.f32 %v3818, %v4348
      %v4350 = vpop.f32.mrf.mxu0
      %v4351 = vadd.f32 %v3818, %v4350
      %4352 = vmatmul.bf16.gmra.mxu0 %v3727
      %v4353 = vpop.f32.mrf.mxu0
      %v4354 = vadd.f32 %v3818, %v4353
      %v4355 = vpop.f32.mrf.mxu0
      %v4356 = vadd.f32 %v3818, %v4355
      %4357 = vmatmul.bf16.gmra.mxu0 %v3729
      %v4358 = vpop.f32.mrf.mxu0
      %v4359 = vadd.f32 %v3818, %v4358
      %v4360 = vpop.f32.mrf.mxu0
      %v4361 = vadd.f32 %v3818, %v4360
      %4362 = vmatmul.bf16.gmra.mxu0 %v3731
      %v4363 = vpop.f32.mrf.mxu0
      %v4364 = vadd.f32 %v3818, %v4363
      %v4365 = vpop.f32.mrf.mxu0
      %v4366 = vadd.f32 %v3818, %v4365
      %4367 = vmatmul.bf16.gmra.mxu0 %v3733
      %v4368 = vpop.f32.mrf.mxu0
      %v4369 = vadd.f32 %v3818, %v4368
      %v4370 = vpop.f32.mrf.mxu0
      %v4371 = vadd.f32 %v3818, %v4370
      %4372 = vmatmul.bf16.gmra.mxu0 %v3735
      %v4373 = vpop.f32.mrf.mxu0
      %v4374 = vadd.f32 %v3818, %v4373
      %v4375 = vpop.f32.mrf.mxu0
      %v4376 = vadd.f32 %v3818, %v4375
      %4377 = vmatmul.bf16.gmra.mxu0 %v3737
      %v4378 = vpop.f32.mrf.mxu0
      %v4379 = vadd.f32 %v3818, %v4378
      %v4380 = vpop.f32.mrf.mxu0
      %v4381 = vadd.f32 %v3818, %v4380
      %4382 = vmatmul.bf16.gmra.mxu0 %v3739
      %v4383 = vpop.f32.mrf.mxu0
      %v4384 = vadd.f32 %v3818, %v4383
      %v4385 = vpop.f32.mrf.mxu0
      %v4386 = vadd.f32 %v3818, %v4385
      %4387 = vmatmul.bf16.gmra.mxu0 %v3741
      %v4388 = vpop.f32.mrf.mxu0
      %v4389 = vadd.f32 %v3818, %v4388
      %v4390 = vpop.f32.mrf.mxu0
      %v4391 = vadd.f32 %v3818, %v4390
      %4392 = vmatmul.bf16.gmra.mxu0 %v3743
      %v4393 = vpop.f32.mrf.mxu0
      %v4394 = vadd.f32 %v3818, %v4393
      %v4395 = vpop.f32.mrf.mxu0
      %v4396 = vadd.f32 %v3818, %v4395
      %4397 = vmatmul.bf16.gmra.mxu0 %v3745
      %v4398 = vpop.f32.mrf.mxu0
      %v4399 = vadd.f32 %v3818, %v4398
      %v4400 = vpop.f32.mrf.mxu0
      %v4401 = vadd.f32 %v3818, %v4400
      %4402 = vmatmul.bf16.gmra.mxu0 %v3747
      %v4403 = vpop.f32.mrf.mxu0
      %v4404 = vadd.f32 %v3818, %v4403
      %v4405 = vpop.f32.mrf.mxu0
      %v4406 = vadd.f32 %v3818, %v4405
      %4407 = vmatmul.bf16.gmra.mxu0 %v3749
      %v4408 = vpop.f32.mrf.mxu0
      %v4409 = vadd.f32 %v3818, %v4408
      %v4410 = vpop.f32.mrf.mxu0
      %v4411 = vadd.f32 %v3818, %v4410
      %4412 = vmatmul.bf16.gmra.mxu0 %v3751
      %v4413 = vpop.f32.mrf.mxu0
      %v4414 = vadd.f32 %v3818, %v4413
      %v4415 = vpop.f32.mrf.mxu0
      %v4416 = vadd.f32 %v3818, %v4415
      %4417 = vmatmul.bf16.gmra.mxu0 %v3753
      %v4418 = vpop.f32.mrf.mxu0
      %v4419 = vadd.f32 %v3818, %v4418
      %v4420 = vpop.f32.mrf.mxu0
      %v4421 = vadd.f32 %v3818, %v4420
      %4422 = vmatmul.bf16.gmra.mxu0 %v3755
      %v4423 = vpop.f32.mrf.mxu0
      %v4424 = vadd.f32 %v3818, %v4423
      %v4425 = vpop.f32.mrf.mxu0
      %v4426 = vadd.f32 %v3818, %v4425
      %4427 = vmatmul.bf16.gmra.mxu0 %v3757
      %v4428 = vpop.f32.mrf.mxu0
      %v4429 = vadd.f32 %v3818, %v4428
      %v4430 = vpop.f32.mrf.mxu0
      %v4431 = vadd.f32 %v3818, %v4430
      %4432 = vmatmul.bf16.gmra.mxu0 %v3759
      %v4433 = vpop.f32.mrf.mxu0
      %v4434 = vadd.f32 %v3818, %v4433
      %v4435 = vpop.f32.mrf.mxu0
      %v4436 = vadd.f32 %v3818, %v4435
      %4437 = vmatmul.bf16.gmra.mxu0 %v3761
      %v4438 = vpop.f32.mrf.mxu0
      %v4439 = vadd.f32 %v3818, %v4438
      %v4440 = vpop.f32.mrf.mxu0
      %v4441 = vadd.f32 %v3818, %v4440
      %4442 = vmatmul.bf16.gmra.mxu0 %v3763
      %v4443 = vpop.f32.mrf.mxu0
      %v4444 = vadd.f32 %v3818, %v4443
      %v4445 = vpop.f32.mrf.mxu0
      %v4446 = vadd.f32 %v3818, %v4445
      %4447 = vmatmul.bf16.gmra.mxu0 %v3765
      %v4448 = vpop.f32.mrf.mxu0
      %v4449 = vadd.f32 %v3818, %v4448
      %v4450 = vpop.f32.mrf.mxu0
      %v4451 = vadd.f32 %v3818, %v4450
      %4452 = vmatmul.bf16.gmra.mxu0 %v3767
      %v4453 = vpop.f32.mrf.mxu0
      %v4454 = vadd.f32 %v3818, %v4453
      %v4455 = vpop.f32.mrf.mxu0
      %v4456 = vadd.f32 %v3818, %v4455
      %4457 = vmatmul.bf16.gmra.mxu0 %v3769
      %v4458 = vpop.f32.mrf.mxu0
      %v4459 = vadd.f32 %v3818, %v4458
      %v4460 = vpop.f32.mrf.mxu0
      %v4461 = vadd.f32 %v3818, %v4460
      %4462 = vmatmul.bf16.gmra.mxu0 %v3771
      %v4463 = vpop.f32.mrf.mxu0
      %v4464 = vadd.f32 %v3818, %v4463
      %v4465 = vpop.f32.mrf.mxu0
      %v4466 = vadd.f32 %v3818, %v4465
      %4467 = vmatmul.bf16.gmra.mxu0 %v3773
      %v4468 = vpop.f32.mrf.mxu0
      %v4469 = vadd.f32 %v3818, %v4468
      %v4470 = vpop.f32.mrf.mxu0
      %v4471 = vadd.f32 %v3818, %v4470
      %4472 = vmatmul.bf16.gmra.mxu0 %v3775
      %v4473 = vpop.f32.mrf.mxu0
      %v4474 = vadd.f32 %v3818, %v4473
      %v4475 = vpop.f32.mrf.mxu0
      %v4476 = vadd.f32 %v3818, %v4475
      %4477 = vmatmul.bf16.gmra.mxu0 %v3777
      %v4478 = vpop.f32.mrf.mxu0
      %v4479 = vadd.f32 %v3818, %v4478
      %v4480 = vpop.f32.mrf.mxu0
      %v4481 = vadd.f32 %v3818, %v4480
      %4482 = vmatmul.bf16.gmra.mxu0 %v3779
      %v4483 = vpop.f32.mrf.mxu0
      %v4484 = vadd.f32 %v3818, %v4483
      %v4485 = vpop.f32.mrf.mxu0
      %v4486 = vadd.f32 %v3818, %v4485
      %4487 = vdwg.mxu0
      %4488 = vmatpush.bf16.msra.mxu0 %v3948
      %4489 = vmatpush.bf16.msra.mxu0 %v3946
      %4490 = vmatpush.bf16.msra.mxu0 %v3944
      %4491 = vmatpush.bf16.msra.mxu0 %v3942
      %4492 = vmatpush.bf16.msra.mxu0 %v3940
      %4493 = vmatpush.bf16.msra.mxu0 %v3938
      %4494 = vmatpush.bf16.msra.mxu0 %v3936
      %4495 = vmatpush.bf16.msra.mxu0 %v3934
      %4496 = vmatmul.bf16.gmra.mxu0 %v3718
      %v4497 = vpop.f32.mrf.mxu0
      %v4498 = vadd.f32 %v4329, %v4497
      %v4499 = vpop.f32.mrf.mxu0
      %v4500 = vadd.f32 %v4331, %v4499
      %4501 = vmatmul.bf16.gmra.mxu0 %v3720
      %v4502 = vpop.f32.mrf.mxu0
      %v4503 = vadd.f32 %v4334, %v4502
      %v4504 = vpop.f32.mrf.mxu0
      %v4505 = vadd.f32 %v4336, %v4504
      %4506 = vmatmul.bf16.gmra.mxu0 %v3722
      %v4507 = vpop.f32.mrf.mxu0
      %v4508 = vadd.f32 %v4339, %v4507
      %v4509 = vpop.f32.mrf.mxu0
      %v4510 = vadd.f32 %v4341, %v4509
      %4511 = vmatmul.bf16.gmra.mxu0 %v3724
      %v4512 = vpop.f32.mrf.mxu0
      %v4513 = vadd.f32 %v4344, %v4512
      %v4514 = vpop.f32.mrf.mxu0
      %v4515 = vadd.f32 %v4346, %v4514
      %4516 = vmatmul.bf16.gmra.mxu0 %v3726
      %v4517 = vpop.f32.mrf.mxu0
      %v4518 = vadd.f32 %v4349, %v4517
      %v4519 = vpop.f32.mrf.mxu0
      %v4520 = vadd.f32 %v4351, %v4519
      %4521 = vmatmul.bf16.gmra.mxu0 %v3728
      %v4522 = vpop.f32.mrf.mxu0
      %v4523 = vadd.f32 %v4354, %v4522
      %v4524 = vpop.f32.mrf.mxu0
      %v4525 = vadd.f32 %v4356, %v4524
      %4526 = vmatmul.bf16.gmra.mxu0 %v3730
      %v4527 = vpop.f32.mrf.mxu0
      %v4528 = vadd.f32 %v4359, %v4527
      %v4529 = vpop.f32.mrf.mxu0
      %v4530 = vadd.f32 %v4361, %v4529
      %4531 = vmatmul.bf16.gmra.mxu0 %v3732
      %v4532 = vpop.f32.mrf.mxu0
      %v4533 = vadd.f32 %v4364, %v4532
      %v4534 = vpop.f32.mrf.mxu0
      %v4535 = vadd.f32 %v4366, %v4534
      %4536 = vmatmul.bf16.gmra.mxu0 %v3734
      %v4537 = vpop.f32.mrf.mxu0
      %v4538 = vadd.f32 %v4369, %v4537
      %v4539 = vpop.f32.mrf.mxu0
      %v4540 = vadd.f32 %v4371, %v4539
      %4541 = vmatmul.bf16.gmra.mxu0 %v3736
      %v4542 = vpop.f32.mrf.mxu0
      %v4543 = vadd.f32 %v4374, %v4542
      %v4544 = vpop.f32.mrf.mxu0
      %v4545 = vadd.f32 %v4376, %v4544
      %4546 = vmatmul.bf16.gmra.mxu0 %v3738
      %v4547 = vpop.f32.mrf.mxu0
      %v4548 = vadd.f32 %v4379, %v4547
      %v4549 = vpop.f32.mrf.mxu0
      %v4550 = vadd.f32 %v4381, %v4549
      %4551 = vmatmul.bf16.gmra.mxu0 %v3740
      %v4552 = vpop.f32.mrf.mxu0
      %v4553 = vadd.f32 %v4384, %v4552
      %v4554 = vpop.f32.mrf.mxu0
      %v4555 = vadd.f32 %v4386, %v4554
      %4556 = vmatmul.bf16.gmra.mxu0 %v3742
      %v4557 = vpop.f32.mrf.mxu0
      %v4558 = vadd.f32 %v4389, %v4557
      %v4559 = vpop.f32.mrf.mxu0
      %v4560 = vadd.f32 %v4391, %v4559
      %4561 = vmatmul.bf16.gmra.mxu0 %v3744
      %v4562 = vpop.f32.mrf.mxu0
      %v4563 = vadd.f32 %v4394, %v4562
      %v4564 = vpop.f32.mrf.mxu0
      %v4565 = vadd.f32 %v4396, %v4564
      %4566 = vmatmul.bf16.gmra.mxu0 %v3746
      %v4567 = vpop.f32.mrf.mxu0
      %v4568 = vadd.f32 %v4399, %v4567
      %v4569 = vpop.f32.mrf.mxu0
      %v4570 = vadd.f32 %v4401, %v4569
      %4571 = vmatmul.bf16.gmra.mxu0 %v3748
      %v4572 = vpop.f32.mrf.mxu0
      %v4573 = vadd.f32 %v4404, %v4572
      %v4574 = vpop.f32.mrf.mxu0
      %v4575 = vadd.f32 %v4406, %v4574
      %4576 = vmatmul.bf16.gmra.mxu0 %v3750
      %v4577 = vpop.f32.mrf.mxu0
      %v4578 = vadd.f32 %v4409, %v4577
      %v4579 = vpop.f32.mrf.mxu0
      %v4580 = vadd.f32 %v4411, %v4579
      %4581 = vmatmul.bf16.gmra.mxu0 %v3752
      %v4582 = vpop.f32.mrf.mxu0
      %v4583 = vadd.f32 %v4414, %v4582
      %v4584 = vpop.f32.mrf.mxu0
      %v4585 = vadd.f32 %v4416, %v4584
      %4586 = vmatmul.bf16.gmra.mxu0 %v3754
      %v4587 = vpop.f32.mrf.mxu0
      %v4588 = vadd.f32 %v4419, %v4587
      %v4589 = vpop.f32.mrf.mxu0
      %v4590 = vadd.f32 %v4421, %v4589
      %4591 = vmatmul.bf16.gmra.mxu0 %v3756
      %v4592 = vpop.f32.mrf.mxu0
      %v4593 = vadd.f32 %v4424, %v4592
      %v4594 = vpop.f32.mrf.mxu0
      %v4595 = vadd.f32 %v4426, %v4594
      %4596 = vmatmul.bf16.gmra.mxu0 %v3758
      %v4597 = vpop.f32.mrf.mxu0
      %v4598 = vadd.f32 %v4429, %v4597
      %v4599 = vpop.f32.mrf.mxu0
      %v4600 = vadd.f32 %v4431, %v4599
      %4601 = vmatmul.bf16.gmra.mxu0 %v3760
      %v4602 = vpop.f32.mrf.mxu0
      %v4603 = vadd.f32 %v4434, %v4602
      %v4604 = vpop.f32.mrf.mxu0
      %v4605 = vadd.f32 %v4436, %v4604
      %4606 = vmatmul.bf16.gmra.mxu0 %v3762
      %v4607 = vpop.f32.mrf.mxu0
      %v4608 = vadd.f32 %v4439, %v4607
      %v4609 = vpop.f32.mrf.mxu0
      %v4610 = vadd.f32 %v4441, %v4609
      %4611 = vmatmul.bf16.gmra.mxu0 %v3764
      %v4612 = vpop.f32.mrf.mxu0
      %v4613 = vadd.f32 %v4444, %v4612
      %v4614 = vpop.f32.mrf.mxu0
      %v4615 = vadd.f32 %v4446, %v4614
      %4616 = vmatmul.bf16.gmra.mxu0 %v3766
      %v4617 = vpop.f32.mrf.mxu0
      %v4618 = vadd.f32 %v4449, %v4617
      %v4619 = vpop.f32.mrf.mxu0
      %v4620 = vadd.f32 %v4451, %v4619
      %4621 = vmatmul.bf16.gmra.mxu0 %v3768
      %v4622 = vpop.f32.mrf.mxu0
      %v4623 = vadd.f32 %v4454, %v4622
      %v4624 = vpop.f32.mrf.mxu0
      %v4625 = vadd.f32 %v4456, %v4624
      %4626 = vmatmul.bf16.gmra.mxu0 %v3770
      %v4627 = vpop.f32.mrf.mxu0
      %v4628 = vadd.f32 %v4459, %v4627
      %v4629 = vpop.f32.mrf.mxu0
      %v4630 = vadd.f32 %v4461, %v4629
      %4631 = vmatmul.bf16.gmra.mxu0 %v3772
      %v4632 = vpop.f32.mrf.mxu0
      %v4633 = vadd.f32 %v4464, %v4632
      %v4634 = vpop.f32.mrf.mxu0
      %v4635 = vadd.f32 %v4466, %v4634
      %4636 = vmatmul.bf16.gmra.mxu0 %v3774
      %v4637 = vpop.f32.mrf.mxu0
      %v4638 = vadd.f32 %v4469, %v4637
      %v4639 = vpop.f32.mrf.mxu0
      %v4640 = vadd.f32 %v4471, %v4639
      %4641 = vmatmul.bf16.gmra.mxu0 %v3776
      %v4642 = vpop.f32.mrf.mxu0
      %v4643 = vadd.f32 %v4474, %v4642
      %v4644 = vpop.f32.mrf.mxu0
      %v4645 = vadd.f32 %v4476, %v4644
      %4646 = vmatmul.bf16.gmra.mxu0 %v3778
      %v4647 = vpop.f32.mrf.mxu0
      %v4648 = vadd.f32 %v4479, %v4647
      %v4649 = vpop.f32.mrf.mxu0
      %v4650 = vadd.f32 %v4481, %v4649
      %4651 = vmatmul.bf16.gmra.mxu0 %v3780
      %v4652 = vpop.f32.mrf.mxu0
      %v4653 = vadd.f32 %v4484, %v4652
      %v4654 = vpop.f32.mrf.mxu0
      %v4655 = vadd.f32 %v4486, %v4654
      %4656 = vdwg.mxu0
      %v4657 = vmax.f32 %v4160, 0.0
      %v4658 = vmax.f32 %v4498, 0.0
      %v4659 = vmax.f32 %v4162, 0.0
      %v4660 = vmax.f32 %v4500, 0.0
      %v4661 = vmax.f32 %v4165, 0.0
      %v4662 = vmax.f32 %v4503, 0.0
      %v4663 = vmax.f32 %v4167, 0.0
      %v4664 = vmax.f32 %v4505, 0.0
      %v4665 = vmax.f32 %v4170, 0.0
      %v4666 = vmax.f32 %v4508, 0.0
      %v4667 = vmax.f32 %v4172, 0.0
      %v4668 = vmax.f32 %v4510, 0.0
      %v4669 = vmax.f32 %v4175, 0.0
      %v4670 = vmax.f32 %v4513, 0.0
      %v4671 = vmax.f32 %v4177, 0.0
      %v4672 = vmax.f32 %v4515, 0.0
      %v4673 = vmax.f32 %v4180, 0.0
      %v4674 = vmax.f32 %v4518, 0.0
      %v4675 = vmax.f32 %v4182, 0.0
      %v4676 = vmax.f32 %v4520, 0.0
      %v4677 = vmax.f32 %v4185, 0.0
      %v4678 = vmax.f32 %v4523, 0.0
      %v4679 = vmax.f32 %v4187, 0.0
      %v4680 = vmax.f32 %v4525, 0.0
      %v4681 = vmax.f32 %v4190, 0.0
      %v4682 = vmax.f32 %v4528, 0.0
      %v4683 = vmax.f32 %v4192, 0.0
      %v4684 = vmax.f32 %v4530, 0.0
      %v4685 = vmax.f32 %v4195, 0.0
      %v4686 = vmax.f32 %v4533, 0.0
      %v4687 = vmax.f32 %v4197, 0.0
      %v4688 = vmax.f32 %v4535, 0.0
      %v4689 = vmax.f32 %v4200, 0.0
      %v4690 = vmax.f32 %v4538, 0.0
      %v4691 = vmax.f32 %v4202, 0.0
      %v4692 = vmax.f32 %v4540, 0.0
      %v4693 = vmax.f32 %v4205, 0.0
      %v4694 = vmax.f32 %v4543, 0.0
      %v4695 = vmax.f32 %v4207, 0.0
      %v4696 = vmax.f32 %v4545, 0.0
      %v4697 = vmax.f32 %v4210, 0.0
      %v4698 = vmax.f32 %v4548, 0.0
      %v4699 = vmax.f32 %v4212, 0.0
      %v4700 = vmax.f32 %v4550, 0.0
      %v4701 = vmax.f32 %v4215, 0.0
      %v4702 = vmax.f32 %v4553, 0.0
      %v4703 = vmax.f32 %v4217, 0.0
      %v4704 = vmax.f32 %v4555, 0.0
      %v4705 = vmax.f32 %v4220, 0.0
      %v4706 = vmax.f32 %v4558, 0.0
      %v4707 = vmax.f32 %v4222, 0.0
      %v4708 = vmax.f32 %v4560, 0.0
      %v4709 = vmax.f32 %v4225, 0.0
      %v4710 = vmax.f32 %v4563, 0.0
      %v4711 = vmax.f32 %v4227, 0.0
      %v4712 = vmax.f32 %v4565, 0.0
      %v4713 = vmax.f32 %v4230, 0.0
      %v4714 = vmax.f32 %v4568, 0.0
      %v4715 = vmax.f32 %v4232, 0.0
      %v4716 = vmax.f32 %v4570, 0.0
      %v4717 = vmax.f32 %v4235, 0.0
      %v4718 = vmax.f32 %v4573, 0.0
      %v4719 = vmax.f32 %v4237, 0.0
      %v4720 = vmax.f32 %v4575, 0.0
      %v4721 = vmax.f32 %v4240, 0.0
      %v4722 = vmax.f32 %v4578, 0.0
      %v4723 = vmax.f32 %v4242, 0.0
      %v4724 = vmax.f32 %v4580, 0.0
      %v4725 = vmax.f32 %v4245, 0.0
      %v4726 = vmax.f32 %v4583, 0.0
      %v4727 = vmax.f32 %v4247, 0.0
      %v4728 = vmax.f32 %v4585, 0.0
      %v4729 = vmax.f32 %v4250, 0.0
      %v4730 = vmax.f32 %v4588, 0.0
      %v4731 = vmax.f32 %v4252, 0.0
      %v4732 = vmax.f32 %v4590, 0.0
      %v4733 = vmax.f32 %v4255, 0.0
      %v4734 = vmax.f32 %v4593, 0.0
      %v4735 = vmax.f32 %v4257, 0.0
      %v4736 = vmax.f32 %v4595, 0.0
      %v4737 = vmax.f32 %v4260, 0.0
      %v4738 = vmax.f32 %v4598, 0.0
      %v4739 = vmax.f32 %v4262, 0.0
      %v4740 = vmax.f32 %v4600, 0.0
      %v4741 = vmax.f32 %v4265, 0.0
      %v4742 = vmax.f32 %v4603, 0.0
      %v4743 = vmax.f32 %v4267, 0.0
      %v4744 = vmax.f32 %v4605, 0.0
      %v4745 = vmax.f32 %v4270, 0.0
      %v4746 = vmax.f32 %v4608, 0.0
      %v4747 = vmax.f32 %v4272, 0.0
      %v4748 = vmax.f32 %v4610, 0.0
      %v4749 = vmax.f32 %v4275, 0.0
      %v4750 = vmax.f32 %v4613, 0.0
      %v4751 = vmax.f32 %v4277, 0.0
      %v4752 = vmax.f32 %v4615, 0.0
      %v4753 = vmax.f32 %v4280, 0.0
      %v4754 = vmax.f32 %v4618, 0.0
      %v4755 = vmax.f32 %v4282, 0.0
      %v4756 = vmax.f32 %v4620, 0.0
      %v4757 = vmax.f32 %v4285, 0.0
      %v4758 = vmax.f32 %v4623, 0.0
      %v4759 = vmax.f32 %v4287, 0.0
      %v4760 = vmax.f32 %v4625, 0.0
      %v4761 = vmax.f32 %v4290, 0.0
      %v4762 = vmax.f32 %v4628, 0.0
      %v4763 = vmax.f32 %v4292, 0.0
      %v4764 = vmax.f32 %v4630, 0.0
      %v4765 = vmax.f32 %v4295, 0.0
      %v4766 = vmax.f32 %v4633, 0.0
      %v4767 = vmax.f32 %v4297, 0.0
      %v4768 = vmax.f32 %v4635, 0.0
      %v4769 = vmax.f32 %v4300, 0.0
      %v4770 = vmax.f32 %v4638, 0.0
      %v4771 = vmax.f32 %v4302, 0.0
      %v4772 = vmax.f32 %v4640, 0.0
      %v4773 = vmax.f32 %v4305, 0.0
      %v4774 = vmax.f32 %v4643, 0.0
      %v4775 = vmax.f32 %v4307, 0.0
      %v4776 = vmax.f32 %v4645, 0.0
      %v4777 = vmax.f32 %v4310, 0.0
      %v4778 = vmax.f32 %v4648, 0.0
      %v4779 = vmax.f32 %v4312, 0.0
      %v4780 = vmax.f32 %v4650, 0.0
      %v4781 = vmax.f32 %v4315, 0.0
      %v4782 = vmax.f32 %v4653, 0.0
      %v4783 = vmax.f32 %v4317, 0.0
      %v4784 = vmax.f32 %v4655, 0.0
      %v4785 = vld [vmem:[%s5] sm:$0x3]
      %v4787 = vperm.slane %v4785, 0
      %v4788 = vperm.slane %v4785, 1
      %v4791 = vmul.f32 %v4657, %v4787
      %v4792 = vmul.f32 %v4658, %v4788
      %v4793 = vmul.f32 %v4659, %v4787
      %v4794 = vmul.f32 %v4660, %v4788
      %v4795 = vmul.f32 %v4661, %v4787
      %v4796 = vmul.f32 %v4662, %v4788
      %v4797 = vmul.f32 %v4663, %v4787
      %v4798 = vmul.f32 %v4664, %v4788
      %v4799 = vmul.f32 %v4665, %v4787
      %v4800 = vmul.f32 %v4666, %v4788
      %v4801 = vmul.f32 %v4667, %v4787
      %v4802 = vmul.f32 %v4668, %v4788
      %v4803 = vmul.f32 %v4669, %v4787
      %v4804 = vmul.f32 %v4670, %v4788
      %v4805 = vmul.f32 %v4671, %v4787
      %v4806 = vmul.f32 %v4672, %v4788
      %v4807 = vmul.f32 %v4673, %v4787
      %v4808 = vmul.f32 %v4674, %v4788
      %v4809 = vmul.f32 %v4675, %v4787
      %v4810 = vmul.f32 %v4676, %v4788
      %v4811 = vmul.f32 %v4677, %v4787
      %v4812 = vmul.f32 %v4678, %v4788
      %v4813 = vmul.f32 %v4679, %v4787
      %v4814 = vmul.f32 %v4680, %v4788
      %v4815 = vmul.f32 %v4681, %v4787
      %v4816 = vmul.f32 %v4682, %v4788
      %v4817 = vmul.f32 %v4683, %v4787
      %v4818 = vmul.f32 %v4684, %v4788
      %v4819 = vmul.f32 %v4685, %v4787
      %v4820 = vmul.f32 %v4686, %v4788
      %v4821 = vmul.f32 %v4687, %v4787
      %v4822 = vmul.f32 %v4688, %v4788
      %v4823 = vmul.f32 %v4689, %v4787
      %v4824 = vmul.f32 %v4690, %v4788
      %v4825 = vmul.f32 %v4691, %v4787
      %v4826 = vmul.f32 %v4692, %v4788
      %v4827 = vmul.f32 %v4693, %v4787
      %v4828 = vmul.f32 %v4694, %v4788
      %v4829 = vmul.f32 %v4695, %v4787
      %v4830 = vmul.f32 %v4696, %v4788
      %v4831 = vmul.f32 %v4697, %v4787
      %v4832 = vmul.f32 %v4698, %v4788
      %v4833 = vmul.f32 %v4699, %v4787
      %v4834 = vmul.f32 %v4700, %v4788
      %v4835 = vmul.f32 %v4701, %v4787
      %v4836 = vmul.f32 %v4702, %v4788
      %v4837 = vmul.f32 %v4703, %v4787
      %v4838 = vmul.f32 %v4704, %v4788
      %v4839 = vmul.f32 %v4705, %v4787
      %v4840 = vmul.f32 %v4706, %v4788
      %v4841 = vmul.f32 %v4707, %v4787
      %v4842 = vmul.f32 %v4708, %v4788
      %v4843 = vmul.f32 %v4709, %v4787
      %v4844 = vmul.f32 %v4710, %v4788
      %v4845 = vmul.f32 %v4711, %v4787
      %v4846 = vmul.f32 %v4712, %v4788
      %v4847 = vmul.f32 %v4713, %v4787
      %v4848 = vmul.f32 %v4714, %v4788
      %v4849 = vmul.f32 %v4715, %v4787
      %v4850 = vmul.f32 %v4716, %v4788
      %v4851 = vmul.f32 %v4717, %v4787
      %v4852 = vmul.f32 %v4718, %v4788
      %v4853 = vmul.f32 %v4719, %v4787
      %v4854 = vmul.f32 %v4720, %v4788
      %v4855 = vmul.f32 %v4721, %v4787
      %v4856 = vmul.f32 %v4722, %v4788
      %v4857 = vmul.f32 %v4723, %v4787
      %v4858 = vmul.f32 %v4724, %v4788
      %v4859 = vmul.f32 %v4725, %v4787
      %v4860 = vmul.f32 %v4726, %v4788
      %v4861 = vmul.f32 %v4727, %v4787
      %v4862 = vmul.f32 %v4728, %v4788
      %v4863 = vmul.f32 %v4729, %v4787
      %v4864 = vmul.f32 %v4730, %v4788
      %v4865 = vmul.f32 %v4731, %v4787
      %v4866 = vmul.f32 %v4732, %v4788
      %v4867 = vmul.f32 %v4733, %v4787
      %v4868 = vmul.f32 %v4734, %v4788
      %v4869 = vmul.f32 %v4735, %v4787
      %v4870 = vmul.f32 %v4736, %v4788
      %v4871 = vmul.f32 %v4737, %v4787
      %v4872 = vmul.f32 %v4738, %v4788
      %v4873 = vmul.f32 %v4739, %v4787
      %v4874 = vmul.f32 %v4740, %v4788
      %v4875 = vmul.f32 %v4741, %v4787
      %v4876 = vmul.f32 %v4742, %v4788
      %v4877 = vmul.f32 %v4743, %v4787
      %v4878 = vmul.f32 %v4744, %v4788
      %v4879 = vmul.f32 %v4745, %v4787
      %v4880 = vmul.f32 %v4746, %v4788
      %v4881 = vmul.f32 %v4747, %v4787
      %v4882 = vmul.f32 %v4748, %v4788
      %v4883 = vmul.f32 %v4749, %v4787
      %v4884 = vmul.f32 %v4750, %v4788
      %v4885 = vmul.f32 %v4751, %v4787
      %v4886 = vmul.f32 %v4752, %v4788
      %v4887 = vmul.f32 %v4753, %v4787
      %v4888 = vmul.f32 %v4754, %v4788
      %v4889 = vmul.f32 %v4755, %v4787
      %v4890 = vmul.f32 %v4756, %v4788
      %v4891 = vmul.f32 %v4757, %v4787
      %v4892 = vmul.f32 %v4758, %v4788
      %v4893 = vmul.f32 %v4759, %v4787
      %v4894 = vmul.f32 %v4760, %v4788
      %v4895 = vmul.f32 %v4761, %v4787
      %v4896 = vmul.f32 %v4762, %v4788
      %v4897 = vmul.f32 %v4763, %v4787
      %v4898 = vmul.f32 %v4764, %v4788
      %v4899 = vmul.f32 %v4765, %v4787
      %v4900 = vmul.f32 %v4766, %v4788
      %v4901 = vmul.f32 %v4767, %v4787
      %v4902 = vmul.f32 %v4768, %v4788
      %v4903 = vmul.f32 %v4769, %v4787
      %v4904 = vmul.f32 %v4770, %v4788
      %v4905 = vmul.f32 %v4771, %v4787
      %v4906 = vmul.f32 %v4772, %v4788
      %v4907 = vmul.f32 %v4773, %v4787
      %v4908 = vmul.f32 %v4774, %v4788
      %v4909 = vmul.f32 %v4775, %v4787
      %v4910 = vmul.f32 %v4776, %v4788
      %v4911 = vmul.f32 %v4777, %v4787
      %v4912 = vmul.f32 %v4778, %v4788
      %v4913 = vmul.f32 %v4779, %v4787
      %v4914 = vmul.f32 %v4780, %v4788
      %v4915 = vmul.f32 %v4781, %v4787
      %v4916 = vmul.f32 %v4782, %v4788
      %v4917 = vmul.f32 %v4783, %v4787
      %v4918 = vmul.f32 %v4784, %v4788
      %v4919 = vadd.f32 %v4791, %v4792
      %4920 = vadd.xlane.f32.xlu0 %v4919
      %v4921 = vpop.xlane.xlu0 %4920
      %v4922 = vadd.f32 %v4793, %v4794
      %4923 = vadd.xlane.f32.xlu0 %v4922
      %v4924 = vpop.xlane.xlu0 %4923
      %v4925 = vadd.f32 %v4795, %v4796
      %4926 = vadd.xlane.f32.xlu0 %v4925
      %v4927 = vpop.xlane.xlu0 %4926
      %v4928 = vadd.f32 %v4797, %v4798
      %4929 = vadd.xlane.f32.xlu0 %v4928
      %v4930 = vpop.xlane.xlu0 %4929
      %v4931 = vadd.f32 %v4799, %v4800
      %4932 = vadd.xlane.f32.xlu0 %v4931
      %v4933 = vpop.xlane.xlu0 %4932
      %v4934 = vadd.f32 %v4801, %v4802
      %4935 = vadd.xlane.f32.xlu0 %v4934
      %v4936 = vpop.xlane.xlu0 %4935
      %v4937 = vadd.f32 %v4803, %v4804
      %4938 = vadd.xlane.f32.xlu0 %v4937
      %v4939 = vpop.xlane.xlu0 %4938
      %v4940 = vadd.f32 %v4805, %v4806
      %4941 = vadd.xlane.f32.xlu0 %v4940
      %v4942 = vpop.xlane.xlu0 %4941
      %v4943 = vadd.f32 %v4807, %v4808
      %4944 = vadd.xlane.f32.xlu0 %v4943
      %v4945 = vpop.xlane.xlu0 %4944
      %v4946 = vadd.f32 %v4809, %v4810
      %4947 = vadd.xlane.f32.xlu0 %v4946
      %v4948 = vpop.xlane.xlu0 %4947
      %v4949 = vadd.f32 %v4811, %v4812
      %4950 = vadd.xlane.f32.xlu0 %v4949
      %v4951 = vpop.xlane.xlu0 %4950
      %v4952 = vadd.f32 %v4813, %v4814
      %4953 = vadd.xlane.f32.xlu0 %v4952
      %v4954 = vpop.xlane.xlu0 %4953
      %v4955 = vadd.f32 %v4815, %v4816
      %4956 = vadd.xlane.f32.xlu0 %v4955
      %v4957 = vpop.xlane.xlu0 %4956
      %v4958 = vadd.f32 %v4817, %v4818
      %4959 = vadd.xlane.f32.xlu0 %v4958
      %v4960 = vpop.xlane.xlu0 %4959
      %v4961 = vadd.f32 %v4819, %v4820
      %4962 = vadd.xlane.f32.xlu0 %v4961
      %v4963 = vpop.xlane.xlu0 %4962
      %v4964 = vadd.f32 %v4821, %v4822
      %4965 = vadd.xlane.f32.xlu0 %v4964
      %v4966 = vpop.xlane.xlu0 %4965
      %v4967 = vadd.f32 %v4823, %v4824
      %4968 = vadd.xlane.f32.xlu0 %v4967
      %v4969 = vpop.xlane.xlu0 %4968
      %v4970 = vadd.f32 %v4825, %v4826
      %4971 = vadd.xlane.f32.xlu0 %v4970
      %v4972 = vpop.xlane.xlu0 %4971
      %v4973 = vadd.f32 %v4827, %v4828
      %4974 = vadd.xlane.f32.xlu0 %v4973
      %v4975 = vpop.xlane.xlu0 %4974
      %v4976 = vadd.f32 %v4829, %v4830
      %4977 = vadd.xlane.f32.xlu0 %v4976
      %v4978 = vpop.xlane.xlu0 %4977
      %v4979 = vadd.f32 %v4831, %v4832
      %4980 = vadd.xlane.f32.xlu0 %v4979
      %v4981 = vpop.xlane.xlu0 %4980
      %v4982 = vadd.f32 %v4833, %v4834
      %4983 = vadd.xlane.f32.xlu0 %v4982
      %v4984 = vpop.xlane.xlu0 %4983
      %v4985 = vadd.f32 %v4835, %v4836
      %4986 = vadd.xlane.f32.xlu0 %v4985
      %v4987 = vpop.xlane.xlu0 %4986
      %v4988 = vadd.f32 %v4837, %v4838
      %4989 = vadd.xlane.f32.xlu0 %v4988
      %v4990 = vpop.xlane.xlu0 %4989
      %v4991 = vadd.f32 %v4839, %v4840
      %4992 = vadd.xlane.f32.xlu0 %v4991
      %v4993 = vpop.xlane.xlu0 %4992
      %v4994 = vadd.f32 %v4841, %v4842
      %4995 = vadd.xlane.f32.xlu0 %v4994
      %v4996 = vpop.xlane.xlu0 %4995
      %v4997 = vadd.f32 %v4843, %v4844
      %4998 = vadd.xlane.f32.xlu0 %v4997
      %v4999 = vpop.xlane.xlu0 %4998
      %v5000 = vadd.f32 %v4845, %v4846
      %5001 = vadd.xlane.f32.xlu0 %v5000
      %v5002 = vpop.xlane.xlu0 %5001
      %v5003 = vadd.f32 %v4847, %v4848
      %5004 = vadd.xlane.f32.xlu0 %v5003
      %v5005 = vpop.xlane.xlu0 %5004
      %v5006 = vadd.f32 %v4849, %v4850
      %5007 = vadd.xlane.f32.xlu0 %v5006
      %v5008 = vpop.xlane.xlu0 %5007
      %v5009 = vadd.f32 %v4851, %v4852
      %5010 = vadd.xlane.f32.xlu0 %v5009
      %v5011 = vpop.xlane.xlu0 %5010
      %v5012 = vadd.f32 %v4853, %v4854
      %5013 = vadd.xlane.f32.xlu0 %v5012
      %v5014 = vpop.xlane.xlu0 %5013
      %v5015 = vadd.f32 %v4855, %v4856
      %5016 = vadd.xlane.f32.xlu0 %v5015
      %v5017 = vpop.xlane.xlu0 %5016
      %v5018 = vadd.f32 %v4857, %v4858
      %5019 = vadd.xlane.f32.xlu0 %v5018
      %v5020 = vpop.xlane.xlu0 %5019
      %v5021 = vadd.f32 %v4859, %v4860
      %5022 = vadd.xlane.f32.xlu0 %v5021
      %v5023 = vpop.xlane.xlu0 %5022
      %v5024 = vadd.f32 %v4861, %v4862
      %5025 = vadd.xlane.f32.xlu0 %v5024
      %v5026 = vpop.xlane.xlu0 %5025
      %v5027 = vadd.f32 %v4863, %v4864
      %5028 = vadd.xlane.f32.xlu0 %v5027
      %v5029 = vpop.xlane.xlu0 %5028
      %v5030 = vadd.f32 %v4865, %v4866
      %5031 = vadd.xlane.f32.xlu0 %v5030
      %v5032 = vpop.xlane.xlu0 %5031
      %v5033 = vadd.f32 %v4867, %v4868
      %5034 = vadd.xlane.f32.xlu0 %v5033
      %v5035 = vpop.xlane.xlu0 %5034
      %v5036 = vadd.f32 %v4869, %v4870
      %5037 = vadd.xlane.f32.xlu0 %v5036
      %v5038 = vpop.xlane.xlu0 %5037
      %v5039 = vadd.f32 %v4871, %v4872
      %5040 = vadd.xlane.f32.xlu0 %v5039
      %v5041 = vpop.xlane.xlu0 %5040
      %v5042 = vadd.f32 %v4873, %v4874
      %5043 = vadd.xlane.f32.xlu0 %v5042
      %v5044 = vpop.xlane.xlu0 %5043
      %v5045 = vadd.f32 %v4875, %v4876
      %5046 = vadd.xlane.f32.xlu0 %v5045
      %v5047 = vpop.xlane.xlu0 %5046
      %v5048 = vadd.f32 %v4877, %v4878
      %5049 = vadd.xlane.f32.xlu0 %v5048
      %v5050 = vpop.xlane.xlu0 %5049
      %v5051 = vadd.f32 %v4879, %v4880
      %5052 = vadd.xlane.f32.xlu0 %v5051
      %v5053 = vpop.xlane.xlu0 %5052
      %v5054 = vadd.f32 %v4881, %v4882
      %5055 = vadd.xlane.f32.xlu0 %v5054
      %v5056 = vpop.xlane.xlu0 %5055
      %v5057 = vadd.f32 %v4883, %v4884
      %5058 = vadd.xlane.f32.xlu0 %v5057
      %v5059 = vpop.xlane.xlu0 %5058
      %v5060 = vadd.f32 %v4885, %v4886
      %5061 = vadd.xlane.f32.xlu0 %v5060
      %v5062 = vpop.xlane.xlu0 %5061
      %v5063 = vadd.f32 %v4887, %v4888
      %5064 = vadd.xlane.f32.xlu0 %v5063
      %v5065 = vpop.xlane.xlu0 %5064
      %v5066 = vadd.f32 %v4889, %v4890
      %5067 = vadd.xlane.f32.xlu0 %v5066
      %v5068 = vpop.xlane.xlu0 %5067
      %v5069 = vadd.f32 %v4891, %v4892
      %5070 = vadd.xlane.f32.xlu0 %v5069
      %v5071 = vpop.xlane.xlu0 %5070
      %v5072 = vadd.f32 %v4893, %v4894
      %5073 = vadd.xlane.f32.xlu0 %v5072
      %v5074 = vpop.xlane.xlu0 %5073
      %v5075 = vadd.f32 %v4895, %v4896
      %5076 = vadd.xlane.f32.xlu0 %v5075
      %v5077 = vpop.xlane.xlu0 %5076
      %v5078 = vadd.f32 %v4897, %v4898
      %5079 = vadd.xlane.f32.xlu0 %v5078
      %v5080 = vpop.xlane.xlu0 %5079
      %v5081 = vadd.f32 %v4899, %v4900
      %5082 = vadd.xlane.f32.xlu0 %v5081
      %v5083 = vpop.xlane.xlu0 %5082
      %v5084 = vadd.f32 %v4901, %v4902
      %5085 = vadd.xlane.f32.xlu0 %v5084
      %v5086 = vpop.xlane.xlu0 %5085
      %v5087 = vadd.f32 %v4903, %v4904
      %5088 = vadd.xlane.f32.xlu0 %v5087
      %v5089 = vpop.xlane.xlu0 %5088
      %v5090 = vadd.f32 %v4905, %v4906
      %5091 = vadd.xlane.f32.xlu0 %v5090
      %v5092 = vpop.xlane.xlu0 %5091
      %v5093 = vadd.f32 %v4907, %v4908
      %5094 = vadd.xlane.f32.xlu0 %v5093
      %v5095 = vpop.xlane.xlu0 %5094
      %v5096 = vadd.f32 %v4909, %v4910
      %5097 = vadd.xlane.f32.xlu0 %v5096
      %v5098 = vpop.xlane.xlu0 %5097
      %v5099 = vadd.f32 %v4911, %v4912
      %5100 = vadd.xlane.f32.xlu0 %v5099
      %v5101 = vpop.xlane.xlu0 %5100
      %v5102 = vadd.f32 %v4913, %v4914
      %5103 = vadd.xlane.f32.xlu0 %v5102
      %v5104 = vpop.xlane.xlu0 %5103
      %v5105 = vadd.f32 %v4915, %v4916
      %5106 = vadd.xlane.f32.xlu0 %v5105
      %v5107 = vpop.xlane.xlu0 %5106
      %v5108 = vadd.f32 %v4917, %v4918
      %5109 = vadd.xlane.f32.xlu0 %v5108
      %v5110 = vpop.xlane.xlu0 %5109
      %v5111 = vld [vmem:[#allocation2] sm:$0x1]
      %v5113 = vperm.slane %v5111, 0
      %v5115 = vadd.f32 %v4921, %v5113
      %v5116 = vadd.f32 %v4924, %v5113
      %v5117 = vadd.f32 %v4927, %v5113
      %v5118 = vadd.f32 %v4930, %v5113
      %v5119 = vadd.f32 %v4933, %v5113
      %v5120 = vadd.f32 %v4936, %v5113
      %v5121 = vadd.f32 %v4939, %v5113
      %v5122 = vadd.f32 %v4942, %v5113
      %v5123 = vadd.f32 %v4945, %v5113
      %v5124 = vadd.f32 %v4948, %v5113
      %v5125 = vadd.f32 %v4951, %v5113
      %v5126 = vadd.f32 %v4954, %v5113
      %v5127 = vadd.f32 %v4957, %v5113
      %v5128 = vadd.f32 %v4960, %v5113
      %v5129 = vadd.f32 %v4963, %v5113
      %v5130 = vadd.f32 %v4966, %v5113
      %v5131 = vadd.f32 %v4969, %v5113
      %v5132 = vadd.f32 %v4972, %v5113
      %v5133 = vadd.f32 %v4975, %v5113
      %v5134 = vadd.f32 %v4978, %v5113
      %v5135 = vadd.f32 %v4981, %v5113
      %v5136 = vadd.f32 %v4984, %v5113
      %v5137 = vadd.f32 %v4987, %v5113
      %v5138 = vadd.f32 %v4990, %v5113
      %v5139 = vadd.f32 %v4993, %v5113
      %v5140 = vadd.f32 %v4996, %v5113
      %v5141 = vadd.f32 %v4999, %v5113
      %v5142 = vadd.f32 %v5002, %v5113
      %v5143 = vadd.f32 %v5005, %v5113
      %v5144 = vadd.f32 %v5008, %v5113
      %v5145 = vadd.f32 %v5011, %v5113
      %v5146 = vadd.f32 %v5014, %v5113
      %v5147 = vadd.f32 %v5017, %v5113
      %v5148 = vadd.f32 %v5020, %v5113
      %v5149 = vadd.f32 %v5023, %v5113
      %v5150 = vadd.f32 %v5026, %v5113
      %v5151 = vadd.f32 %v5029, %v5113
      %v5152 = vadd.f32 %v5032, %v5113
      %v5153 = vadd.f32 %v5035, %v5113
      %v5154 = vadd.f32 %v5038, %v5113
      %v5155 = vadd.f32 %v5041, %v5113
      %v5156 = vadd.f32 %v5044, %v5113
      %v5157 = vadd.f32 %v5047, %v5113
      %v5158 = vadd.f32 %v5050, %v5113
      %v5159 = vadd.f32 %v5053, %v5113
      %v5160 = vadd.f32 %v5056, %v5113
      %v5161 = vadd.f32 %v5059, %v5113
      %v5162 = vadd.f32 %v5062, %v5113
      %v5163 = vadd.f32 %v5065, %v5113
      %v5164 = vadd.f32 %v5068, %v5113
      %v5165 = vadd.f32 %v5071, %v5113
      %v5166 = vadd.f32 %v5074, %v5113
      %v5167 = vadd.f32 %v5077, %v5113
      %v5168 = vadd.f32 %v5080, %v5113
      %v5169 = vadd.f32 %v5083, %v5113
      %v5170 = vadd.f32 %v5086, %v5113
      %v5171 = vadd.f32 %v5089, %v5113
      %v5172 = vadd.f32 %v5092, %v5113
      %v5173 = vadd.f32 %v5095, %v5113
      %v5174 = vadd.f32 %v5098, %v5113
      %v5175 = vadd.f32 %v5101, %v5113
      %v5176 = vadd.f32 %v5104, %v5113
      %v5177 = vadd.f32 %v5107, %v5113
      %v5178 = vadd.f32 %v5110, %v5113
      %v5179 = vxor.u32 %v5115, 2147483648
      %v5180 = vxor.u32 %v5116, 2147483648
      %v5181 = vxor.u32 %v5117, 2147483648
      %v5182 = vxor.u32 %v5118, 2147483648
      %v5183 = vxor.u32 %v5119, 2147483648
      %v5184 = vxor.u32 %v5120, 2147483648
      %v5185 = vxor.u32 %v5121, 2147483648
      %v5186 = vxor.u32 %v5122, 2147483648
      %v5187 = vxor.u32 %v5123, 2147483648
      %v5188 = vxor.u32 %v5124, 2147483648
      %v5189 = vxor.u32 %v5125, 2147483648
      %v5190 = vxor.u32 %v5126, 2147483648
      %v5191 = vxor.u32 %v5127, 2147483648
      %v5192 = vxor.u32 %v5128, 2147483648
      %v5193 = vxor.u32 %v5129, 2147483648
      %v5194 = vxor.u32 %v5130, 2147483648
      %v5195 = vxor.u32 %v5131, 2147483648
      %v5196 = vxor.u32 %v5132, 2147483648
      %v5197 = vxor.u32 %v5133, 2147483648
      %v5198 = vxor.u32 %v5134, 2147483648
      %v5199 = vxor.u32 %v5135, 2147483648
      %v5200 = vxor.u32 %v5136, 2147483648
      %v5201 = vxor.u32 %v5137, 2147483648
      %v5202 = vxor.u32 %v5138, 2147483648
      %v5203 = vxor.u32 %v5139, 2147483648
      %v5204 = vxor.u32 %v5140, 2147483648
      %v5205 = vxor.u32 %v5141, 2147483648
      %v5206 = vxor.u32 %v5142, 2147483648
      %v5207 = vxor.u32 %v5143, 2147483648
      %v5208 = vxor.u32 %v5144, 2147483648
      %v5209 = vxor.u32 %v5145, 2147483648
      %v5210 = vxor.u32 %v5146, 2147483648
      %v5211 = vxor.u32 %v5147, 2147483648
      %v5212 = vxor.u32 %v5148, 2147483648
      %v5213 = vxor.u32 %v5149, 2147483648
      %v5214 = vxor.u32 %v5150, 2147483648
      %v5215 = vxor.u32 %v5151, 2147483648
      %v5216 = vxor.u32 %v5152, 2147483648
      %v5217 = vxor.u32 %v5153, 2147483648
      %v5218 = vxor.u32 %v5154, 2147483648
      %v5219 = vxor.u32 %v5155, 2147483648
      %v5220 = vxor.u32 %v5156, 2147483648
      %v5221 = vxor.u32 %v5157, 2147483648
      %v5222 = vxor.u32 %v5158, 2147483648
      %v5223 = vxor.u32 %v5159, 2147483648
      %v5224 = vxor.u32 %v5160, 2147483648
      %v5225 = vxor.u32 %v5161, 2147483648
      %v5226 = vxor.u32 %v5162, 2147483648
      %v5227 = vxor.u32 %v5163, 2147483648
      %v5228 = vxor.u32 %v5164, 2147483648
      %v5229 = vxor.u32 %v5165, 2147483648
      %v5230 = vxor.u32 %v5166, 2147483648
      %v5231 = vxor.u32 %v5167, 2147483648
      %v5232 = vxor.u32 %v5168, 2147483648
      %v5233 = vxor.u32 %v5169, 2147483648
      %v5234 = vxor.u32 %v5170, 2147483648
      %v5235 = vxor.u32 %v5171, 2147483648
      %v5236 = vxor.u32 %v5172, 2147483648
      %v5237 = vxor.u32 %v5173, 2147483648
      %v5238 = vxor.u32 %v5174, 2147483648
      %v5239 = vxor.u32 %v5175, 2147483648
      %v5240 = vxor.u32 %v5176, 2147483648
      %v5241 = vxor.u32 %v5177, 2147483648
      %v5242 = vxor.u32 %v5178, 2147483648
      %v5243 = vmul.f32 %v5179, 1.442695
      %v5244 = vpow.pop %v5243
      %v5245 = vmul.f32 %v5180, 1.442695
      %v5246 = vpow.pop %v5245
      %v5247 = vmul.f32 %v5181, 1.442695
      %v5248 = vpow.pop %v5247
      %v5249 = vmul.f32 %v5182, 1.442695
      %v5250 = vpow.pop %v5249
      %v5251 = vmul.f32 %v5183, 1.442695
      %v5252 = vpow.pop %v5251
      %v5253 = vmul.f32 %v5184, 1.442695
      %v5254 = vpow.pop %v5253
      %v5255 = vmul.f32 %v5185, 1.442695
      %v5256 = vpow.pop %v5255
      %v5257 = vmul.f32 %v5186, 1.442695
      %v5258 = vpow.pop %v5257
      %v5259 = vmul.f32 %v5187, 1.442695
      %v5260 = vpow.pop %v5259
      %v5261 = vmul.f32 %v5188, 1.442695
      %v5262 = vpow.pop %v5261
      %v5263 = vmul.f32 %v5189, 1.442695
      %v5264 = vpow.pop %v5263
      %v5265 = vmul.f32 %v5190, 1.442695
      %v5266 = vpow.pop %v5265
      %v5267 = vmul.f32 %v5191, 1.442695
      %v5268 = vpow.pop %v5267
      %v5269 = vmul.f32 %v5192, 1.442695
      %v5270 = vpow.pop %v5269
      %v5271 = vmul.f32 %v5193, 1.442695
      %v5272 = vpow.pop %v5271
      %v5273 = vmul.f32 %v5194, 1.442695
      %v5274 = vpow.pop %v5273
      %v5275 = vmul.f32 %v5195, 1.442695
      %v5276 = vpow.pop %v5275
      %v5277 = vmul.f32 %v5196, 1.442695
      %v5278 = vpow.pop %v5277
      %v5279 = vmul.f32 %v5197, 1.442695
      %v5280 = vpow.pop %v5279
      %v5281 = vmul.f32 %v5198, 1.442695
      %v5282 = vpow.pop %v5281
      %v5283 = vmul.f32 %v5199, 1.442695
      %v5284 = vpow.pop %v5283
      %v5285 = vmul.f32 %v5200, 1.442695
      %v5286 = vpow.pop %v5285
      %v5287 = vmul.f32 %v5201, 1.442695
      %v5288 = vpow.pop %v5287
      %v5289 = vmul.f32 %v5202, 1.442695
      %v5290 = vpow.pop %v5289
      %v5291 = vmul.f32 %v5203, 1.442695
      %v5292 = vpow.pop %v5291
      %v5293 = vmul.f32 %v5204, 1.442695
      %v5294 = vpow.pop %v5293
      %v5295 = vmul.f32 %v5205, 1.442695
      %v5296 = vpow.pop %v5295
      %v5297 = vmul.f32 %v5206, 1.442695
      %v5298 = vpow.pop %v5297
      %v5299 = vmul.f32 %v5207, 1.442695
      %v5300 = vpow.pop %v5299
      %v5301 = vmul.f32 %v5208, 1.442695
      %v5302 = vpow.pop %v5301
      %v5303 = vmul.f32 %v5209, 1.442695
      %v5304 = vpow.pop %v5303
      %v5305 = vmul.f32 %v5210, 1.442695
      %v5306 = vpow.pop %v5305
      %v5307 = vmul.f32 %v5211, 1.442695
      %v5308 = vpow.pop %v5307
      %v5309 = vmul.f32 %v5212, 1.442695
      %v5310 = vpow.pop %v5309
      %v5311 = vmul.f32 %v5213, 1.442695
      %v5312 = vpow.pop %v5311
      %v5313 = vmul.f32 %v5214, 1.442695
      %v5314 = vpow.pop %v5313
      %v5315 = vmul.f32 %v5215, 1.442695
      %v5316 = vpow.pop %v5315
      %v5317 = vmul.f32 %v5216, 1.442695
      %v5318 = vpow.pop %v5317
      %v5319 = vmul.f32 %v5217, 1.442695
      %v5320 = vpow.pop %v5319
      %v5321 = vmul.f32 %v5218, 1.442695
      %v5322 = vpow.pop %v5321
      %v5323 = vmul.f32 %v5219, 1.442695
      %v5324 = vpow.pop %v5323
      %v5325 = vmul.f32 %v5220, 1.442695
      %v5326 = vpow.pop %v5325
      %v5327 = vmul.f32 %v5221, 1.442695
      %v5328 = vpow.pop %v5327
      %v5329 = vmul.f32 %v5222, 1.442695
      %v5330 = vpow.pop %v5329
      %v5331 = vmul.f32 %v5223, 1.442695
      %v5332 = vpow.pop %v5331
      %v5333 = vmul.f32 %v5224, 1.442695
      %v5334 = vpow.pop %v5333
      %v5335 = vmul.f32 %v5225, 1.442695
      %v5336 = vpow.pop %v5335
      %v5337 = vmul.f32 %v5226, 1.442695
      %v5338 = vpow.pop %v5337
      %v5339 = vmul.f32 %v5227, 1.442695
      %v5340 = vpow.pop %v5339
      %v5341 = vmul.f32 %v5228, 1.442695
      %v5342 = vpow.pop %v5341
      %v5343 = vmul.f32 %v5229, 1.442695
      %v5344 = vpow.pop %v5343
      %v5345 = vmul.f32 %v5230, 1.442695
      %v5346 = vpow.pop %v5345
      %v5347 = vmul.f32 %v5231, 1.442695
      %v5348 = vpow.pop %v5347
      %v5349 = vmul.f32 %v5232, 1.442695
      %v5350 = vpow.pop %v5349
      %v5351 = vmul.f32 %v5233, 1.442695
      %v5352 = vpow.pop %v5351
      %v5353 = vmul.f32 %v5234, 1.442695
      %v5354 = vpow.pop %v5353
      %v5355 = vmul.f32 %v5235, 1.442695
      %v5356 = vpow.pop %v5355
      %v5357 = vmul.f32 %v5236, 1.442695
      %v5358 = vpow.pop %v5357
      %v5359 = vmul.f32 %v5237, 1.442695
      %v5360 = vpow.pop %v5359
      %v5361 = vmul.f32 %v5238, 1.442695
      %v5362 = vpow.pop %v5361
      %v5363 = vmul.f32 %v5239, 1.442695
      %v5364 = vpow.pop %v5363
      %v5365 = vmul.f32 %v5240, 1.442695
      %v5366 = vpow.pop %v5365
      %v5367 = vmul.f32 %v5241, 1.442695
      %v5368 = vpow.pop %v5367
      %v5369 = vmul.f32 %v5242, 1.442695
      %v5370 = vpow.pop %v5369
      %v5371 = vadd.f32 %v5244, 1.0
      %v5372 = vadd.f32 %v5246, 1.0
      %v5373 = vadd.f32 %v5248, 1.0
      %v5374 = vadd.f32 %v5250, 1.0
      %v5375 = vadd.f32 %v5252, 1.0
      %v5376 = vadd.f32 %v5254, 1.0
      %v5377 = vadd.f32 %v5256, 1.0
      %v5378 = vadd.f32 %v5258, 1.0
      %v5379 = vadd.f32 %v5260, 1.0
      %v5380 = vadd.f32 %v5262, 1.0
      %v5381 = vadd.f32 %v5264, 1.0
      %v5382 = vadd.f32 %v5266, 1.0
      %v5383 = vadd.f32 %v5268, 1.0
      %v5384 = vadd.f32 %v5270, 1.0
      %v5385 = vadd.f32 %v5272, 1.0
      %v5386 = vadd.f32 %v5274, 1.0
      %v5387 = vadd.f32 %v5276, 1.0
      %v5388 = vadd.f32 %v5278, 1.0
      %v5389 = vadd.f32 %v5280, 1.0
      %v5390 = vadd.f32 %v5282, 1.0
      %v5391 = vadd.f32 %v5284, 1.0
      %v5392 = vadd.f32 %v5286, 1.0
      %v5393 = vadd.f32 %v5288, 1.0
      %v5394 = vadd.f32 %v5290, 1.0
      %v5395 = vadd.f32 %v5292, 1.0
      %v5396 = vadd.f32 %v5294, 1.0
      %v5397 = vadd.f32 %v5296, 1.0
      %v5398 = vadd.f32 %v5298, 1.0
      %v5399 = vadd.f32 %v5300, 1.0
      %v5400 = vadd.f32 %v5302, 1.0
      %v5401 = vadd.f32 %v5304, 1.0
      %v5402 = vadd.f32 %v5306, 1.0
      %v5403 = vadd.f32 %v5308, 1.0
      %v5404 = vadd.f32 %v5310, 1.0
      %v5405 = vadd.f32 %v5312, 1.0
      %v5406 = vadd.f32 %v5314, 1.0
      %v5407 = vadd.f32 %v5316, 1.0
      %v5408 = vadd.f32 %v5318, 1.0
      %v5409 = vadd.f32 %v5320, 1.0
      %v5410 = vadd.f32 %v5322, 1.0
      %v5411 = vadd.f32 %v5324, 1.0
      %v5412 = vadd.f32 %v5326, 1.0
      %v5413 = vadd.f32 %v5328, 1.0
      %v5414 = vadd.f32 %v5330, 1.0
      %v5415 = vadd.f32 %v5332, 1.0
      %v5416 = vadd.f32 %v5334, 1.0
      %v5417 = vadd.f32 %v5336, 1.0
      %v5418 = vadd.f32 %v5338, 1.0
      %v5419 = vadd.f32 %v5340, 1.0
      %v5420 = vadd.f32 %v5342, 1.0
      %v5421 = vadd.f32 %v5344, 1.0
      %v5422 = vadd.f32 %v5346, 1.0
      %v5423 = vadd.f32 %v5348, 1.0
      %v5424 = vadd.f32 %v5350, 1.0
      %v5425 = vadd.f32 %v5352, 1.0
      %v5426 = vadd.f32 %v5354, 1.0
      %v5427 = vadd.f32 %v5356, 1.0
      %v5428 = vadd.f32 %v5358, 1.0
      %v5429 = vadd.f32 %v5360, 1.0
      %v5430 = vadd.f32 %v5362, 1.0
      %v5431 = vadd.f32 %v5364, 1.0
      %v5432 = vadd.f32 %v5366, 1.0
      %v5433 = vadd.f32 %v5368, 1.0
      %v5434 = vadd.f32 %v5370, 1.0
      %v5435 = vrcp.pop %v5371
      %v5436 = vmul.f32 %v5371, %v5435
      %v5437 = vsub.f32 1.0, %v5436
      %v5438 = vmul.f32 %v5435, %v5437
      %v5439 = vadd.f32 %v5435, %v5438
      %vm5440 = vweird.f32 %v5371
      %vm5441 = vweird.f32 %v5435
      %vm5442 = vmor %vm5440, %vm5441
      %v5443 = vsel %vm5442, %v5435, %v5439
      %v5444 = vand.u32 2147483647, %v5371
      %vm5445 = vcmp.eq.f32.partialorder %v5444, 8.507059e+37
      %v5446 = vand.u32 %v5371, 2147483648
      %v5447 = vor.u32 1.1754944e-38, %v5446
      %v5448 = vsel %vm5445, %v5447, %v5443
      %v5449 = vmul.f32 1.0, %v5448
      %v5450 = vrcp.pop %v5372
      %v5451 = vmul.f32 %v5372, %v5450
      %v5452 = vsub.f32 1.0, %v5451
      %v5453 = vmul.f32 %v5450, %v5452
      %v5454 = vadd.f32 %v5450, %v5453
      %vm5455 = vweird.f32 %v5372
      %vm5456 = vweird.f32 %v5450
      %vm5457 = vmor %vm5455, %vm5456
      %v5458 = vsel %vm5457, %v5450, %v5454
      %v5459 = vand.u32 2147483647, %v5372
      %vm5460 = vcmp.eq.f32.partialorder %v5459, 8.507059e+37
      %v5461 = vand.u32 %v5372, 2147483648
      %v5462 = vor.u32 1.1754944e-38, %v5461
      %v5463 = vsel %vm5460, %v5462, %v5458
      %v5464 = vmul.f32 1.0, %v5463
      %v5465 = vrcp.pop %v5373
      %v5466 = vmul.f32 %v5373, %v5465
      %v5467 = vsub.f32 1.0, %v5466
      %v5468 = vmul.f32 %v5465, %v5467
      %v5469 = vadd.f32 %v5465, %v5468
      %vm5470 = vweird.f32 %v5373
      %vm5471 = vweird.f32 %v5465
      %vm5472 = vmor %vm5470, %vm5471
      %v5473 = vsel %vm5472, %v5465, %v5469
      %v5474 = vand.u32 2147483647, %v5373
      %vm5475 = vcmp.eq.f32.partialorder %v5474, 8.507059e+37
      %v5476 = vand.u32 %v5373, 2147483648
      %v5477 = vor.u32 1.1754944e-38, %v5476
      %v5478 = vsel %vm5475, %v5477, %v5473
      %v5479 = vmul.f32 1.0, %v5478
      %v5480 = vrcp.pop %v5374
      %v5481 = vmul.f32 %v5374, %v5480
      %v5482 = vsub.f32 1.0, %v5481
      %v5483 = vmul.f32 %v5480, %v5482
      %v5484 = vadd.f32 %v5480, %v5483
      %vm5485 = vweird.f32 %v5374
      %vm5486 = vweird.f32 %v5480
      %vm5487 = vmor %vm5485, %vm5486
      %v5488 = vsel %vm5487, %v5480, %v5484
      %v5489 = vand.u32 2147483647, %v5374
      %vm5490 = vcmp.eq.f32.partialorder %v5489, 8.507059e+37
      %v5491 = vand.u32 %v5374, 2147483648
      %v5492 = vor.u32 1.1754944e-38, %v5491
      %v5493 = vsel %vm5490, %v5492, %v5488
      %v5494 = vmul.f32 1.0, %v5493
      %v5495 = vrcp.pop %v5375
      %v5496 = vmul.f32 %v5375, %v5495
      %v5497 = vsub.f32 1.0, %v5496
      %v5498 = vmul.f32 %v5495, %v5497
      %v5499 = vadd.f32 %v5495, %v5498
      %vm5500 = vweird.f32 %v5375
      %vm5501 = vweird.f32 %v5495
      %vm5502 = vmor %vm5500, %vm5501
      %v5503 = vsel %vm5502, %v5495, %v5499
      %v5504 = vand.u32 2147483647, %v5375
      %vm5505 = vcmp.eq.f32.partialorder %v5504, 8.507059e+37
      %v5506 = vand.u32 %v5375, 2147483648
      %v5507 = vor.u32 1.1754944e-38, %v5506
      %v5508 = vsel %vm5505, %v5507, %v5503
      %v5509 = vmul.f32 1.0, %v5508
      %v5510 = vrcp.pop %v5376
      %v5511 = vmul.f32 %v5376, %v5510
      %v5512 = vsub.f32 1.0, %v5511
      %v5513 = vmul.f32 %v5510, %v5512
      %v5514 = vadd.f32 %v5510, %v5513
      %vm5515 = vweird.f32 %v5376
      %vm5516 = vweird.f32 %v5510
      %vm5517 = vmor %vm5515, %vm5516
      %v5518 = vsel %vm5517, %v5510, %v5514
      %v5519 = vand.u32 2147483647, %v5376
      %vm5520 = vcmp.eq.f32.partialorder %v5519, 8.507059e+37
      %v5521 = vand.u32 %v5376, 2147483648
      %v5522 = vor.u32 1.1754944e-38, %v5521
      %v5523 = vsel %vm5520, %v5522, %v5518
      %v5524 = vmul.f32 1.0, %v5523
      %v5525 = vrcp.pop %v5377
      %v5526 = vmul.f32 %v5377, %v5525
      %v5527 = vsub.f32 1.0, %v5526
      %v5528 = vmul.f32 %v5525, %v5527
      %v5529 = vadd.f32 %v5525, %v5528
      %vm5530 = vweird.f32 %v5377
      %vm5531 = vweird.f32 %v5525
      %vm5532 = vmor %vm5530, %vm5531
      %v5533 = vsel %vm5532, %v5525, %v5529
      %v5534 = vand.u32 2147483647, %v5377
      %vm5535 = vcmp.eq.f32.partialorder %v5534, 8.507059e+37
      %v5536 = vand.u32 %v5377, 2147483648
      %v5537 = vor.u32 1.1754944e-38, %v5536
      %v5538 = vsel %vm5535, %v5537, %v5533
      %v5539 = vmul.f32 1.0, %v5538
      %v5540 = vrcp.pop %v5378
      %v5541 = vmul.f32 %v5378, %v5540
      %v5542 = vsub.f32 1.0, %v5541
      %v5543 = vmul.f32 %v5540, %v5542
      %v5544 = vadd.f32 %v5540, %v5543
      %vm5545 = vweird.f32 %v5378
      %vm5546 = vweird.f32 %v5540
      %vm5547 = vmor %vm5545, %vm5546
      %v5548 = vsel %vm5547, %v5540, %v5544
      %v5549 = vand.u32 2147483647, %v5378
      %vm5550 = vcmp.eq.f32.partialorder %v5549, 8.507059e+37
      %v5551 = vand.u32 %v5378, 2147483648
      %v5552 = vor.u32 1.1754944e-38, %v5551
      %v5553 = vsel %vm5550, %v5552, %v5548
      %v5554 = vmul.f32 1.0, %v5553
      %v5555 = vrcp.pop %v5379
      %v5556 = vmul.f32 %v5379, %v5555
      %v5557 = vsub.f32 1.0, %v5556
      %v5558 = vmul.f32 %v5555, %v5557
      %v5559 = vadd.f32 %v5555, %v5558
      %vm5560 = vweird.f32 %v5379
      %vm5561 = vweird.f32 %v5555
      %vm5562 = vmor %vm5560, %vm5561
      %v5563 = vsel %vm5562, %v5555, %v5559
      %v5564 = vand.u32 2147483647, %v5379
      %vm5565 = vcmp.eq.f32.partialorder %v5564, 8.507059e+37
      %v5566 = vand.u32 %v5379, 2147483648
      %v5567 = vor.u32 1.1754944e-38, %v5566
      %v5568 = vsel %vm5565, %v5567, %v5563
      %v5569 = vmul.f32 1.0, %v5568
      %v5570 = vrcp.pop %v5380
      %v5571 = vmul.f32 %v5380, %v5570
      %v5572 = vsub.f32 1.0, %v5571
      %v5573 = vmul.f32 %v5570, %v5572
      %v5574 = vadd.f32 %v5570, %v5573
      %vm5575 = vweird.f32 %v5380
      %vm5576 = vweird.f32 %v5570
      %vm5577 = vmor %vm5575, %vm5576
      %v5578 = vsel %vm5577, %v5570, %v5574
      %v5579 = vand.u32 2147483647, %v5380
      %vm5580 = vcmp.eq.f32.partialorder %v5579, 8.507059e+37
      %v5581 = vand.u32 %v5380, 2147483648
      %v5582 = vor.u32 1.1754944e-38, %v5581
      %v5583 = vsel %vm5580, %v5582, %v5578
      %v5584 = vmul.f32 1.0, %v5583
      %v5585 = vrcp.pop %v5381
      %v5586 = vmul.f32 %v5381, %v5585
      %v5587 = vsub.f32 1.0, %v5586
      %v5588 = vmul.f32 %v5585, %v5587
      %v5589 = vadd.f32 %v5585, %v5588
      %vm5590 = vweird.f32 %v5381
      %vm5591 = vweird.f32 %v5585
      %vm5592 = vmor %vm5590, %vm5591
      %v5593 = vsel %vm5592, %v5585, %v5589
      %v5594 = vand.u32 2147483647, %v5381
      %vm5595 = vcmp.eq.f32.partialorder %v5594, 8.507059e+37
      %v5596 = vand.u32 %v5381, 2147483648
      %v5597 = vor.u32 1.1754944e-38, %v5596
      %v5598 = vsel %vm5595, %v5597, %v5593
      %v5599 = vmul.f32 1.0, %v5598
      %v5600 = vrcp.pop %v5382
      %v5601 = vmul.f32 %v5382, %v5600
      %v5602 = vsub.f32 1.0, %v5601
      %v5603 = vmul.f32 %v5600, %v5602
      %v5604 = vadd.f32 %v5600, %v5603
      %vm5605 = vweird.f32 %v5382
      %vm5606 = vweird.f32 %v5600
      %vm5607 = vmor %vm5605, %vm5606
      %v5608 = vsel %vm5607, %v5600, %v5604
      %v5609 = vand.u32 2147483647, %v5382
      %vm5610 = vcmp.eq.f32.partialorder %v5609, 8.507059e+37
      %v5611 = vand.u32 %v5382, 2147483648
      %v5612 = vor.u32 1.1754944e-38, %v5611
      %v5613 = vsel %vm5610, %v5612, %v5608
      %v5614 = vmul.f32 1.0, %v5613
      %v5615 = vrcp.pop %v5383
      %v5616 = vmul.f32 %v5383, %v5615
      %v5617 = vsub.f32 1.0, %v5616
      %v5618 = vmul.f32 %v5615, %v5617
      %v5619 = vadd.f32 %v5615, %v5618
      %vm5620 = vweird.f32 %v5383
      %vm5621 = vweird.f32 %v5615
      %vm5622 = vmor %vm5620, %vm5621
      %v5623 = vsel %vm5622, %v5615, %v5619
      %v5624 = vand.u32 2147483647, %v5383
      %vm5625 = vcmp.eq.f32.partialorder %v5624, 8.507059e+37
      %v5626 = vand.u32 %v5383, 2147483648
      %v5627 = vor.u32 1.1754944e-38, %v5626
      %v5628 = vsel %vm5625, %v5627, %v5623
      %v5629 = vmul.f32 1.0, %v5628
      %v5630 = vrcp.pop %v5384
      %v5631 = vmul.f32 %v5384, %v5630
      %v5632 = vsub.f32 1.0, %v5631
      %v5633 = vmul.f32 %v5630, %v5632
      %v5634 = vadd.f32 %v5630, %v5633
      %vm5635 = vweird.f32 %v5384
      %vm5636 = vweird.f32 %v5630
      %vm5637 = vmor %vm5635, %vm5636
      %v5638 = vsel %vm5637, %v5630, %v5634
      %v5639 = vand.u32 2147483647, %v5384
      %vm5640 = vcmp.eq.f32.partialorder %v5639, 8.507059e+37
      %v5641 = vand.u32 %v5384, 2147483648
      %v5642 = vor.u32 1.1754944e-38, %v5641
      %v5643 = vsel %vm5640, %v5642, %v5638
      %v5644 = vmul.f32 1.0, %v5643
      %v5645 = vrcp.pop %v5385
      %v5646 = vmul.f32 %v5385, %v5645
      %v5647 = vsub.f32 1.0, %v5646
      %v5648 = vmul.f32 %v5645, %v5647
      %v5649 = vadd.f32 %v5645, %v5648
      %vm5650 = vweird.f32 %v5385
      %vm5651 = vweird.f32 %v5645
      %vm5652 = vmor %vm5650, %vm5651
      %v5653 = vsel %vm5652, %v5645, %v5649
      %v5654 = vand.u32 2147483647, %v5385
      %vm5655 = vcmp.eq.f32.partialorder %v5654, 8.507059e+37
      %v5656 = vand.u32 %v5385, 2147483648
      %v5657 = vor.u32 1.1754944e-38, %v5656
      %v5658 = vsel %vm5655, %v5657, %v5653
      %v5659 = vmul.f32 1.0, %v5658
      %v5660 = vrcp.pop %v5386
      %v5661 = vmul.f32 %v5386, %v5660
      %v5662 = vsub.f32 1.0, %v5661
      %v5663 = vmul.f32 %v5660, %v5662
      %v5664 = vadd.f32 %v5660, %v5663
      %vm5665 = vweird.f32 %v5386
      %vm5666 = vweird.f32 %v5660
      %vm5667 = vmor %vm5665, %vm5666
      %v5668 = vsel %vm5667, %v5660, %v5664
      %v5669 = vand.u32 2147483647, %v5386
      %vm5670 = vcmp.eq.f32.partialorder %v5669, 8.507059e+37
      %v5671 = vand.u32 %v5386, 2147483648
      %v5672 = vor.u32 1.1754944e-38, %v5671
      %v5673 = vsel %vm5670, %v5672, %v5668
      %v5674 = vmul.f32 1.0, %v5673
      %v5675 = vrcp.pop %v5387
      %v5676 = vmul.f32 %v5387, %v5675
      %v5677 = vsub.f32 1.0, %v5676
      %v5678 = vmul.f32 %v5675, %v5677
      %v5679 = vadd.f32 %v5675, %v5678
      %vm5680 = vweird.f32 %v5387
      %vm5681 = vweird.f32 %v5675
      %vm5682 = vmor %vm5680, %vm5681
      %v5683 = vsel %vm5682, %v5675, %v5679
      %v5684 = vand.u32 2147483647, %v5387
      %vm5685 = vcmp.eq.f32.partialorder %v5684, 8.507059e+37
      %v5686 = vand.u32 %v5387, 2147483648
      %v5687 = vor.u32 1.1754944e-38, %v5686
      %v5688 = vsel %vm5685, %v5687, %v5683
      %v5689 = vmul.f32 1.0, %v5688
      %v5690 = vrcp.pop %v5388
      %v5691 = vmul.f32 %v5388, %v5690
      %v5692 = vsub.f32 1.0, %v5691
      %v5693 = vmul.f32 %v5690, %v5692
      %v5694 = vadd.f32 %v5690, %v5693
      %vm5695 = vweird.f32 %v5388
      %vm5696 = vweird.f32 %v5690
      %vm5697 = vmor %vm5695, %vm5696
      %v5698 = vsel %vm5697, %v5690, %v5694
      %v5699 = vand.u32 2147483647, %v5388
      %vm5700 = vcmp.eq.f32.partialorder %v5699, 8.507059e+37
      %v5701 = vand.u32 %v5388, 2147483648
      %v5702 = vor.u32 1.1754944e-38, %v5701
      %v5703 = vsel %vm5700, %v5702, %v5698
      %v5704 = vmul.f32 1.0, %v5703
      %v5705 = vrcp.pop %v5389
      %v5706 = vmul.f32 %v5389, %v5705
      %v5707 = vsub.f32 1.0, %v5706
      %v5708 = vmul.f32 %v5705, %v5707
      %v5709 = vadd.f32 %v5705, %v5708
      %vm5710 = vweird.f32 %v5389
      %vm5711 = vweird.f32 %v5705
      %vm5712 = vmor %vm5710, %vm5711
      %v5713 = vsel %vm5712, %v5705, %v5709
      %v5714 = vand.u32 2147483647, %v5389
      %vm5715 = vcmp.eq.f32.partialorder %v5714, 8.507059e+37
      %v5716 = vand.u32 %v5389, 2147483648
      %v5717 = vor.u32 1.1754944e-38, %v5716
      %v5718 = vsel %vm5715, %v5717, %v5713
      %v5719 = vmul.f32 1.0, %v5718
      %v5720 = vrcp.pop %v5390
      %v5721 = vmul.f32 %v5390, %v5720
      %v5722 = vsub.f32 1.0, %v5721
      %v5723 = vmul.f32 %v5720, %v5722
      %v5724 = vadd.f32 %v5720, %v5723
      %vm5725 = vweird.f32 %v5390
      %vm5726 = vweird.f32 %v5720
      %vm5727 = vmor %vm5725, %vm5726
      %v5728 = vsel %vm5727, %v5720, %v5724
      %v5729 = vand.u32 2147483647, %v5390
      %vm5730 = vcmp.eq.f32.partialorder %v5729, 8.507059e+37
      %v5731 = vand.u32 %v5390, 2147483648
      %v5732 = vor.u32 1.1754944e-38, %v5731
      %v5733 = vsel %vm5730, %v5732, %v5728
      %v5734 = vmul.f32 1.0, %v5733
      %v5735 = vrcp.pop %v5391
      %v5736 = vmul.f32 %v5391, %v5735
      %v5737 = vsub.f32 1.0, %v5736
      %v5738 = vmul.f32 %v5735, %v5737
      %v5739 = vadd.f32 %v5735, %v5738
      %vm5740 = vweird.f32 %v5391
      %vm5741 = vweird.f32 %v5735
      %vm5742 = vmor %vm5740, %vm5741
      %v5743 = vsel %vm5742, %v5735, %v5739
      %v5744 = vand.u32 2147483647, %v5391
      %vm5745 = vcmp.eq.f32.partialorder %v5744, 8.507059e+37
      %v5746 = vand.u32 %v5391, 2147483648
      %v5747 = vor.u32 1.1754944e-38, %v5746
      %v5748 = vsel %vm5745, %v5747, %v5743
      %v5749 = vmul.f32 1.0, %v5748
      %v5750 = vrcp.pop %v5392
      %v5751 = vmul.f32 %v5392, %v5750
      %v5752 = vsub.f32 1.0, %v5751
      %v5753 = vmul.f32 %v5750, %v5752
      %v5754 = vadd.f32 %v5750, %v5753
      %vm5755 = vweird.f32 %v5392
      %vm5756 = vweird.f32 %v5750
      %vm5757 = vmor %vm5755, %vm5756
      %v5758 = vsel %vm5757, %v5750, %v5754
      %v5759 = vand.u32 2147483647, %v5392
      %vm5760 = vcmp.eq.f32.partialorder %v5759, 8.507059e+37
      %v5761 = vand.u32 %v5392, 2147483648
      %v5762 = vor.u32 1.1754944e-38, %v5761
      %v5763 = vsel %vm5760, %v5762, %v5758
      %v5764 = vmul.f32 1.0, %v5763
      %v5765 = vrcp.pop %v5393
      %v5766 = vmul.f32 %v5393, %v5765
      %v5767 = vsub.f32 1.0, %v5766
      %v5768 = vmul.f32 %v5765, %v5767
      %v5769 = vadd.f32 %v5765, %v5768
      %vm5770 = vweird.f32 %v5393
      %vm5771 = vweird.f32 %v5765
      %vm5772 = vmor %vm5770, %vm5771
      %v5773 = vsel %vm5772, %v5765, %v5769
      %v5774 = vand.u32 2147483647, %v5393
      %vm5775 = vcmp.eq.f32.partialorder %v5774, 8.507059e+37
      %v5776 = vand.u32 %v5393, 2147483648
      %v5777 = vor.u32 1.1754944e-38, %v5776
      %v5778 = vsel %vm5775, %v5777, %v5773
      %v5779 = vmul.f32 1.0, %v5778
      %v5780 = vrcp.pop %v5394
      %v5781 = vmul.f32 %v5394, %v5780
      %v5782 = vsub.f32 1.0, %v5781
      %v5783 = vmul.f32 %v5780, %v5782
      %v5784 = vadd.f32 %v5780, %v5783
      %vm5785 = vweird.f32 %v5394
      %vm5786 = vweird.f32 %v5780
      %vm5787 = vmor %vm5785, %vm5786
      %v5788 = vsel %vm5787, %v5780, %v5784
      %v5789 = vand.u32 2147483647, %v5394
      %vm5790 = vcmp.eq.f32.partialorder %v5789, 8.507059e+37
      %v5791 = vand.u32 %v5394, 2147483648
      %v5792 = vor.u32 1.1754944e-38, %v5791
      %v5793 = vsel %vm5790, %v5792, %v5788
      %v5794 = vmul.f32 1.0, %v5793
      %v5795 = vrcp.pop %v5395
      %v5796 = vmul.f32 %v5395, %v5795
      %v5797 = vsub.f32 1.0, %v5796
      %v5798 = vmul.f32 %v5795, %v5797
      %v5799 = vadd.f32 %v5795, %v5798
      %vm5800 = vweird.f32 %v5395
      %vm5801 = vweird.f32 %v5795
      %vm5802 = vmor %vm5800, %vm5801
      %v5803 = vsel %vm5802, %v5795, %v5799
      %v5804 = vand.u32 2147483647, %v5395
      %vm5805 = vcmp.eq.f32.partialorder %v5804, 8.507059e+37
      %v5806 = vand.u32 %v5395, 2147483648
      %v5807 = vor.u32 1.1754944e-38, %v5806
      %v5808 = vsel %vm5805, %v5807, %v5803
      %v5809 = vmul.f32 1.0, %v5808
      %v5810 = vrcp.pop %v5396
      %v5811 = vmul.f32 %v5396, %v5810
      %v5812 = vsub.f32 1.0, %v5811
      %v5813 = vmul.f32 %v5810, %v5812
      %v5814 = vadd.f32 %v5810, %v5813
      %vm5815 = vweird.f32 %v5396
      %vm5816 = vweird.f32 %v5810
      %vm5817 = vmor %vm5815, %vm5816
      %v5818 = vsel %vm5817, %v5810, %v5814
      %v5819 = vand.u32 2147483647, %v5396
      %vm5820 = vcmp.eq.f32.partialorder %v5819, 8.507059e+37
      %v5821 = vand.u32 %v5396, 2147483648
      %v5822 = vor.u32 1.1754944e-38, %v5821
      %v5823 = vsel %vm5820, %v5822, %v5818
      %v5824 = vmul.f32 1.0, %v5823
      %v5825 = vrcp.pop %v5397
      %v5826 = vmul.f32 %v5397, %v5825
      %v5827 = vsub.f32 1.0, %v5826
      %v5828 = vmul.f32 %v5825, %v5827
      %v5829 = vadd.f32 %v5825, %v5828
      %vm5830 = vweird.f32 %v5397
      %vm5831 = vweird.f32 %v5825
      %vm5832 = vmor %vm5830, %vm5831
      %v5833 = vsel %vm5832, %v5825, %v5829
      %v5834 = vand.u32 2147483647, %v5397
      %vm5835 = vcmp.eq.f32.partialorder %v5834, 8.507059e+37
      %v5836 = vand.u32 %v5397, 2147483648
      %v5837 = vor.u32 1.1754944e-38, %v5836
      %v5838 = vsel %vm5835, %v5837, %v5833
      %v5839 = vmul.f32 1.0, %v5838
      %v5840 = vrcp.pop %v5398
      %v5841 = vmul.f32 %v5398, %v5840
      %v5842 = vsub.f32 1.0, %v5841
      %v5843 = vmul.f32 %v5840, %v5842
      %v5844 = vadd.f32 %v5840, %v5843
      %vm5845 = vweird.f32 %v5398
      %vm5846 = vweird.f32 %v5840
      %vm5847 = vmor %vm5845, %vm5846
      %v5848 = vsel %vm5847, %v5840, %v5844
      %v5849 = vand.u32 2147483647, %v5398
      %vm5850 = vcmp.eq.f32.partialorder %v5849, 8.507059e+37
      %v5851 = vand.u32 %v5398, 2147483648
      %v5852 = vor.u32 1.1754944e-38, %v5851
      %v5853 = vsel %vm5850, %v5852, %v5848
      %v5854 = vmul.f32 1.0, %v5853
      %v5855 = vrcp.pop %v5399
      %v5856 = vmul.f32 %v5399, %v5855
      %v5857 = vsub.f32 1.0, %v5856
      %v5858 = vmul.f32 %v5855, %v5857
      %v5859 = vadd.f32 %v5855, %v5858
      %vm5860 = vweird.f32 %v5399
      %vm5861 = vweird.f32 %v5855
      %vm5862 = vmor %vm5860, %vm5861
      %v5863 = vsel %vm5862, %v5855, %v5859
      %v5864 = vand.u32 2147483647, %v5399
      %vm5865 = vcmp.eq.f32.partialorder %v5864, 8.507059e+37
      %v5866 = vand.u32 %v5399, 2147483648
      %v5867 = vor.u32 1.1754944e-38, %v5866
      %v5868 = vsel %vm5865, %v5867, %v5863
      %v5869 = vmul.f32 1.0, %v5868
      %v5870 = vrcp.pop %v5400
      %v5871 = vmul.f32 %v5400, %v5870
      %v5872 = vsub.f32 1.0, %v5871
      %v5873 = vmul.f32 %v5870, %v5872
      %v5874 = vadd.f32 %v5870, %v5873
      %vm5875 = vweird.f32 %v5400
      %vm5876 = vweird.f32 %v5870
      %vm5877 = vmor %vm5875, %vm5876
      %v5878 = vsel %vm5877, %v5870, %v5874
      %v5879 = vand.u32 2147483647, %v5400
      %vm5880 = vcmp.eq.f32.partialorder %v5879, 8.507059e+37
      %v5881 = vand.u32 %v5400, 2147483648
      %v5882 = vor.u32 1.1754944e-38, %v5881
      %v5883 = vsel %vm5880, %v5882, %v5878
      %v5884 = vmul.f32 1.0, %v5883
      %v5885 = vrcp.pop %v5401
      %v5886 = vmul.f32 %v5401, %v5885
      %v5887 = vsub.f32 1.0, %v5886
      %v5888 = vmul.f32 %v5885, %v5887
      %v5889 = vadd.f32 %v5885, %v5888
      %vm5890 = vweird.f32 %v5401
      %vm5891 = vweird.f32 %v5885
      %vm5892 = vmor %vm5890, %vm5891
      %v5893 = vsel %vm5892, %v5885, %v5889
      %v5894 = vand.u32 2147483647, %v5401
      %vm5895 = vcmp.eq.f32.partialorder %v5894, 8.507059e+37
      %v5896 = vand.u32 %v5401, 2147483648
      %v5897 = vor.u32 1.1754944e-38, %v5896
      %v5898 = vsel %vm5895, %v5897, %v5893
      %v5899 = vmul.f32 1.0, %v5898
      %v5900 = vrcp.pop %v5402
      %v5901 = vmul.f32 %v5402, %v5900
      %v5902 = vsub.f32 1.0, %v5901
      %v5903 = vmul.f32 %v5900, %v5902
      %v5904 = vadd.f32 %v5900, %v5903
      %vm5905 = vweird.f32 %v5402
      %vm5906 = vweird.f32 %v5900
      %vm5907 = vmor %vm5905, %vm5906
      %v5908 = vsel %vm5907, %v5900, %v5904
      %v5909 = vand.u32 2147483647, %v5402
      %vm5910 = vcmp.eq.f32.partialorder %v5909, 8.507059e+37
      %v5911 = vand.u32 %v5402, 2147483648
      %v5912 = vor.u32 1.1754944e-38, %v5911
      %v5913 = vsel %vm5910, %v5912, %v5908
      %v5914 = vmul.f32 1.0, %v5913
      %v5915 = vrcp.pop %v5403
      %v5916 = vmul.f32 %v5403, %v5915
      %v5917 = vsub.f32 1.0, %v5916
      %v5918 = vmul.f32 %v5915, %v5917
      %v5919 = vadd.f32 %v5915, %v5918
      %vm5920 = vweird.f32 %v5403
      %vm5921 = vweird.f32 %v5915
      %vm5922 = vmor %vm5920, %vm5921
      %v5923 = vsel %vm5922, %v5915, %v5919
      %v5924 = vand.u32 2147483647, %v5403
      %vm5925 = vcmp.eq.f32.partialorder %v5924, 8.507059e+37
      %v5926 = vand.u32 %v5403, 2147483648
      %v5927 = vor.u32 1.1754944e-38, %v5926
      %v5928 = vsel %vm5925, %v5927, %v5923
      %v5929 = vmul.f32 1.0, %v5928
      %v5930 = vrcp.pop %v5404
      %v5931 = vmul.f32 %v5404, %v5930
      %v5932 = vsub.f32 1.0, %v5931
      %v5933 = vmul.f32 %v5930, %v5932
      %v5934 = vadd.f32 %v5930, %v5933
      %vm5935 = vweird.f32 %v5404
      %vm5936 = vweird.f32 %v5930
      %vm5937 = vmor %vm5935, %vm5936
      %v5938 = vsel %vm5937, %v5930, %v5934
      %v5939 = vand.u32 2147483647, %v5404
      %vm5940 = vcmp.eq.f32.partialorder %v5939, 8.507059e+37
      %v5941 = vand.u32 %v5404, 2147483648
      %v5942 = vor.u32 1.1754944e-38, %v5941
      %v5943 = vsel %vm5940, %v5942, %v5938
      %v5944 = vmul.f32 1.0, %v5943
      %v5945 = vrcp.pop %v5405
      %v5946 = vmul.f32 %v5405, %v5945
      %v5947 = vsub.f32 1.0, %v5946
      %v5948 = vmul.f32 %v5945, %v5947
      %v5949 = vadd.f32 %v5945, %v5948
      %vm5950 = vweird.f32 %v5405
      %vm5951 = vweird.f32 %v5945
      %vm5952 = vmor %vm5950, %vm5951
      %v5953 = vsel %vm5952, %v5945, %v5949
      %v5954 = vand.u32 2147483647, %v5405
      %vm5955 = vcmp.eq.f32.partialorder %v5954, 8.507059e+37
      %v5956 = vand.u32 %v5405, 2147483648
      %v5957 = vor.u32 1.1754944e-38, %v5956
      %v5958 = vsel %vm5955, %v5957, %v5953
      %v5959 = vmul.f32 1.0, %v5958
      %v5960 = vrcp.pop %v5406
      %v5961 = vmul.f32 %v5406, %v5960
      %v5962 = vsub.f32 1.0, %v5961
      %v5963 = vmul.f32 %v5960, %v5962
      %v5964 = vadd.f32 %v5960, %v5963
      %vm5965 = vweird.f32 %v5406
      %vm5966 = vweird.f32 %v5960
      %vm5967 = vmor %vm5965, %vm5966
      %v5968 = vsel %vm5967, %v5960, %v5964
      %v5969 = vand.u32 2147483647, %v5406
      %vm5970 = vcmp.eq.f32.partialorder %v5969, 8.507059e+37
      %v5971 = vand.u32 %v5406, 2147483648
      %v5972 = vor.u32 1.1754944e-38, %v5971
      %v5973 = vsel %vm5970, %v5972, %v5968
      %v5974 = vmul.f32 1.0, %v5973
      %v5975 = vrcp.pop %v5407
      %v5976 = vmul.f32 %v5407, %v5975
      %v5977 = vsub.f32 1.0, %v5976
      %v5978 = vmul.f32 %v5975, %v5977
      %v5979 = vadd.f32 %v5975, %v5978
      %vm5980 = vweird.f32 %v5407
      %vm5981 = vweird.f32 %v5975
      %vm5982 = vmor %vm5980, %vm5981
      %v5983 = vsel %vm5982, %v5975, %v5979
      %v5984 = vand.u32 2147483647, %v5407
      %vm5985 = vcmp.eq.f32.partialorder %v5984, 8.507059e+37
      %v5986 = vand.u32 %v5407, 2147483648
      %v5987 = vor.u32 1.1754944e-38, %v5986
      %v5988 = vsel %vm5985, %v5987, %v5983
      %v5989 = vmul.f32 1.0, %v5988
      %v5990 = vrcp.pop %v5408
      %v5991 = vmul.f32 %v5408, %v5990
      %v5992 = vsub.f32 1.0, %v5991
      %v5993 = vmul.f32 %v5990, %v5992
      %v5994 = vadd.f32 %v5990, %v5993
      %vm5995 = vweird.f32 %v5408
      %vm5996 = vweird.f32 %v5990
      %vm5997 = vmor %vm5995, %vm5996
      %v5998 = vsel %vm5997, %v5990, %v5994
      %v5999 = vand.u32 2147483647, %v5408
      %vm6000 = vcmp.eq.f32.partialorder %v5999, 8.507059e+37
      %v6001 = vand.u32 %v5408, 2147483648
      %v6002 = vor.u32 1.1754944e-38, %v6001
      %v6003 = vsel %vm6000, %v6002, %v5998
      %v6004 = vmul.f32 1.0, %v6003
      %v6005 = vrcp.pop %v5409
      %v6006 = vmul.f32 %v5409, %v6005
      %v6007 = vsub.f32 1.0, %v6006
      %v6008 = vmul.f32 %v6005, %v6007
      %v6009 = vadd.f32 %v6005, %v6008
      %vm6010 = vweird.f32 %v5409
      %vm6011 = vweird.f32 %v6005
      %vm6012 = vmor %vm6010, %vm6011
      %v6013 = vsel %vm6012, %v6005, %v6009
      %v6014 = vand.u32 2147483647, %v5409
      %vm6015 = vcmp.eq.f32.partialorder %v6014, 8.507059e+37
      %v6016 = vand.u32 %v5409, 2147483648
      %v6017 = vor.u32 1.1754944e-38, %v6016
      %v6018 = vsel %vm6015, %v6017, %v6013
      %v6019 = vmul.f32 1.0, %v6018
      %v6020 = vrcp.pop %v5410
      %v6021 = vmul.f32 %v5410, %v6020
      %v6022 = vsub.f32 1.0, %v6021
      %v6023 = vmul.f32 %v6020, %v6022
      %v6024 = vadd.f32 %v6020, %v6023
      %vm6025 = vweird.f32 %v5410
      %vm6026 = vweird.f32 %v6020
      %vm6027 = vmor %vm6025, %vm6026
      %v6028 = vsel %vm6027, %v6020, %v6024
      %v6029 = vand.u32 2147483647, %v5410
      %vm6030 = vcmp.eq.f32.partialorder %v6029, 8.507059e+37
      %v6031 = vand.u32 %v5410, 2147483648
      %v6032 = vor.u32 1.1754944e-38, %v6031
      %v6033 = vsel %vm6030, %v6032, %v6028
      %v6034 = vmul.f32 1.0, %v6033
      %v6035 = vrcp.pop %v5411
      %v6036 = vmul.f32 %v5411, %v6035
      %v6037 = vsub.f32 1.0, %v6036
      %v6038 = vmul.f32 %v6035, %v6037
      %v6039 = vadd.f32 %v6035, %v6038
      %vm6040 = vweird.f32 %v5411
      %vm6041 = vweird.f32 %v6035
      %vm6042 = vmor %vm6040, %vm6041
      %v6043 = vsel %vm6042, %v6035, %v6039
      %v6044 = vand.u32 2147483647, %v5411
      %vm6045 = vcmp.eq.f32.partialorder %v6044, 8.507059e+37
      %v6046 = vand.u32 %v5411, 2147483648
      %v6047 = vor.u32 1.1754944e-38, %v6046
      %v6048 = vsel %vm6045, %v6047, %v6043
      %v6049 = vmul.f32 1.0, %v6048
      %v6050 = vrcp.pop %v5412
      %v6051 = vmul.f32 %v5412, %v6050
      %v6052 = vsub.f32 1.0, %v6051
      %v6053 = vmul.f32 %v6050, %v6052
      %v6054 = vadd.f32 %v6050, %v6053
      %vm6055 = vweird.f32 %v5412
      %vm6056 = vweird.f32 %v6050
      %vm6057 = vmor %vm6055, %vm6056
      %v6058 = vsel %vm6057, %v6050, %v6054
      %v6059 = vand.u32 2147483647, %v5412
      %vm6060 = vcmp.eq.f32.partialorder %v6059, 8.507059e+37
      %v6061 = vand.u32 %v5412, 2147483648
      %v6062 = vor.u32 1.1754944e-38, %v6061
      %v6063 = vsel %vm6060, %v6062, %v6058
      %v6064 = vmul.f32 1.0, %v6063
      %v6065 = vrcp.pop %v5413
      %v6066 = vmul.f32 %v5413, %v6065
      %v6067 = vsub.f32 1.0, %v6066
      %v6068 = vmul.f32 %v6065, %v6067
      %v6069 = vadd.f32 %v6065, %v6068
      %vm6070 = vweird.f32 %v5413
      %vm6071 = vweird.f32 %v6065
      %vm6072 = vmor %vm6070, %vm6071
      %v6073 = vsel %vm6072, %v6065, %v6069
      %v6074 = vand.u32 2147483647, %v5413
      %vm6075 = vcmp.eq.f32.partialorder %v6074, 8.507059e+37
      %v6076 = vand.u32 %v5413, 2147483648
      %v6077 = vor.u32 1.1754944e-38, %v6076
      %v6078 = vsel %vm6075, %v6077, %v6073
      %v6079 = vmul.f32 1.0, %v6078
      %v6080 = vrcp.pop %v5414
      %v6081 = vmul.f32 %v5414, %v6080
      %v6082 = vsub.f32 1.0, %v6081
      %v6083 = vmul.f32 %v6080, %v6082
      %v6084 = vadd.f32 %v6080, %v6083
      %vm6085 = vweird.f32 %v5414
      %vm6086 = vweird.f32 %v6080
      %vm6087 = vmor %vm6085, %vm6086
      %v6088 = vsel %vm6087, %v6080, %v6084
      %v6089 = vand.u32 2147483647, %v5414
      %vm6090 = vcmp.eq.f32.partialorder %v6089, 8.507059e+37
      %v6091 = vand.u32 %v5414, 2147483648
      %v6092 = vor.u32 1.1754944e-38, %v6091
      %v6093 = vsel %vm6090, %v6092, %v6088
      %v6094 = vmul.f32 1.0, %v6093
      %v6095 = vrcp.pop %v5415
      %v6096 = vmul.f32 %v5415, %v6095
      %v6097 = vsub.f32 1.0, %v6096
      %v6098 = vmul.f32 %v6095, %v6097
      %v6099 = vadd.f32 %v6095, %v6098
      %vm6100 = vweird.f32 %v5415
      %vm6101 = vweird.f32 %v6095
      %vm6102 = vmor %vm6100, %vm6101
      %v6103 = vsel %vm6102, %v6095, %v6099
      %v6104 = vand.u32 2147483647, %v5415
      %vm6105 = vcmp.eq.f32.partialorder %v6104, 8.507059e+37
      %v6106 = vand.u32 %v5415, 2147483648
      %v6107 = vor.u32 1.1754944e-38, %v6106
      %v6108 = vsel %vm6105, %v6107, %v6103
      %v6109 = vmul.f32 1.0, %v6108
      %v6110 = vrcp.pop %v5416
      %v6111 = vmul.f32 %v5416, %v6110
      %v6112 = vsub.f32 1.0, %v6111
      %v6113 = vmul.f32 %v6110, %v6112
      %v6114 = vadd.f32 %v6110, %v6113
      %vm6115 = vweird.f32 %v5416
      %vm6116 = vweird.f32 %v6110
      %vm6117 = vmor %vm6115, %vm6116
      %v6118 = vsel %vm6117, %v6110, %v6114
      %v6119 = vand.u32 2147483647, %v5416
      %vm6120 = vcmp.eq.f32.partialorder %v6119, 8.507059e+37
      %v6121 = vand.u32 %v5416, 2147483648
      %v6122 = vor.u32 1.1754944e-38, %v6121
      %v6123 = vsel %vm6120, %v6122, %v6118
      %v6124 = vmul.f32 1.0, %v6123
      %v6125 = vrcp.pop %v5417
      %v6126 = vmul.f32 %v5417, %v6125
      %v6127 = vsub.f32 1.0, %v6126
      %v6128 = vmul.f32 %v6125, %v6127
      %v6129 = vadd.f32 %v6125, %v6128
      %vm6130 = vweird.f32 %v5417
      %vm6131 = vweird.f32 %v6125
      %vm6132 = vmor %vm6130, %vm6131
      %v6133 = vsel %vm6132, %v6125, %v6129
      %v6134 = vand.u32 2147483647, %v5417
      %vm6135 = vcmp.eq.f32.partialorder %v6134, 8.507059e+37
      %v6136 = vand.u32 %v5417, 2147483648
      %v6137 = vor.u32 1.1754944e-38, %v6136
      %v6138 = vsel %vm6135, %v6137, %v6133
      %v6139 = vmul.f32 1.0, %v6138
      %v6140 = vrcp.pop %v5418
      %v6141 = vmul.f32 %v5418, %v6140
      %v6142 = vsub.f32 1.0, %v6141
      %v6143 = vmul.f32 %v6140, %v6142
      %v6144 = vadd.f32 %v6140, %v6143
      %vm6145 = vweird.f32 %v5418
      %vm6146 = vweird.f32 %v6140
      %vm6147 = vmor %vm6145, %vm6146
      %v6148 = vsel %vm6147, %v6140, %v6144
      %v6149 = vand.u32 2147483647, %v5418
      %vm6150 = vcmp.eq.f32.partialorder %v6149, 8.507059e+37
      %v6151 = vand.u32 %v5418, 2147483648
      %v6152 = vor.u32 1.1754944e-38, %v6151
      %v6153 = vsel %vm6150, %v6152, %v6148
      %v6154 = vmul.f32 1.0, %v6153
      %v6155 = vrcp.pop %v5419
      %v6156 = vmul.f32 %v5419, %v6155
      %v6157 = vsub.f32 1.0, %v6156
      %v6158 = vmul.f32 %v6155, %v6157
      %v6159 = vadd.f32 %v6155, %v6158
      %vm6160 = vweird.f32 %v5419
      %vm6161 = vweird.f32 %v6155
      %vm6162 = vmor %vm6160, %vm6161
      %v6163 = vsel %vm6162, %v6155, %v6159
      %v6164 = vand.u32 2147483647, %v5419
      %vm6165 = vcmp.eq.f32.partialorder %v6164, 8.507059e+37
      %v6166 = vand.u32 %v5419, 2147483648
      %v6167 = vor.u32 1.1754944e-38, %v6166
      %v6168 = vsel %vm6165, %v6167, %v6163
      %v6169 = vmul.f32 1.0, %v6168
      %v6170 = vrcp.pop %v5420
      %v6171 = vmul.f32 %v5420, %v6170
      %v6172 = vsub.f32 1.0, %v6171
      %v6173 = vmul.f32 %v6170, %v6172
      %v6174 = vadd.f32 %v6170, %v6173
      %vm6175 = vweird.f32 %v5420
      %vm6176 = vweird.f32 %v6170
      %vm6177 = vmor %vm6175, %vm6176
      %v6178 = vsel %vm6177, %v6170, %v6174
      %v6179 = vand.u32 2147483647, %v5420
      %vm6180 = vcmp.eq.f32.partialorder %v6179, 8.507059e+37
      %v6181 = vand.u32 %v5420, 2147483648
      %v6182 = vor.u32 1.1754944e-38, %v6181
      %v6183 = vsel %vm6180, %v6182, %v6178
      %v6184 = vmul.f32 1.0, %v6183
      %v6185 = vrcp.pop %v5421
      %v6186 = vmul.f32 %v5421, %v6185
      %v6187 = vsub.f32 1.0, %v6186
      %v6188 = vmul.f32 %v6185, %v6187
      %v6189 = vadd.f32 %v6185, %v6188
      %vm6190 = vweird.f32 %v5421
      %vm6191 = vweird.f32 %v6185
      %vm6192 = vmor %vm6190, %vm6191
      %v6193 = vsel %vm6192, %v6185, %v6189
      %v6194 = vand.u32 2147483647, %v5421
      %vm6195 = vcmp.eq.f32.partialorder %v6194, 8.507059e+37
      %v6196 = vand.u32 %v5421, 2147483648
      %v6197 = vor.u32 1.1754944e-38, %v6196
      %v6198 = vsel %vm6195, %v6197, %v6193
      %v6199 = vmul.f32 1.0, %v6198
      %v6200 = vrcp.pop %v5422
      %v6201 = vmul.f32 %v5422, %v6200
      %v6202 = vsub.f32 1.0, %v6201
      %v6203 = vmul.f32 %v6200, %v6202
      %v6204 = vadd.f32 %v6200, %v6203
      %vm6205 = vweird.f32 %v5422
      %vm6206 = vweird.f32 %v6200
      %vm6207 = vmor %vm6205, %vm6206
      %v6208 = vsel %vm6207, %v6200, %v6204
      %v6209 = vand.u32 2147483647, %v5422
      %vm6210 = vcmp.eq.f32.partialorder %v6209, 8.507059e+37
      %v6211 = vand.u32 %v5422, 2147483648
      %v6212 = vor.u32 1.1754944e-38, %v6211
      %v6213 = vsel %vm6210, %v6212, %v6208
      %v6214 = vmul.f32 1.0, %v6213
      %v6215 = vrcp.pop %v5423
      %v6216 = vmul.f32 %v5423, %v6215
      %v6217 = vsub.f32 1.0, %v6216
      %v6218 = vmul.f32 %v6215, %v6217
      %v6219 = vadd.f32 %v6215, %v6218
      %vm6220 = vweird.f32 %v5423
      %vm6221 = vweird.f32 %v6215
      %vm6222 = vmor %vm6220, %vm6221
      %v6223 = vsel %vm6222, %v6215, %v6219
      %v6224 = vand.u32 2147483647, %v5423
      %vm6225 = vcmp.eq.f32.partialorder %v6224, 8.507059e+37
      %v6226 = vand.u32 %v5423, 2147483648
      %v6227 = vor.u32 1.1754944e-38, %v6226
      %v6228 = vsel %vm6225, %v6227, %v6223
      %v6229 = vmul.f32 1.0, %v6228
      %v6230 = vrcp.pop %v5424
      %v6231 = vmul.f32 %v5424, %v6230
      %v6232 = vsub.f32 1.0, %v6231
      %v6233 = vmul.f32 %v6230, %v6232
      %v6234 = vadd.f32 %v6230, %v6233
      %vm6235 = vweird.f32 %v5424
      %vm6236 = vweird.f32 %v6230
      %vm6237 = vmor %vm6235, %vm6236
      %v6238 = vsel %vm6237, %v6230, %v6234
      %v6239 = vand.u32 2147483647, %v5424
      %vm6240 = vcmp.eq.f32.partialorder %v6239, 8.507059e+37
      %v6241 = vand.u32 %v5424, 2147483648
      %v6242 = vor.u32 1.1754944e-38, %v6241
      %v6243 = vsel %vm6240, %v6242, %v6238
      %v6244 = vmul.f32 1.0, %v6243
      %v6245 = vrcp.pop %v5425
      %v6246 = vmul.f32 %v5425, %v6245
      %v6247 = vsub.f32 1.0, %v6246
      %v6248 = vmul.f32 %v6245, %v6247
      %v6249 = vadd.f32 %v6245, %v6248
      %vm6250 = vweird.f32 %v5425
      %vm6251 = vweird.f32 %v6245
      %vm6252 = vmor %vm6250, %vm6251
      %v6253 = vsel %vm6252, %v6245, %v6249
      %v6254 = vand.u32 2147483647, %v5425
      %vm6255 = vcmp.eq.f32.partialorder %v6254, 8.507059e+37
      %v6256 = vand.u32 %v5425, 2147483648
      %v6257 = vor.u32 1.1754944e-38, %v6256
      %v6258 = vsel %vm6255, %v6257, %v6253
      %v6259 = vmul.f32 1.0, %v6258
      %v6260 = vrcp.pop %v5426
      %v6261 = vmul.f32 %v5426, %v6260
      %v6262 = vsub.f32 1.0, %v6261
      %v6263 = vmul.f32 %v6260, %v6262
      %v6264 = vadd.f32 %v6260, %v6263
      %vm6265 = vweird.f32 %v5426
      %vm6266 = vweird.f32 %v6260
      %vm6267 = vmor %vm6265, %vm6266
      %v6268 = vsel %vm6267, %v6260, %v6264
      %v6269 = vand.u32 2147483647, %v5426
      %vm6270 = vcmp.eq.f32.partialorder %v6269, 8.507059e+37
      %v6271 = vand.u32 %v5426, 2147483648
      %v6272 = vor.u32 1.1754944e-38, %v6271
      %v6273 = vsel %vm6270, %v6272, %v6268
      %v6274 = vmul.f32 1.0, %v6273
      %v6275 = vrcp.pop %v5427
      %v6276 = vmul.f32 %v5427, %v6275
      %v6277 = vsub.f32 1.0, %v6276
      %v6278 = vmul.f32 %v6275, %v6277
      %v6279 = vadd.f32 %v6275, %v6278
      %vm6280 = vweird.f32 %v5427
      %vm6281 = vweird.f32 %v6275
      %vm6282 = vmor %vm6280, %vm6281
      %v6283 = vsel %vm6282, %v6275, %v6279
      %v6284 = vand.u32 2147483647, %v5427
      %vm6285 = vcmp.eq.f32.partialorder %v6284, 8.507059e+37
      %v6286 = vand.u32 %v5427, 2147483648
      %v6287 = vor.u32 1.1754944e-38, %v6286
      %v6288 = vsel %vm6285, %v6287, %v6283
      %v6289 = vmul.f32 1.0, %v6288
      %v6290 = vrcp.pop %v5428
      %v6291 = vmul.f32 %v5428, %v6290
      %v6292 = vsub.f32 1.0, %v6291
      %v6293 = vmul.f32 %v6290, %v6292
      %v6294 = vadd.f32 %v6290, %v6293
      %vm6295 = vweird.f32 %v5428
      %vm6296 = vweird.f32 %v6290
      %vm6297 = vmor %vm6295, %vm6296
      %v6298 = vsel %vm6297, %v6290, %v6294
      %v6299 = vand.u32 2147483647, %v5428
      %vm6300 = vcmp.eq.f32.partialorder %v6299, 8.507059e+37
      %v6301 = vand.u32 %v5428, 2147483648
      %v6302 = vor.u32 1.1754944e-38, %v6301
      %v6303 = vsel %vm6300, %v6302, %v6298
      %v6304 = vmul.f32 1.0, %v6303
      %v6305 = vrcp.pop %v5429
      %v6306 = vmul.f32 %v5429, %v6305
      %v6307 = vsub.f32 1.0, %v6306
      %v6308 = vmul.f32 %v6305, %v6307
      %v6309 = vadd.f32 %v6305, %v6308
      %vm6310 = vweird.f32 %v5429
      %vm6311 = vweird.f32 %v6305
      %vm6312 = vmor %vm6310, %vm6311
      %v6313 = vsel %vm6312, %v6305, %v6309
      %v6314 = vand.u32 2147483647, %v5429
      %vm6315 = vcmp.eq.f32.partialorder %v6314, 8.507059e+37
      %v6316 = vand.u32 %v5429, 2147483648
      %v6317 = vor.u32 1.1754944e-38, %v6316
      %v6318 = vsel %vm6315, %v6317, %v6313
      %v6319 = vmul.f32 1.0, %v6318
      %v6320 = vrcp.pop %v5430
      %v6321 = vmul.f32 %v5430, %v6320
      %v6322 = vsub.f32 1.0, %v6321
      %v6323 = vmul.f32 %v6320, %v6322
      %v6324 = vadd.f32 %v6320, %v6323
      %vm6325 = vweird.f32 %v5430
      %vm6326 = vweird.f32 %v6320
      %vm6327 = vmor %vm6325, %vm6326
      %v6328 = vsel %vm6327, %v6320, %v6324
      %v6329 = vand.u32 2147483647, %v5430
      %vm6330 = vcmp.eq.f32.partialorder %v6329, 8.507059e+37
      %v6331 = vand.u32 %v5430, 2147483648
      %v6332 = vor.u32 1.1754944e-38, %v6331
      %v6333 = vsel %vm6330, %v6332, %v6328
      %v6334 = vmul.f32 1.0, %v6333
      %v6335 = vrcp.pop %v5431
      %v6336 = vmul.f32 %v5431, %v6335
      %v6337 = vsub.f32 1.0, %v6336
      %v6338 = vmul.f32 %v6335, %v6337
      %v6339 = vadd.f32 %v6335, %v6338
      %vm6340 = vweird.f32 %v5431
      %vm6341 = vweird.f32 %v6335
      %vm6342 = vmor %vm6340, %vm6341
      %v6343 = vsel %vm6342, %v6335, %v6339
      %v6344 = vand.u32 2147483647, %v5431
      %vm6345 = vcmp.eq.f32.partialorder %v6344, 8.507059e+37
      %v6346 = vand.u32 %v5431, 2147483648
      %v6347 = vor.u32 1.1754944e-38, %v6346
      %v6348 = vsel %vm6345, %v6347, %v6343
      %v6349 = vmul.f32 1.0, %v6348
      %v6350 = vrcp.pop %v5432
      %v6351 = vmul.f32 %v5432, %v6350
      %v6352 = vsub.f32 1.0, %v6351
      %v6353 = vmul.f32 %v6350, %v6352
      %v6354 = vadd.f32 %v6350, %v6353
      %vm6355 = vweird.f32 %v5432
      %vm6356 = vweird.f32 %v6350
      %vm6357 = vmor %vm6355, %vm6356
      %v6358 = vsel %vm6357, %v6350, %v6354
      %v6359 = vand.u32 2147483647, %v5432
      %vm6360 = vcmp.eq.f32.partialorder %v6359, 8.507059e+37
      %v6361 = vand.u32 %v5432, 2147483648
      %v6362 = vor.u32 1.1754944e-38, %v6361
      %v6363 = vsel %vm6360, %v6362, %v6358
      %v6364 = vmul.f32 1.0, %v6363
      %v6365 = vrcp.pop %v5433
      %v6366 = vmul.f32 %v5433, %v6365
      %v6367 = vsub.f32 1.0, %v6366
      %v6368 = vmul.f32 %v6365, %v6367
      %v6369 = vadd.f32 %v6365, %v6368
      %vm6370 = vweird.f32 %v5433
      %vm6371 = vweird.f32 %v6365
      %vm6372 = vmor %vm6370, %vm6371
      %v6373 = vsel %vm6372, %v6365, %v6369
      %v6374 = vand.u32 2147483647, %v5433
      %vm6375 = vcmp.eq.f32.partialorder %v6374, 8.507059e+37
      %v6376 = vand.u32 %v5433, 2147483648
      %v6377 = vor.u32 1.1754944e-38, %v6376
      %v6378 = vsel %vm6375, %v6377, %v6373
      %v6379 = vmul.f32 1.0, %v6378
      %v6380 = vrcp.pop %v5434
      %v6381 = vmul.f32 %v5434, %v6380
      %v6382 = vsub.f32 1.0, %v6381
      %v6383 = vmul.f32 %v6380, %v6382
      %v6384 = vadd.f32 %v6380, %v6383
      %vm6385 = vweird.f32 %v5434
      %vm6386 = vweird.f32 %v6380
      %vm6387 = vmor %vm6385, %vm6386
      %v6388 = vsel %vm6387, %v6380, %v6384
      %v6389 = vand.u32 2147483647, %v5434
      %vm6390 = vcmp.eq.f32.partialorder %v6389, 8.507059e+37
      %v6391 = vand.u32 %v5434, 2147483648
      %v6392 = vor.u32 1.1754944e-38, %v6391
      %v6393 = vsel %vm6390, %v6392, %v6388
      %v6394 = vmul.f32 1.0, %v6393
      %vm6395 = vcmask 7168
      %6396 = vst.msk [vmem:[%s282] sm:$0xff] %vm6395, %v5449
      %6397 = vst.msk [vmem:[%s282 + $0x8] sm:$0xff] %vm6395, %v5464
      %6398 = vst.msk [vmem:[%s282 + $0x10] sm:$0xff] %vm6395, %v5479
      %6399 = vst.msk [vmem:[%s282 + $0x18] sm:$0xff] %vm6395, %v5494
      %6400 = vst.msk [vmem:[%s282 + $0x20] sm:$0xff] %vm6395, %v5509
      %6401 = vst.msk [vmem:[%s282 + $0x28] sm:$0xff] %vm6395, %v5524
      %6402 = vst.msk [vmem:[%s282 + $0x30] sm:$0xff] %vm6395, %v5539
      %6403 = vst.msk [vmem:[%s282 + $0x38] sm:$0xff] %vm6395, %v5554
      %6404 = vst.msk [vmem:[%s282 + $0x40] sm:$0xff] %vm6395, %v5569
      %6405 = vst.msk [vmem:[%s282 + $0x48] sm:$0xff] %vm6395, %v5584
      %6406 = vst.msk [vmem:[%s282 + $0x50] sm:$0xff] %vm6395, %v5599
      %6407 = vst.msk [vmem:[%s282 + $0x58] sm:$0xff] %vm6395, %v5614
      %6408 = vst.msk [vmem:[%s282 + $0x60] sm:$0xff] %vm6395, %v5629
      %6409 = vst.msk [vmem:[%s282 + $0x68] sm:$0xff] %vm6395, %v5644
      %6410 = vst.msk [vmem:[%s282 + $0x70] sm:$0xff] %vm6395, %v5659
      %6411 = vst.msk [vmem:[%s282 + $0x78] sm:$0xff] %vm6395, %v5674
      %6412 = vst.msk [vmem:[%s282 + $0x80] sm:$0xff] %vm6395, %v5689
      %6413 = vst.msk [vmem:[%s282 + $0x88] sm:$0xff] %vm6395, %v5704
      %6414 = vst.msk [vmem:[%s282 + $0x90] sm:$0xff] %vm6395, %v5719
      %6415 = vst.msk [vmem:[%s282 + $0x98] sm:$0xff] %vm6395, %v5734
      %6416 = vst.msk [vmem:[%s282 + $0xa0] sm:$0xff] %vm6395, %v5749
      %6417 = vst.msk [vmem:[%s282 + $0xa8] sm:$0xff] %vm6395, %v5764
      %6418 = vst.msk [vmem:[%s282 + $0xb0] sm:$0xff] %vm6395, %v5779
      %6419 = vst.msk [vmem:[%s282 + $0xb8] sm:$0xff] %vm6395, %v5794
      %6420 = vst.msk [vmem:[%s282 + $0xc0] sm:$0xff] %vm6395, %v5809
      %6421 = vst.msk [vmem:[%s282 + $0xc8] sm:$0xff] %vm6395, %v5824
      %6422 = vst.msk [vmem:[%s282 + $0xd0] sm:$0xff] %vm6395, %v5839
      %6423 = vst.msk [vmem:[%s282 + $0xd8] sm:$0xff] %vm6395, %v5854
      %6424 = vst.msk [vmem:[%s282 + $0xe0] sm:$0xff] %vm6395, %v5869
      %6425 = vst.msk [vmem:[%s282 + $0xe8] sm:$0xff] %vm6395, %v5884
      %6426 = vst.msk [vmem:[%s282 + $0xf0] sm:$0xff] %vm6395, %v5899
      %6427 = vst.msk [vmem:[%s282 + $0xf8] sm:$0xff] %vm6395, %v5914
      %6428 = vst.msk [vmem:[%s282 + $0x100] sm:$0xff] %vm6395, %v5929
      %6429 = vst.msk [vmem:[%s282 + $0x108] sm:$0xff] %vm6395, %v5944
      %6430 = vst.msk [vmem:[%s282 + $0x110] sm:$0xff] %vm6395, %v5959
      %6431 = vst.msk [vmem:[%s282 + $0x118] sm:$0xff] %vm6395, %v5974
      %6432 = vst.msk [vmem:[%s282 + $0x120] sm:$0xff] %vm6395, %v5989
      %6433 = vst.msk [vmem:[%s282 + $0x128] sm:$0xff] %vm6395, %v6004
      %6434 = vst.msk [vmem:[%s282 + $0x130] sm:$0xff] %vm6395, %v6019
      %6435 = vst.msk [vmem:[%s282 + $0x138] sm:$0xff] %vm6395, %v6034
      %6436 = vst.msk [vmem:[%s282 + $0x140] sm:$0xff] %vm6395, %v6049
      %6437 = vst.msk [vmem:[%s282 + $0x148] sm:$0xff] %vm6395, %v6064
      %6438 = vst.msk [vmem:[%s282 + $0x150] sm:$0xff] %vm6395, %v6079
      %6439 = vst.msk [vmem:[%s282 + $0x158] sm:$0xff] %vm6395, %v6094
      %6440 = vst.msk [vmem:[%s282 + $0x160] sm:$0xff] %vm6395, %v6109
      %6441 = vst.msk [vmem:[%s282 + $0x168] sm:$0xff] %vm6395, %v6124
      %6442 = vst.msk [vmem:[%s282 + $0x170] sm:$0xff] %vm6395, %v6139
      %6443 = vst.msk [vmem:[%s282 + $0x178] sm:$0xff] %vm6395, %v6154
      %6444 = vst.msk [vmem:[%s282 + $0x180] sm:$0xff] %vm6395, %v6169
      %6445 = vst.msk [vmem:[%s282 + $0x188] sm:$0xff] %vm6395, %v6184
      %6446 = vst.msk [vmem:[%s282 + $0x190] sm:$0xff] %vm6395, %v6199
      %6447 = vst.msk [vmem:[%s282 + $0x198] sm:$0xff] %vm6395, %v6214
      %6448 = vst.msk [vmem:[%s282 + $0x1a0] sm:$0xff] %vm6395, %v6229
      %6449 = vst.msk [vmem:[%s282 + $0x1a8] sm:$0xff] %vm6395, %v6244
      %6450 = vst.msk [vmem:[%s282 + $0x1b0] sm:$0xff] %vm6395, %v6259
      %6451 = vst.msk [vmem:[%s282 + $0x1b8] sm:$0xff] %vm6395, %v6274
      %6452 = vst.msk [vmem:[%s282 + $0x1c0] sm:$0xff] %vm6395, %v6289
      %6453 = vst.msk [vmem:[%s282 + $0x1c8] sm:$0xff] %vm6395, %v6304
      %6454 = vst.msk [vmem:[%s282 + $0x1d0] sm:$0xff] %vm6395, %v6319
      %6455 = vst.msk [vmem:[%s282 + $0x1d8] sm:$0xff] %vm6395, %v6334
      %6456 = vst.msk [vmem:[%s282 + $0x1e0] sm:$0xff] %vm6395, %v6349
      %6457 = vst.msk [vmem:[%s282 + $0x1e8] sm:$0xff] %vm6395, %v6364
      %6458 = vst.msk [vmem:[%s282 + $0x1f0] sm:$0xff] %vm6395, %v6379
      %6459 = vst.msk [vmem:[%s282 + $0x1f8] sm:$0xff] %vm6395, %v6394
      %s6460 = smul.u32 64, %s20
      %p6461 = scmp.lt.s32.totalorder %s6460, 127
      %s6462 = scalar_select %p6461, %s6460, 127
      %s6463 = smul.addr %s6462, 8
      %s6464 = scalar_lea.vmem %s7, %s6463
      // Predicated region
      $region49: #{neural_net_forward.1} parent=47 // pred_check
        %p6465 = pneg %p190
      $region50: #{neural_net_forward.1} parent=47 // pred_check_branch
        %6467 = sbr.rel (%p6465) target = $region52
      $region51: #{neural_net_forward.1} parent=47 // pred_region
        %s6468 = smul.u32 64, %s20
      $region52: #{neural_net_forward.1} parent=47 // pred_fallthru
        _
    $region48: #{neural_net_forward.1} parent=5 // pred_fallthru
      _
    %p6469 = scmp.le.s32.totalorder 2, %s15
    // Predicated region
    $region53: #{neural_net_forward.1} parent=5 // pred_check
      %p6470 = pneg %p6469
    $region54: #{neural_net_forward.1} parent=5 // pred_check_branch
      %6472 = sbr.rel (%p6470) target = $region56
    $region55: #{neural_net_forward.1} parent=5 // pred_region
      %s6473 = ssub.s32 %s15, 2
      // Predicated region
      $region57: #{neural_net_forward.1} parent=55 // pred_check
        %p6474 = pneg %p196
      $region58: #{neural_net_forward.1} parent=55 // pred_check_branch
        %6476 = sbr.rel (%p6474) target = $region60
      $region59: #{neural_net_forward.1} parent=55 // pred_region
        %s6477 = smul.u32 64, %s21
        %p6478 = scmp.lt.s32.totalorder %s6477, 127
        %s6479 = scalar_select %p6478, %s6477, 127
        %s6480 = smul.addr %s6479, 8
        %s6481 = scalar_lea.vmem %s7, %s6480
      $region60: #{neural_net_forward.1} parent=55 // pred_fallthru
        _
    $region56: #{neural_net_forward.1} parent=5 // pred_fallthru
      _
  $region6: #{neural_net_forward.1} parent=0 // loop_footer
    %s19 = sadd.s32 1, %s15
  $region7: #{neural_net_forward.1} parent=0 // loop_footer_branch
    %14 = sbr.rel target = $region3
  $region8: #{neural_net_forward.1} parent=0 // loop_exit
    _

</llo_original>
